<compile_context>
chip_gen: v6e
topology: v6e:2x2x1
jax: 0.10.0
libtpu: 0.0.40
codegen_flags: <defaults>
</compile_context>

<pallas_src>
import functools

import jax
import jax.numpy as jnp
from jax import lax
from jax.experimental import pallas as pl
from jax.experimental.pallas import tpu as pltpu

HIDDEN = 32
HEADS = 4
D_K = HIDDEN // HEADS
FF_HIDDEN = 4 * HIDDEN
EPS = 1e-6


# ----------------------------- fused Pallas kernel -----------------------------

def _block_kernel(
    x_ref, left_ref, mask_ref, rq_ref, rk_ref, rv_ref,
    wqkv1_ref, wo1_ref, wq2_ref, wkv2_ref, wo2_ref, w1_ref, w2_ref,
    pp_ref,
    o_ref,
    *, tb, seq, hidden, heads, d_k, ff,
):
    f32 = jnp.float32
    bf16 = jnp.bfloat16
    scale = 1.0 / float(d_k) ** 0.5

    # ---- unpack the packed small parameters (one [11, 128] lane-dense slab) ----
    bqkv1 = pp_ref[0:1, 0:3 * hidden]
    bkv2 = pp_ref[1:2, 0:2 * hidden]
    b1 = pp_ref[2:3, 0:ff]
    bo1 = pp_ref[3:4, 0:hidden]
    bq2 = pp_ref[4:5, 0:hidden]
    bo2 = pp_ref[5:6, 0:hidden]
    b2 = pp_ref[6:7, 0:hidden]
    g1 = pp_ref[7:8, 0:hidden]
    be1 = pp_ref[8:9, 0:hidden]
    g2 = pp_ref[9:10, 0:hidden]
    be2 = pp_ref[10:11, 0:hidden]

    def layernorm(v, g, b):
        mean = jnp.mean(v, axis=-1, keepdims=True)
        # torch.std is unbiased (n-1); eps is added to std (BERT-pytorch LayerNorm).
        var = jnp.sum((v - mean) ** 2, axis=-1, keepdims=True) * (1.0 / (hidden - 1))
        inv = pl.reciprocal(jnp.sqrt(var) + EPS, approx=True)
        return g * (v - mean) * inv + b

    def bdot(a, w):
        # bf16 MXU operands, f32 accumulation (weights are pre-cast to bf16).
        return jnp.dot(a.astype(bf16), w, preferred_element_type=f32)

    def mha(q, k, v, wo_ref, mask):
        # q, k, v: [seq, hidden] f32 for one batch; wo_ref: [heads, d_k, hidden] bf16.
        # Output projection fused into the head loop: sum_h (p_h @ v_h) @ wo[h].
        out = None
        for h in range(heads):
            sl = slice(h * d_k, (h + 1) * d_k)
            # q_h @ k_h^T without a transpose: contract the last (d_k) axes directly.
            sc = lax.dot_general(q[:, sl].astype(bf16), k[:, sl].astype(bf16),
                                 (((1,), (1,)), ((), ())),
                                 preferred_element_type=f32) * scale
            if mask is not None:
                sc = jnp.where(mask == 0.0, -1e9, sc)        # exact reference masking
            sc = sc - jnp.max(sc, axis=-1, keepdims=True)
            p = jnp.exp(sc)
            p = p * pl.reciprocal(jnp.sum(p, axis=-1, keepdims=True), approx=True)
            ctx = jnp.dot(p.astype(bf16), v[:, sl].astype(bf16),
                          preferred_element_type=f32)         # [seq, d_k]
            contrib = jnp.dot(ctx.astype(bf16), wo_ref[h],
                              preferred_element_type=f32)     # [seq, hidden]
            out = contrib if out is None else out + contrib
        return out

    x = x_ref[...].astype(f32)        # [tb*seq, hidden]
    left = left_ref[...].astype(f32)  # [tb*seq, hidden]

    # ---- sublayer1: fast (relative) self-attention ----
    n1 = layernorm(x, g1, be1)
    qkv = bdot(n1, wqkv1_ref[...]) + bqkv1
    q1 = qkv[:, :hidden] + rq_ref[...].astype(f32)
    k1 = qkv[:, hidden:2 * hidden] + rk_ref[...].astype(f32)
    v1 = qkv[:, 2 * hidden:] + rv_ref[...].astype(f32)
    rows = []
    for bi in range(tb):
        r = slice(bi * seq, (bi + 1) * seq)
        rows.append(mha(q1[r], k1[r], v1[r], wo1_ref, None))  # all-ones mask -> none
    a1 = rows[0] if tb == 1 else jnp.concatenate(rows, axis=0)
    x = x + a1 + bo1

    # ---- sublayer2: cross-attention (K/V from inputleft, NOT layer-normed) ----
    n2 = layernorm(x, g2, be2)
    q2 = bdot(n2, wq2_ref[...]) + bq2
    kv = bdot(left, wkv2_ref[...]) + bkv2
    k2 = kv[:, :hidden]
    v2 = kv[:, hidden:]
    rows = []
    for bi in range(tb):
        r = slice(bi * seq, (bi + 1) * seq)
        m = mask_ref[bi].astype(f32)                          # [seq, seq] 0/1
        rows.append(mha(q2[r], k2[r], v2[r], wo2_ref, m))
    a2 = rows[0] if tb == 1 else jnp.concatenate(rows, axis=0)
    x = x + a2 + bo2

    # ---- third sublayer: FFN. Reference reuses sublayer2's LN params (sublayer3 unused). ----
    n3 = layernorm(x, g2, be2)
    hmid = bdot(n3, w1_ref[...]) + b1
    gelu = 0.5 * hmid * (1.0 + jnp.tanh(0.7978845608028654 *
                                        (hmid + 0.044715 * hmid * hmid * hmid)))
    x = x + bdot(gelu, w2_ref[...]) + b2

    o_ref[...] = x.astype(o_ref.dtype)


# ----------------------------- wrapper -----------------------------

def fast_transformer_block(params, x, inputleft, leftmask, start_nodes, end_nodes,
                           rel_q, rel_k, rel_v):
    B, S, H = x.shape
    bf16 = jnp.bfloat16
    p1, p2, pd = params["attention1"], params["attention2"], params["dense"]
    s1, s2 = params["sublayer1"], params["sublayer2"]

    # Fused / head-split projection weights, pre-cast to bf16 (halves weight DMA).
    wqkv1 = jnp.concatenate([p1["wq"], p1["wk"], p1["wv"]], axis=1).astype(bf16)  # [H,3H]
    wkv2 = jnp.concatenate([p2["wk"], p2["wv"]], axis=1).astype(bf16)             # [H,2H]
    wo1h = p1["wo"].reshape(HEADS, D_K, H).astype(bf16)                           # [h,dk,H]
    wo2h = p2["wo"].reshape(HEADS, D_K, H).astype(bf16)
    wq2 = p2["wq"].astype(bf16)
    w1 = pd["w1"].astype(bf16)
    w2 = pd["w2"].astype(bf16)

    # Pack all tiny bias / gamma / beta vectors into ONE lane-dense [11, 128] slab.
    padw = max(FF_HIDDEN, 3 * H, 128)

    def padrow(v):
        v = v.reshape(-1)
        return jnp.pad(v, (0, padw - v.shape[0]))

    pp = jnp.stack([
        padrow(jnp.concatenate([p1["bq"], p1["bk"], p1["bv"]])),   # 0: bqkv1
        padrow(jnp.concatenate([p2["bk"], p2["bv"]])),             # 1: bkv2
        padrow(pd["b1"]),                                          # 2: b1
        padrow(p1["bo"]),                                          # 3: bo1
        padrow(p2["bq"]),                                          # 4: bq2
        padrow(p2["bo"]),                                          # 5: bo2
        padrow(pd["b2"]),                                          # 6: b2
        padrow(s1["gamma"]),                                       # 7
        padrow(s1["beta"]),                                        # 8
        padrow(s2["gamma"]),                                       # 9
        padrow(s2["beta"]),                                        # 10
    ]).astype(jnp.float32)

    # Data-dependent gathers of the relation tables stay in XLA (tiny, done once).
    rq = rel_q[start_nodes].reshape(B * S, H)
    rk = rel_k[end_nodes].reshape(B * S, H)
    rv = rel_v[end_nodes].reshape(B * S, H)
    x2 = x.reshape(B * S, H)
    left2 = inputleft.reshape(B * S, H)
    mask = leftmask[:, 0].astype(bf16)                             # [B, S, S] 0/1

    # Fold batches into the matmul M dimension; keep exactly 2 grid steps so both
    # v7x TensorCores get work (v5e/v6e pay one extra ~0.35us step).
    tb = B // 2 if (B % 2 == 0 and B >= 2) else 1
    grid = (B // tb,)
    M = tb * S

    def rowblock():
        return pl.BlockSpec((M, H), lambda i: (i, 0))

    def full(shape):
        return pl.BlockSpec(shape, lambda i: (0,) * len(shape))    # resident weights

    kernel = functools.partial(_block_kernel, tb=tb, seq=S, hidden=H,
                               heads=HEADS, d_k=D_K, ff=FF_HIDDEN)

    out2 = pl.pallas_call(
        kernel,
        grid=grid,
        in_specs=[
            rowblock(), rowblock(),
            pl.BlockSpec((tb, S, S), lambda i: (i, 0, 0)),
            rowblock(), rowblock(), rowblock(),
            full((H, 3 * H)), full((HEADS, D_K, H)),
            full((H, H)), full((H, 2 * H)), full((HEADS, D_K, H)),
            full((H, FF_HIDDEN)), full((FF_HIDDEN, H)),
            full(pp.shape),
        ],
        out_specs=rowblock(),
        out_shape=jax.ShapeDtypeStruct((B * S, H), x.dtype),
        compiler_params=pltpu.CompilerParams(dimension_semantics=("parallel",)),
    )(x2, left2, mask, rq, rk, rv,
      wqkv1, wo1h, wq2, wkv2, wo2h, w1, w2, pp)
    return out2.reshape(B, S, H)


# ----------------------------- pure-JAX reference (for self-check) -----------------------------

def _reference(params, x, inputleft, leftmask, start_nodes, end_nodes, rel_q, rel_k, rel_v):
    p1, p2, pd = params["attention1"], params["attention2"], params["dense"]
    s1, s2 = params["sublayer1"], params["sublayer2"]

    def ln(v, g, b):
        mean = jnp.mean(v, axis=-1, keepdims=True)
        var = jnp.sum((v - mean) ** 2, axis=-1, keepdims=True) / (v.shape[-1] - 1)
        return g * (v - mean) / (jnp.sqrt(var) + EPS) + b

    def split(t):
        B, S, _ = t.shape
        return t.reshape(B, S, HEADS, D_K).transpose(0, 2, 1, 3)

    def merge(t):
        B, h, S, dk = t.shape
        return t.transpose(0, 2, 1, 3).reshape(B, S, h * dk)

    def attn(q, k, v, mask):
        s = jnp.einsum("bhqd,bhkd->bhqk", q, k) * (1.0 / float(D_K) ** 0.5)
        if mask is not None:
            s = jnp.where(mask == 0, -1e9, s)
        return merge(jnp.einsum("bhqk,bhkd->bhqd", jax.nn.softmax(s, axis=-1), v))

    n = ln(x, s1["gamma"], s1["beta"])
    q = n @ p1["wq"] + p1["bq"] + rel_q[start_nodes]
    k = n @ p1["wk"] + p1["bk"] + rel_k[end_nodes]
    v = n @ p1["wv"] + p1["bv"] + rel_v[end_nodes]
    x = x + attn(split(q), split(k), split(v), None) @ p1["wo"] + p1["bo"]

    n = ln(x, s2["gamma"], s2["beta"])
    q = n @ p2["wq"] + p2["bq"]
    k = inputleft @ p2["wk"] + p2["bk"]
    v = inputleft @ p2["wv"] + p2["bv"]
    x = x + attn(split(q), split(k), split(v), leftmask) @ p2["wo"] + p2["bo"]

    n = ln(x, s2["gamma"], s2["beta"])   # intentional sublayer2 reuse, per reference
    h = n @ pd["w1"] + pd["b1"]
    g = 0.5 * h * (1.0 + jnp.tanh(0.7978845608028654 * (h + 0.044715 * h ** 3)))
    return x + g @ pd["w2"] + pd["b2"]


# ----------------------------- parameter init -----------------------------

def init_params(key):
    def lin(k, din, dout):
        kw, kb = jax.random.split(k)
        return (0.02 * jax.random.normal(kw, (din, dout), jnp.float32),
                0.02 * jax.random.normal(kb, (dout,), jnp.float32))

    def attn_params(k):
        k1, k2, k3, k4 = jax.random.split(k, 4)
        wq, bq = lin(k1, HIDDEN, HIDDEN)
        wk, bk = lin(k2, HIDDEN, HIDDEN)
        wv, bv = lin(k3, HIDDEN, HIDDEN)
        wo, bo = lin(k4, HIDDEN, HIDDEN)
        return dict(wq=wq, bq=bq, wk=wk, bk=bk, wv=wv, bv=bv, wo=wo, bo=bo)

    def sublayer_params():
        return dict(gamma=jnp.ones((HIDDEN,), jnp.float32),
                    beta=jnp.zeros((HIDDEN,), jnp.float32))

    k1, k2, k3, k4 = jax.random.split(key, 4)
    w1, b1 = lin(k3, HIDDEN, FF_HIDDEN)
    w2, b2 = lin(k4, FF_HIDDEN, HIDDEN)
    return dict(
        attention1=attn_params(k1),
        attention2=attn_params(k2),
        dense=dict(w1=w1, b1=b1, w2=w2, b2=b2),
        sublayer1=sublayer_params(),
        sublayer2=sublayer_params(),
        sublayer3=sublayer_params(),   # defined but unused, matches the reference module
    )


# ----------------------------- main -----------------------------

if __name__ == "__main__":
    B, S, H = 4, 8, HIDDEN   # B=4 -> 2 grid steps of TB=2 batches (M=16 per matmul)
    R = 16                   # relation vocabulary size for rel_q / rel_k / rel_v

    key = jax.random.PRNGKey(0)
    (kp, kx, kleft, kmask, ks, ke, krq, krk, krv) = jax.random.split(key, 9)

    params = init_params(kp)
    x = jax.random.normal(kx, (B, S, H), jnp.float32)
    inputleft = jax.random.normal(kleft, (B, S, H), jnp.float32)
    leftmask = (jax.random.uniform(kmask, (B, 1, S, S)) > 0.2).astype(jnp.int32)
    leftmask = leftmask.at[..., 0].set(1)  # guarantee >=1 unmasked key per query
    start_nodes = jax.random.randint(ks, (B, S), 0, R)
    end_nodes = jax.random.randint(ke, (B, S), 0, R)
    rel_q = 0.02 * jax.random.normal(krq, (R, H), jnp.float32)
    rel_k = 0.02 * jax.random.normal(krk, (R, H), jnp.float32)
    rel_v = 0.02 * jax.random.normal(krv, (R, H), jnp.float32)

    out = jax.jit(fast_transformer_block)(
        params, x, inputleft, leftmask, start_nodes, end_nodes, rel_q, rel_k, rel_v)
    out = jax.block_until_ready(out)
    assert out.shape == (B, S, H) and out.dtype == jnp.float32
    assert bool(jnp.all(jnp.isfinite(out)))

    ref = jax.jit(_reference)(
        params, x, inputleft, leftmask, start_nodes, end_nodes, rel_q, rel_k, rel_v)
    ref = jax.block_until_ready(ref)
    assert bool(jnp.allclose(out, ref, rtol=5e-2, atol=5e-2))

    print("KERNEL_OK")
</pallas_src>

<mosaic_0001>
module attributes {stable_mosaic.version = 11 : i64} {
  func.func @_block_kernel(%arg0: i32, %arg1: memref<16x32xf32, #tpu.memory_space<vmem>>, %arg2: memref<16x32xf32, #tpu.memory_space<vmem>>, %arg3: memref<2x8x8xbf16, #tpu.memory_space<vmem>>, %arg4: memref<16x32xf32, #tpu.memory_space<vmem>>, %arg5: memref<16x32xf32, #tpu.memory_space<vmem>>, %arg6: memref<16x32xf32, #tpu.memory_space<vmem>>, %arg7: memref<32x96xbf16, #tpu.memory_space<vmem>>, %arg8: memref<4x8x32xbf16, #tpu.memory_space<vmem>>, %arg9: memref<32x32xbf16, #tpu.memory_space<vmem>>, %arg10: memref<32x64xbf16, #tpu.memory_space<vmem>>, %arg11: memref<4x8x32xbf16, #tpu.memory_space<vmem>>, %arg12: memref<32x128xbf16, #tpu.memory_space<vmem>>, %arg13: memref<128x32xbf16, #tpu.memory_space<vmem>>, %arg14: memref<11x128xf32, #tpu.memory_space<vmem>>, %arg15: memref<16x32xf32, #tpu.memory_space<vmem>>) attributes {dimension_semantics = [#tpu.dimension_semantics<parallel>], iteration_bounds = array<i64: 2>, scalar_prefetch = 0 : i64, scratch_operands = 0 : i64, tpu.core_type = #tpu.core_type<tc>, window_params = [{transform_indices = @transform_0, window_bounds = array<i64: 16, 32>}, {transform_indices = @transform_1, window_bounds = array<i64: 16, 32>}, {transform_indices = @transform_2, window_bounds = array<i64: 2, 8, 8>}, {transform_indices = @transform_3, window_bounds = array<i64: 16, 32>}, {transform_indices = @transform_4, window_bounds = array<i64: 16, 32>}, {transform_indices = @transform_5, window_bounds = array<i64: 16, 32>}, {pipeline_mode = #tpu.pipeline_mode<synchronous>, transform_indices = @transform_6, window_bounds = array<i64: 32, 96>}, {pipeline_mode = #tpu.pipeline_mode<synchronous>, transform_indices = @transform_7, window_bounds = array<i64: 4, 8, 32>}, {pipeline_mode = #tpu.pipeline_mode<synchronous>, transform_indices = @transform_8, window_bounds = array<i64: 32, 32>}, {pipeline_mode = #tpu.pipeline_mode<synchronous>, transform_indices = @transform_9, window_bounds = array<i64: 32, 64>}, {pipeline_mode = #tpu.pipeline_mode<synchronous>, transform_indices = @transform_10, window_bounds = array<i64: 4, 8, 32>}, {pipeline_mode = #tpu.pipeline_mode<synchronous>, transform_indices = @transform_11, window_bounds = array<i64: 32, 128>}, {pipeline_mode = #tpu.pipeline_mode<synchronous>, transform_indices = @transform_12, window_bounds = array<i64: 128, 32>}, {pipeline_mode = #tpu.pipeline_mode<synchronous>, transform_indices = @transform_13, window_bounds = array<i64: 11, 128>}, {transform_indices = @transform_14, window_bounds = array<i64: 16, 32>}]} {
    %c0 = arith.constant 0 : index
    %c0_0 = arith.constant 0 : index
    %0 = vector.load %arg14[%c0, %c0_0] : memref<11x128xf32, #tpu.memory_space<vmem>>, vector<1x96xf32>
    %c1 = arith.constant 1 : index
    %c0_1 = arith.constant 0 : index
    %1 = vector.load %arg14[%c1, %c0_1] : memref<11x128xf32, #tpu.memory_space<vmem>>, vector<1x64xf32>
    %c2 = arith.constant 2 : index
    %c0_2 = arith.constant 0 : index
    %2 = vector.load %arg14[%c2, %c0_2] : memref<11x128xf32, #tpu.memory_space<vmem>>, vector<1x128xf32>
    %c3 = arith.constant 3 : index
    %c0_3 = arith.constant 0 : index
    %3 = vector.load %arg14[%c3, %c0_3] : memref<11x128xf32, #tpu.memory_space<vmem>>, vector<1x32xf32>
    %c4 = arith.constant 4 : index
    %c0_4 = arith.constant 0 : index
    %4 = vector.load %arg14[%c4, %c0_4] : memref<11x128xf32, #tpu.memory_space<vmem>>, vector<1x32xf32>
    %c5 = arith.constant 5 : index
    %c0_5 = arith.constant 0 : index
    %5 = vector.load %arg14[%c5, %c0_5] : memref<11x128xf32, #tpu.memory_space<vmem>>, vector<1x32xf32>
    %c6 = arith.constant 6 : index
    %c0_6 = arith.constant 0 : index
    %6 = vector.load %arg14[%c6, %c0_6] : memref<11x128xf32, #tpu.memory_space<vmem>>, vector<1x32xf32>
    %c7 = arith.constant 7 : index
    %c0_7 = arith.constant 0 : index
    %7 = vector.load %arg14[%c7, %c0_7] : memref<11x128xf32, #tpu.memory_space<vmem>>, vector<1x32xf32>
    %c8 = arith.constant 8 : index
    %c0_8 = arith.constant 0 : index
    %8 = vector.load %arg14[%c8, %c0_8] : memref<11x128xf32, #tpu.memory_space<vmem>>, vector<1x32xf32>
    %c9 = arith.constant 9 : index
    %c0_9 = arith.constant 0 : index
    %9 = vector.load %arg14[%c9, %c0_9] : memref<11x128xf32, #tpu.memory_space<vmem>>, vector<1x32xf32>
    %c10 = arith.constant 10 : index
    %c0_10 = arith.constant 0 : index
    %10 = vector.load %arg14[%c10, %c0_10] : memref<11x128xf32, #tpu.memory_space<vmem>>, vector<1x32xf32>
    %c0_11 = arith.constant 0 : index
    %c0_12 = arith.constant 0 : index
    %11 = vector.load %arg1[%c0_11, %c0_12] : memref<16x32xf32, #tpu.memory_space<vmem>>, vector<16x32xf32>
    %c0_13 = arith.constant 0 : index
    %c0_14 = arith.constant 0 : index
    %12 = vector.load %arg2[%c0_13, %c0_14] : memref<16x32xf32, #tpu.memory_space<vmem>>, vector<16x32xf32>
    %cst = arith.constant dense<0.000000e+00> : vector<16xf32>
    %13 = vector.multi_reduction <add>, %11, %cst [1] : vector<16x32xf32> to vector<16xf32>
    %14 = vector.shape_cast %13 : vector<16xf32> to vector<16x1xf32>
    %cst_15 = arith.constant 3.200000e+01 : f32
    %15 = vector.broadcast %cst_15 : f32 to vector<16x1xf32>
    %16 = arith.divf %14, %15 : vector<16x1xf32>
    %17 = vector.broadcast %16 : vector<16x1xf32> to vector<16x32xf32>
    %18 = arith.subf %11, %17 : vector<16x32xf32>
    %19 = arith.mulf %18, %18 : vector<16x32xf32>
    %cst_16 = arith.constant dense<0.000000e+00> : vector<16xf32>
    %20 = vector.multi_reduction <add>, %19, %cst_16 [1] : vector<16x32xf32> to vector<16xf32>
    %21 = vector.shape_cast %20 : vector<16xf32> to vector<16x1xf32>
    %cst_17 = arith.constant 0.0322580636 : f32
    %22 = vector.broadcast %cst_17 : f32 to vector<16x1xf32>
    %23 = arith.mulf %21, %22 : vector<16x1xf32>
    %24 = math.sqrt %23 : vector<16x1xf32>
    %cst_18 = arith.constant 9.99999997E-7 : f32
    %25 = vector.broadcast %cst_18 : f32 to vector<16x1xf32>
    %26 = arith.addf %24, %25 : vector<16x1xf32>
    %27 = tpu.reciprocal %26 {approx = true} : vector<16x1xf32> -> vector<16x1xf32>
    %28 = vector.broadcast %16 : vector<16x1xf32> to vector<16x32xf32>
    %29 = arith.subf %11, %28 : vector<16x32xf32>
    %30 = vector.broadcast %7 : vector<1x32xf32> to vector<16x32xf32>
    %31 = arith.mulf %30, %29 : vector<16x32xf32>
    %32 = vector.broadcast %27 : vector<16x1xf32> to vector<16x32xf32>
    %33 = arith.mulf %31, %32 : vector<16x32xf32>
    %34 = vector.broadcast %8 : vector<1x32xf32> to vector<16x32xf32>
    %35 = arith.addf %33, %34 : vector<16x32xf32>
    %c0_19 = arith.constant 0 : index
    %c0_20 = arith.constant 0 : index
    %36 = vector.load %arg7[%c0_19, %c0_20] : memref<32x96xbf16, #tpu.memory_space<vmem>>, vector<32x96xbf16>
    %37 = arith.truncf %35 : vector<16x32xf32> to vector<16x32xbf16>
    %cst_21 = arith.constant dense<0.000000e+00> : vector<16x96xf32>
    %38 = tpu.matmul %37, %36, %cst_21 {dimension_numbers = #tpu.dot_dimension_numbers<[1], [0], [0], [1], [0, 0, 1, 1], [], []>} : vector<16x32xbf16>, vector<32x96xbf16>, vector<16x96xf32> -> vector<16x96xf32>
    %39 = vector.broadcast %0 : vector<1x96xf32> to vector<16x96xf32>
    %40 = arith.addf %38, %39 : vector<16x96xf32>
    %41 = vector.extract_strided_slice %40 {offsets = [0, 0], sizes = [16, 32], strides = [1, 1]} : vector<16x96xf32> to vector<16x32xf32>
    %c0_22 = arith.constant 0 : index
    %c0_23 = arith.constant 0 : index
    %42 = vector.load %arg4[%c0_22, %c0_23] : memref<16x32xf32, #tpu.memory_space<vmem>>, vector<16x32xf32>
    %43 = arith.addf %41, %42 : vector<16x32xf32>
    %44 = vector.extract_strided_slice %40 {offsets = [0, 32], sizes = [16, 32], strides = [1, 1]} : vector<16x96xf32> to vector<16x32xf32>
    %c0_24 = arith.constant 0 : index
    %c0_25 = arith.constant 0 : index
    %45 = vector.load %arg5[%c0_24, %c0_25] : memref<16x32xf32, #tpu.memory_space<vmem>>, vector<16x32xf32>
    %46 = arith.addf %44, %45 : vector<16x32xf32>
    %47 = vector.extract_strided_slice %40 {offsets = [0, 64], sizes = [16, 32], strides = [1, 1]} : vector<16x96xf32> to vector<16x32xf32>
    %c0_26 = arith.constant 0 : index
    %c0_27 = arith.constant 0 : index
    %48 = vector.load %arg6[%c0_26, %c0_27] : memref<16x32xf32, #tpu.memory_space<vmem>>, vector<16x32xf32>
    %49 = arith.addf %47, %48 : vector<16x32xf32>
    %50 = vector.extract_strided_slice %43 {offsets = [0, 0], sizes = [8, 32], strides = [1, 1]} : vector<16x32xf32> to vector<8x32xf32>
    %51 = vector.extract_strided_slice %46 {offsets = [0, 0], sizes = [8, 32], strides = [1, 1]} : vector<16x32xf32> to vector<8x32xf32>
    %52 = vector.extract_strided_slice %49 {offsets = [0, 0], sizes = [8, 32], strides = [1, 1]} : vector<16x32xf32> to vector<8x32xf32>
    %53 = vector.extract_strided_slice %50 {offsets = [0, 0], sizes = [8, 8], strides = [1, 1]} : vector<8x32xf32> to vector<8x8xf32>
    %54 = arith.truncf %53 : vector<8x8xf32> to vector<8x8xbf16>
    %55 = vector.extract_strided_slice %51 {offsets = [0, 0], sizes = [8, 8], strides = [1, 1]} : vector<8x32xf32> to vector<8x8xf32>
    %56 = arith.truncf %55 : vector<8x8xf32> to vector<8x8xbf16>
    %cst_28 = arith.constant dense<0.000000e+00> : vector<8x8xf32>
    %57 = tpu.matmul %54, %56, %cst_28 {dimension_numbers = #tpu.dot_dimension_numbers<[1], [1], [0], [0], [0, 0, 1, 0], [], []>} : vector<8x8xbf16>, vector<8x8xbf16>, vector<8x8xf32> -> vector<8x8xf32>
    %cst_29 = arith.constant 0.353553385 : f32
    %58 = vector.broadcast %cst_29 : f32 to vector<8x8xf32>
    %59 = arith.mulf %57, %58 : vector<8x8xf32>
    %cst_30 = arith.constant dense<0xFF800000> : vector<8xf32>
    %60 = vector.multi_reduction <maximumf>, %59, %cst_30 [1] : vector<8x8xf32> to vector<8xf32>
    %61 = vector.shape_cast %60 : vector<8xf32> to vector<8x1xf32>
    %62 = vector.broadcast %61 : vector<8x1xf32> to vector<8x8xf32>
    %63 = arith.subf %59, %62 : vector<8x8xf32>
    %64 = math.exp %63 : vector<8x8xf32>
    %cst_31 = arith.constant dense<0.000000e+00> : vector<8xf32>
    %65 = vector.multi_reduction <add>, %64, %cst_31 [1] : vector<8x8xf32> to vector<8xf32>
    %66 = vector.shape_cast %65 : vector<8xf32> to vector<8x1xf32>
    %67 = tpu.reciprocal %66 {approx = true} : vector<8x1xf32> -> vector<8x1xf32>
    %68 = vector.broadcast %67 : vector<8x1xf32> to vector<8x8xf32>
    %69 = arith.mulf %64, %68 : vector<8x8xf32>
    %70 = arith.truncf %69 : vector<8x8xf32> to vector<8x8xbf16>
    %71 = vector.extract_strided_slice %52 {offsets = [0, 0], sizes = [8, 8], strides = [1, 1]} : vector<8x32xf32> to vector<8x8xf32>
    %72 = arith.truncf %71 : vector<8x8xf32> to vector<8x8xbf16>
    %cst_32 = arith.constant dense<0.000000e+00> : vector<8x8xf32>
    %73 = tpu.matmul %70, %72, %cst_32 {dimension_numbers = #tpu.dot_dimension_numbers<[1], [0], [0], [1], [0, 0, 1, 1], [], []>} : vector<8x8xbf16>, vector<8x8xbf16>, vector<8x8xf32> -> vector<8x8xf32>
    %74 = arith.truncf %73 : vector<8x8xf32> to vector<8x8xbf16>
    %c0_33 = arith.constant 0 : index
    %c0_34 = arith.constant 0 : index
    %c0_35 = arith.constant 0 : index
    %75 = vector.load %arg8[%c0_33, %c0_34, %c0_35] : memref<4x8x32xbf16, #tpu.memory_space<vmem>>, vector<1x8x32xbf16>
    %76 = vector.shape_cast %75 : vector<1x8x32xbf16> to vector<8x32xbf16>
    %cst_36 = arith.constant dense<0.000000e+00> : vector<8x32xf32>
    %77 = tpu.matmul %74, %76, %cst_36 {dimension_numbers = #tpu.dot_dimension_numbers<[1], [0], [0], [1], [0, 0, 1, 1], [], []>} : vector<8x8xbf16>, vector<8x32xbf16>, vector<8x32xf32> -> vector<8x32xf32>
    %78 = vector.extract_strided_slice %50 {offsets = [0, 8], sizes = [8, 8], strides = [1, 1]} : vector<8x32xf32> to vector<8x8xf32>
    %79 = arith.truncf %78 : vector<8x8xf32> to vector<8x8xbf16>
    %80 = vector.extract_strided_slice %51 {offsets = [0, 8], sizes = [8, 8], strides = [1, 1]} : vector<8x32xf32> to vector<8x8xf32>
    %81 = arith.truncf %80 : vector<8x8xf32> to vector<8x8xbf16>
    %cst_37 = arith.constant dense<0.000000e+00> : vector<8x8xf32>
    %82 = tpu.matmul %79, %81, %cst_37 {dimension_numbers = #tpu.dot_dimension_numbers<[1], [1], [0], [0], [0, 0, 1, 0], [], []>} : vector<8x8xbf16>, vector<8x8xbf16>, vector<8x8xf32> -> vector<8x8xf32>
    %cst_38 = arith.constant 0.353553385 : f32
    %83 = vector.broadcast %cst_38 : f32 to vector<8x8xf32>
    %84 = arith.mulf %82, %83 : vector<8x8xf32>
    %cst_39 = arith.constant dense<0xFF800000> : vector<8xf32>
    %85 = vector.multi_reduction <maximumf>, %84, %cst_39 [1] : vector<8x8xf32> to vector<8xf32>
    %86 = vector.shape_cast %85 : vector<8xf32> to vector<8x1xf32>
    %87 = vector.broadcast %86 : vector<8x1xf32> to vector<8x8xf32>
    %88 = arith.subf %84, %87 : vector<8x8xf32>
    %89 = math.exp %88 : vector<8x8xf32>
    %cst_40 = arith.constant dense<0.000000e+00> : vector<8xf32>
    %90 = vector.multi_reduction <add>, %89, %cst_40 [1] : vector<8x8xf32> to vector<8xf32>
    %91 = vector.shape_cast %90 : vector<8xf32> to vector<8x1xf32>
    %92 = tpu.reciprocal %91 {approx = true} : vector<8x1xf32> -> vector<8x1xf32>
    %93 = vector.broadcast %92 : vector<8x1xf32> to vector<8x8xf32>
    %94 = arith.mulf %89, %93 : vector<8x8xf32>
    %95 = arith.truncf %94 : vector<8x8xf32> to vector<8x8xbf16>
    %96 = vector.extract_strided_slice %52 {offsets = [0, 8], sizes = [8, 8], strides = [1, 1]} : vector<8x32xf32> to vector<8x8xf32>
    %97 = arith.truncf %96 : vector<8x8xf32> to vector<8x8xbf16>
    %cst_41 = arith.constant dense<0.000000e+00> : vector<8x8xf32>
    %98 = tpu.matmul %95, %97, %cst_41 {dimension_numbers = #tpu.dot_dimension_numbers<[1], [0], [0], [1], [0, 0, 1, 1], [], []>} : vector<8x8xbf16>, vector<8x8xbf16>, vector<8x8xf32> -> vector<8x8xf32>
    %99 = arith.truncf %98 : vector<8x8xf32> to vector<8x8xbf16>
    %c1_42 = arith.constant 1 : index
    %c0_43 = arith.constant 0 : index
    %c0_44 = arith.constant 0 : index
    %100 = vector.load %arg8[%c1_42, %c0_43, %c0_44] : memref<4x8x32xbf16, #tpu.memory_space<vmem>>, vector<1x8x32xbf16>
    %101 = vector.shape_cast %100 : vector<1x8x32xbf16> to vector<8x32xbf16>
    %cst_45 = arith.constant dense<0.000000e+00> : vector<8x32xf32>
    %102 = tpu.matmul %99, %101, %cst_45 {dimension_numbers = #tpu.dot_dimension_numbers<[1], [0], [0], [1], [0, 0, 1, 1], [], []>} : vector<8x8xbf16>, vector<8x32xbf16>, vector<8x32xf32> -> vector<8x32xf32>
    %103 = arith.addf %77, %102 : vector<8x32xf32>
    %104 = vector.extract_strided_slice %50 {offsets = [0, 16], sizes = [8, 8], strides = [1, 1]} : vector<8x32xf32> to vector<8x8xf32>
    %105 = arith.truncf %104 : vector<8x8xf32> to vector<8x8xbf16>
    %106 = vector.extract_strided_slice %51 {offsets = [0, 16], sizes = [8, 8], strides = [1, 1]} : vector<8x32xf32> to vector<8x8xf32>
    %107 = arith.truncf %106 : vector<8x8xf32> to vector<8x8xbf16>
    %cst_46 = arith.constant dense<0.000000e+00> : vector<8x8xf32>
    %108 = tpu.matmul %105, %107, %cst_46 {dimension_numbers = #tpu.dot_dimension_numbers<[1], [1], [0], [0], [0, 0, 1, 0], [], []>} : vector<8x8xbf16>, vector<8x8xbf16>, vector<8x8xf32> -> vector<8x8xf32>
    %cst_47 = arith.constant 0.353553385 : f32
    %109 = vector.broadcast %cst_47 : f32 to vector<8x8xf32>
    %110 = arith.mulf %108, %109 : vector<8x8xf32>
    %cst_48 = arith.constant dense<0xFF800000> : vector<8xf32>
    %111 = vector.multi_reduction <maximumf>, %110, %cst_48 [1] : vector<8x8xf32> to vector<8xf32>
    %112 = vector.shape_cast %111 : vector<8xf32> to vector<8x1xf32>
    %113 = vector.broadcast %112 : vector<8x1xf32> to vector<8x8xf32>
    %114 = arith.subf %110, %113 : vector<8x8xf32>
    %115 = math.exp %114 : vector<8x8xf32>
    %cst_49 = arith.constant dense<0.000000e+00> : vector<8xf32>
    %116 = vector.multi_reduction <add>, %115, %cst_49 [1] : vector<8x8xf32> to vector<8xf32>
    %117 = vector.shape_cast %116 : vector<8xf32> to vector<8x1xf32>
    %118 = tpu.reciprocal %117 {approx = true} : vector<8x1xf32> -> vector<8x1xf32>
    %119 = vector.broadcast %118 : vector<8x1xf32> to vector<8x8xf32>
    %120 = arith.mulf %115, %119 : vector<8x8xf32>
    %121 = arith.truncf %120 : vector<8x8xf32> to vector<8x8xbf16>
    %122 = vector.extract_strided_slice %52 {offsets = [0, 16], sizes = [8, 8], strides = [1, 1]} : vector<8x32xf32> to vector<8x8xf32>
    %123 = arith.truncf %122 : vector<8x8xf32> to vector<8x8xbf16>
    %cst_50 = arith.constant dense<0.000000e+00> : vector<8x8xf32>
    %124 = tpu.matmul %121, %123, %cst_50 {dimension_numbers = #tpu.dot_dimension_numbers<[1], [0], [0], [1], [0, 0, 1, 1], [], []>} : vector<8x8xbf16>, vector<8x8xbf16>, vector<8x8xf32> -> vector<8x8xf32>
    %125 = arith.truncf %124 : vector<8x8xf32> to vector<8x8xbf16>
    %c2_51 = arith.constant 2 : index
    %c0_52 = arith.constant 0 : index
    %c0_53 = arith.constant 0 : index
    %126 = vector.load %arg8[%c2_51, %c0_52, %c0_53] : memref<4x8x32xbf16, #tpu.memory_space<vmem>>, vector<1x8x32xbf16>
    %127 = vector.shape_cast %126 : vector<1x8x32xbf16> to vector<8x32xbf16>
    %cst_54 = arith.constant dense<0.000000e+00> : vector<8x32xf32>
    %128 = tpu.matmul %125, %127, %cst_54 {dimension_numbers = #tpu.dot_dimension_numbers<[1], [0], [0], [1], [0, 0, 1, 1], [], []>} : vector<8x8xbf16>, vector<8x32xbf16>, vector<8x32xf32> -> vector<8x32xf32>
    %129 = arith.addf %103, %128 : vector<8x32xf32>
    %130 = vector.extract_strided_slice %50 {offsets = [0, 24], sizes = [8, 8], strides = [1, 1]} : vector<8x32xf32> to vector<8x8xf32>
    %131 = arith.truncf %130 : vector<8x8xf32> to vector<8x8xbf16>
    %132 = vector.extract_strided_slice %51 {offsets = [0, 24], sizes = [8, 8], strides = [1, 1]} : vector<8x32xf32> to vector<8x8xf32>
    %133 = arith.truncf %132 : vector<8x8xf32> to vector<8x8xbf16>
    %cst_55 = arith.constant dense<0.000000e+00> : vector<8x8xf32>
    %134 = tpu.matmul %131, %133, %cst_55 {dimension_numbers = #tpu.dot_dimension_numbers<[1], [1], [0], [0], [0, 0, 1, 0], [], []>} : vector<8x8xbf16>, vector<8x8xbf16>, vector<8x8xf32> -> vector<8x8xf32>
    %cst_56 = arith.constant 0.353553385 : f32
    %135 = vector.broadcast %cst_56 : f32 to vector<8x8xf32>
    %136 = arith.mulf %134, %135 : vector<8x8xf32>
    %cst_57 = arith.constant dense<0xFF800000> : vector<8xf32>
    %137 = vector.multi_reduction <maximumf>, %136, %cst_57 [1] : vector<8x8xf32> to vector<8xf32>
    %138 = vector.shape_cast %137 : vector<8xf32> to vector<8x1xf32>
    %139 = vector.broadcast %138 : vector<8x1xf32> to vector<8x8xf32>
    %140 = arith.subf %136, %139 : vector<8x8xf32>
    %141 = math.exp %140 : vector<8x8xf32>
    %cst_58 = arith.constant dense<0.000000e+00> : vector<8xf32>
    %142 = vector.multi_reduction <add>, %141, %cst_58 [1] : vector<8x8xf32> to vector<8xf32>
    %143 = vector.shape_cast %142 : vector<8xf32> to vector<8x1xf32>
    %144 = tpu.reciprocal %143 {approx = true} : vector<8x1xf32> -> vector<8x1xf32>
    %145 = vector.broadcast %144 : vector<8x1xf32> to vector<8x8xf32>
    %146 = arith.mulf %141, %145 : vector<8x8xf32>
    %147 = arith.truncf %146 : vector<8x8xf32> to vector<8x8xbf16>
    %148 = vector.extract_strided_slice %52 {offsets = [0, 24], sizes = [8, 8], strides = [1, 1]} : vector<8x32xf32> to vector<8x8xf32>
    %149 = arith.truncf %148 : vector<8x8xf32> to vector<8x8xbf16>
    %cst_59 = arith.constant dense<0.000000e+00> : vector<8x8xf32>
    %150 = tpu.matmul %147, %149, %cst_59 {dimension_numbers = #tpu.dot_dimension_numbers<[1], [0], [0], [1], [0, 0, 1, 1], [], []>} : vector<8x8xbf16>, vector<8x8xbf16>, vector<8x8xf32> -> vector<8x8xf32>
    %151 = arith.truncf %150 : vector<8x8xf32> to vector<8x8xbf16>
    %c3_60 = arith.constant 3 : index
    %c0_61 = arith.constant 0 : index
    %c0_62 = arith.constant 0 : index
    %152 = vector.load %arg8[%c3_60, %c0_61, %c0_62] : memref<4x8x32xbf16, #tpu.memory_space<vmem>>, vector<1x8x32xbf16>
    %153 = vector.shape_cast %152 : vector<1x8x32xbf16> to vector<8x32xbf16>
    %cst_63 = arith.constant dense<0.000000e+00> : vector<8x32xf32>
    %154 = tpu.matmul %151, %153, %cst_63 {dimension_numbers = #tpu.dot_dimension_numbers<[1], [0], [0], [1], [0, 0, 1, 1], [], []>} : vector<8x8xbf16>, vector<8x32xbf16>, vector<8x32xf32> -> vector<8x32xf32>
    %155 = arith.addf %129, %154 : vector<8x32xf32>
    %156 = vector.extract_strided_slice %43 {offsets = [8, 0], sizes = [8, 32], strides = [1, 1]} : vector<16x32xf32> to vector<8x32xf32>
    %157 = vector.extract_strided_slice %46 {offsets = [8, 0], sizes = [8, 32], strides = [1, 1]} : vector<16x32xf32> to vector<8x32xf32>
    %158 = vector.extract_strided_slice %49 {offsets = [8, 0], sizes = [8, 32], strides = [1, 1]} : vector<16x32xf32> to vector<8x32xf32>
    %159 = vector.extract_strided_slice %156 {offsets = [0, 0], sizes = [8, 8], strides = [1, 1]} : vector<8x32xf32> to vector<8x8xf32>
    %160 = arith.truncf %159 : vector<8x8xf32> to vector<8x8xbf16>
    %161 = vector.extract_strided_slice %157 {offsets = [0, 0], sizes = [8, 8], strides = [1, 1]} : vector<8x32xf32> to vector<8x8xf32>
    %162 = arith.truncf %161 : vector<8x8xf32> to vector<8x8xbf16>
    %cst_64 = arith.constant dense<0.000000e+00> : vector<8x8xf32>
    %163 = tpu.matmul %160, %162, %cst_64 {dimension_numbers = #tpu.dot_dimension_numbers<[1], [1], [0], [0], [0, 0, 1, 0], [], []>} : vector<8x8xbf16>, vector<8x8xbf16>, vector<8x8xf32> -> vector<8x8xf32>
    %cst_65 = arith.constant 0.353553385 : f32
    %164 = vector.broadcast %cst_65 : f32 to vector<8x8xf32>
    %165 = arith.mulf %163, %164 : vector<8x8xf32>
    %cst_66 = arith.constant dense<0xFF800000> : vector<8xf32>
    %166 = vector.multi_reduction <maximumf>, %165, %cst_66 [1] : vector<8x8xf32> to vector<8xf32>
    %167 = vector.shape_cast %166 : vector<8xf32> to vector<8x1xf32>
    %168 = vector.broadcast %167 : vector<8x1xf32> to vector<8x8xf32>
    %169 = arith.subf %165, %168 : vector<8x8xf32>
    %170 = math.exp %169 : vector<8x8xf32>
    %cst_67 = arith.constant dense<0.000000e+00> : vector<8xf32>
    %171 = vector.multi_reduction <add>, %170, %cst_67 [1] : vector<8x8xf32> to vector<8xf32>
    %172 = vector.shape_cast %171 : vector<8xf32> to vector<8x1xf32>
    %173 = tpu.reciprocal %172 {approx = true} : vector<8x1xf32> -> vector<8x1xf32>
    %174 = vector.broadcast %173 : vector<8x1xf32> to vector<8x8xf32>
    %175 = arith.mulf %170, %174 : vector<8x8xf32>
    %176 = arith.truncf %175 : vector<8x8xf32> to vector<8x8xbf16>
    %177 = vector.extract_strided_slice %158 {offsets = [0, 0], sizes = [8, 8], strides = [1, 1]} : vector<8x32xf32> to vector<8x8xf32>
    %178 = arith.truncf %177 : vector<8x8xf32> to vector<8x8xbf16>
    %cst_68 = arith.constant dense<0.000000e+00> : vector<8x8xf32>
    %179 = tpu.matmul %176, %178, %cst_68 {dimension_numbers = #tpu.dot_dimension_numbers<[1], [0], [0], [1], [0, 0, 1, 1], [], []>} : vector<8x8xbf16>, vector<8x8xbf16>, vector<8x8xf32> -> vector<8x8xf32>
    %180 = arith.truncf %179 : vector<8x8xf32> to vector<8x8xbf16>
    %c0_69 = arith.constant 0 : index
    %c0_70 = arith.constant 0 : index
    %c0_71 = arith.constant 0 : index
    %181 = vector.load %arg8[%c0_69, %c0_70, %c0_71] : memref<4x8x32xbf16, #tpu.memory_space<vmem>>, vector<1x8x32xbf16>
    %182 = vector.shape_cast %181 : vector<1x8x32xbf16> to vector<8x32xbf16>
    %cst_72 = arith.constant dense<0.000000e+00> : vector<8x32xf32>
    %183 = tpu.matmul %180, %182, %cst_72 {dimension_numbers = #tpu.dot_dimension_numbers<[1], [0], [0], [1], [0, 0, 1, 1], [], []>} : vector<8x8xbf16>, vector<8x32xbf16>, vector<8x32xf32> -> vector<8x32xf32>
    %184 = vector.extract_strided_slice %156 {offsets = [0, 8], sizes = [8, 8], strides = [1, 1]} : vector<8x32xf32> to vector<8x8xf32>
    %185 = arith.truncf %184 : vector<8x8xf32> to vector<8x8xbf16>
    %186 = vector.extract_strided_slice %157 {offsets = [0, 8], sizes = [8, 8], strides = [1, 1]} : vector<8x32xf32> to vector<8x8xf32>
    %187 = arith.truncf %186 : vector<8x8xf32> to vector<8x8xbf16>
    %cst_73 = arith.constant dense<0.000000e+00> : vector<8x8xf32>
    %188 = tpu.matmul %185, %187, %cst_73 {dimension_numbers = #tpu.dot_dimension_numbers<[1], [1], [0], [0], [0, 0, 1, 0], [], []>} : vector<8x8xbf16>, vector<8x8xbf16>, vector<8x8xf32> -> vector<8x8xf32>
    %cst_74 = arith.constant 0.353553385 : f32
    %189 = vector.broadcast %cst_74 : f32 to vector<8x8xf32>
    %190 = arith.mulf %188, %189 : vector<8x8xf32>
    %cst_75 = arith.constant dense<0xFF800000> : vector<8xf32>
    %191 = vector.multi_reduction <maximumf>, %190, %cst_75 [1] : vector<8x8xf32> to vector<8xf32>
    %192 = vector.shape_cast %191 : vector<8xf32> to vector<8x1xf32>
    %193 = vector.broadcast %192 : vector<8x1xf32> to vector<8x8xf32>
    %194 = arith.subf %190, %193 : vector<8x8xf32>
    %195 = math.exp %194 : vector<8x8xf32>
    %cst_76 = arith.constant dense<0.000000e+00> : vector<8xf32>
    %196 = vector.multi_reduction <add>, %195, %cst_76 [1] : vector<8x8xf32> to vector<8xf32>
    %197 = vector.shape_cast %196 : vector<8xf32> to vector<8x1xf32>
    %198 = tpu.reciprocal %197 {approx = true} : vector<8x1xf32> -> vector<8x1xf32>
    %199 = vector.broadcast %198 : vector<8x1xf32> to vector<8x8xf32>
    %200 = arith.mulf %195, %199 : vector<8x8xf32>
    %201 = arith.truncf %200 : vector<8x8xf32> to vector<8x8xbf16>
    %202 = vector.extract_strided_slice %158 {offsets = [0, 8], sizes = [8, 8], strides = [1, 1]} : vector<8x32xf32> to vector<8x8xf32>
    %203 = arith.truncf %202 : vector<8x8xf32> to vector<8x8xbf16>
    %cst_77 = arith.constant dense<0.000000e+00> : vector<8x8xf32>
    %204 = tpu.matmul %201, %203, %cst_77 {dimension_numbers = #tpu.dot_dimension_numbers<[1], [0], [0], [1], [0, 0, 1, 1], [], []>} : vector<8x8xbf16>, vector<8x8xbf16>, vector<8x8xf32> -> vector<8x8xf32>
    %205 = arith.truncf %204 : vector<8x8xf32> to vector<8x8xbf16>
    %c1_78 = arith.constant 1 : index
    %c0_79 = arith.constant 0 : index
    %c0_80 = arith.constant 0 : index
    %206 = vector.load %arg8[%c1_78, %c0_79, %c0_80] : memref<4x8x32xbf16, #tpu.memory_space<vmem>>, vector<1x8x32xbf16>
    %207 = vector.shape_cast %206 : vector<1x8x32xbf16> to vector<8x32xbf16>
    %cst_81 = arith.constant dense<0.000000e+00> : vector<8x32xf32>
    %208 = tpu.matmul %205, %207, %cst_81 {dimension_numbers = #tpu.dot_dimension_numbers<[1], [0], [0], [1], [0, 0, 1, 1], [], []>} : vector<8x8xbf16>, vector<8x32xbf16>, vector<8x32xf32> -> vector<8x32xf32>
    %209 = arith.addf %183, %208 : vector<8x32xf32>
    %210 = vector.extract_strided_slice %156 {offsets = [0, 16], sizes = [8, 8], strides = [1, 1]} : vector<8x32xf32> to vector<8x8xf32>
    %211 = arith.truncf %210 : vector<8x8xf32> to vector<8x8xbf16>
    %212 = vector.extract_strided_slice %157 {offsets = [0, 16], sizes = [8, 8], strides = [1, 1]} : vector<8x32xf32> to vector<8x8xf32>
    %213 = arith.truncf %212 : vector<8x8xf32> to vector<8x8xbf16>
    %cst_82 = arith.constant dense<0.000000e+00> : vector<8x8xf32>
    %214 = tpu.matmul %211, %213, %cst_82 {dimension_numbers = #tpu.dot_dimension_numbers<[1], [1], [0], [0], [0, 0, 1, 0], [], []>} : vector<8x8xbf16>, vector<8x8xbf16>, vector<8x8xf32> -> vector<8x8xf32>
    %cst_83 = arith.constant 0.353553385 : f32
    %215 = vector.broadcast %cst_83 : f32 to vector<8x8xf32>
    %216 = arith.mulf %214, %215 : vector<8x8xf32>
    %cst_84 = arith.constant dense<0xFF800000> : vector<8xf32>
    %217 = vector.multi_reduction <maximumf>, %216, %cst_84 [1] : vector<8x8xf32> to vector<8xf32>
    %218 = vector.shape_cast %217 : vector<8xf32> to vector<8x1xf32>
    %219 = vector.broadcast %218 : vector<8x1xf32> to vector<8x8xf32>
    %220 = arith.subf %216, %219 : vector<8x8xf32>
    %221 = math.exp %220 : vector<8x8xf32>
    %cst_85 = arith.constant dense<0.000000e+00> : vector<8xf32>
    %222 = vector.multi_reduction <add>, %221, %cst_85 [1] : vector<8x8xf32> to vector<8xf32>
    %223 = vector.shape_cast %222 : vector<8xf32> to vector<8x1xf32>
    %224 = tpu.reciprocal %223 {approx = true} : vector<8x1xf32> -> vector<8x1xf32>
    %225 = vector.broadcast %224 : vector<8x1xf32> to vector<8x8xf32>
    %226 = arith.mulf %221, %225 : vector<8x8xf32>
    %227 = arith.truncf %226 : vector<8x8xf32> to vector<8x8xbf16>
    %228 = vector.extract_strided_slice %158 {offsets = [0, 16], sizes = [8, 8], strides = [1, 1]} : vector<8x32xf32> to vector<8x8xf32>
    %229 = arith.truncf %228 : vector<8x8xf32> to vector<8x8xbf16>
    %cst_86 = arith.constant dense<0.000000e+00> : vector<8x8xf32>
    %230 = tpu.matmul %227, %229, %cst_86 {dimension_numbers = #tpu.dot_dimension_numbers<[1], [0], [0], [1], [0, 0, 1, 1], [], []>} : vector<8x8xbf16>, vector<8x8xbf16>, vector<8x8xf32> -> vector<8x8xf32>
    %231 = arith.truncf %230 : vector<8x8xf32> to vector<8x8xbf16>
    %c2_87 = arith.constant 2 : index
    %c0_88 = arith.constant 0 : index
    %c0_89 = arith.constant 0 : index
    %232 = vector.load %arg8[%c2_87, %c0_88, %c0_89] : memref<4x8x32xbf16, #tpu.memory_space<vmem>>, vector<1x8x32xbf16>
    %233 = vector.shape_cast %232 : vector<1x8x32xbf16> to vector<8x32xbf16>
    %cst_90 = arith.constant dense<0.000000e+00> : vector<8x32xf32>
    %234 = tpu.matmul %231, %233, %cst_90 {dimension_numbers = #tpu.dot_dimension_numbers<[1], [0], [0], [1], [0, 0, 1, 1], [], []>} : vector<8x8xbf16>, vector<8x32xbf16>, vector<8x32xf32> -> vector<8x32xf32>
    %235 = arith.addf %209, %234 : vector<8x32xf32>
    %236 = vector.extract_strided_slice %156 {offsets = [0, 24], sizes = [8, 8], strides = [1, 1]} : vector<8x32xf32> to vector<8x8xf32>
    %237 = arith.truncf %236 : vector<8x8xf32> to vector<8x8xbf16>
    %238 = vector.extract_strided_slice %157 {offsets = [0, 24], sizes = [8, 8], strides = [1, 1]} : vector<8x32xf32> to vector<8x8xf32>
    %239 = arith.truncf %238 : vector<8x8xf32> to vector<8x8xbf16>
    %cst_91 = arith.constant dense<0.000000e+00> : vector<8x8xf32>
    %240 = tpu.matmul %237, %239, %cst_91 {dimension_numbers = #tpu.dot_dimension_numbers<[1], [1], [0], [0], [0, 0, 1, 0], [], []>} : vector<8x8xbf16>, vector<8x8xbf16>, vector<8x8xf32> -> vector<8x8xf32>
    %cst_92 = arith.constant 0.353553385 : f32
    %241 = vector.broadcast %cst_92 : f32 to vector<8x8xf32>
    %242 = arith.mulf %240, %241 : vector<8x8xf32>
    %cst_93 = arith.constant dense<0xFF800000> : vector<8xf32>
    %243 = vector.multi_reduction <maximumf>, %242, %cst_93 [1] : vector<8x8xf32> to vector<8xf32>
    %244 = vector.shape_cast %243 : vector<8xf32> to vector<8x1xf32>
    %245 = vector.broadcast %244 : vector<8x1xf32> to vector<8x8xf32>
    %246 = arith.subf %242, %245 : vector<8x8xf32>
    %247 = math.exp %246 : vector<8x8xf32>
    %cst_94 = arith.constant dense<0.000000e+00> : vector<8xf32>
    %248 = vector.multi_reduction <add>, %247, %cst_94 [1] : vector<8x8xf32> to vector<8xf32>
    %249 = vector.shape_cast %248 : vector<8xf32> to vector<8x1xf32>
    %250 = tpu.reciprocal %249 {approx = true} : vector<8x1xf32> -> vector<8x1xf32>
    %251 = vector.broadcast %250 : vector<8x1xf32> to vector<8x8xf32>
    %252 = arith.mulf %247, %251 : vector<8x8xf32>
    %253 = arith.truncf %252 : vector<8x8xf32> to vector<8x8xbf16>
    %254 = vector.extract_strided_slice %158 {offsets = [0, 24], sizes = [8, 8], strides = [1, 1]} : vector<8x32xf32> to vector<8x8xf32>
    %255 = arith.truncf %254 : vector<8x8xf32> to vector<8x8xbf16>
    %cst_95 = arith.constant dense<0.000000e+00> : vector<8x8xf32>
    %256 = tpu.matmul %253, %255, %cst_95 {dimension_numbers = #tpu.dot_dimension_numbers<[1], [0], [0], [1], [0, 0, 1, 1], [], []>} : vector<8x8xbf16>, vector<8x8xbf16>, vector<8x8xf32> -> vector<8x8xf32>
    %257 = arith.truncf %256 : vector<8x8xf32> to vector<8x8xbf16>
    %c3_96 = arith.constant 3 : index
    %c0_97 = arith.constant 0 : index
    %c0_98 = arith.constant 0 : index
    %258 = vector.load %arg8[%c3_96, %c0_97, %c0_98] : memref<4x8x32xbf16, #tpu.memory_space<vmem>>, vector<1x8x32xbf16>
    %259 = vector.shape_cast %258 : vector<1x8x32xbf16> to vector<8x32xbf16>
    %cst_99 = arith.constant dense<0.000000e+00> : vector<8x32xf32>
    %260 = tpu.matmul %257, %259, %cst_99 {dimension_numbers = #tpu.dot_dimension_numbers<[1], [0], [0], [1], [0, 0, 1, 1], [], []>} : vector<8x8xbf16>, vector<8x32xbf16>, vector<8x32xf32> -> vector<8x32xf32>
    %261 = arith.addf %235, %260 : vector<8x32xf32>
    %262 = tpu.concatenate %155, %261 in 0 : vector<8x32xf32>, vector<8x32xf32> -> vector<16x32xf32>
    %263 = arith.addf %11, %262 : vector<16x32xf32>
    %264 = vector.broadcast %3 : vector<1x32xf32> to vector<16x32xf32>
    %265 = arith.addf %263, %264 : vector<16x32xf32>
    %cst_100 = arith.constant dense<0.000000e+00> : vector<16xf32>
    %266 = vector.multi_reduction <add>, %265, %cst_100 [1] : vector<16x32xf32> to vector<16xf32>
    %267 = vector.shape_cast %266 : vector<16xf32> to vector<16x1xf32>
    %cst_101 = arith.constant 3.200000e+01 : f32
    %268 = vector.broadcast %cst_101 : f32 to vector<16x1xf32>
    %269 = arith.divf %267, %268 : vector<16x1xf32>
    %270 = vector.broadcast %269 : vector<16x1xf32> to vector<16x32xf32>
    %271 = arith.subf %265, %270 : vector<16x32xf32>
    %272 = arith.mulf %271, %271 : vector<16x32xf32>
    %cst_102 = arith.constant dense<0.000000e+00> : vector<16xf32>
    %273 = vector.multi_reduction <add>, %272, %cst_102 [1] : vector<16x32xf32> to vector<16xf32>
    %274 = vector.shape_cast %273 : vector<16xf32> to vector<16x1xf32>
    %cst_103 = arith.constant 0.0322580636 : f32
    %275 = vector.broadcast %cst_103 : f32 to vector<16x1xf32>
    %276 = arith.mulf %274, %275 : vector<16x1xf32>
    %277 = math.sqrt %276 : vector<16x1xf32>
    %cst_104 = arith.constant 9.99999997E-7 : f32
    %278 = vector.broadcast %cst_104 : f32 to vector<16x1xf32>
    %279 = arith.addf %277, %278 : vector<16x1xf32>
    %280 = tpu.reciprocal %279 {approx = true} : vector<16x1xf32> -> vector<16x1xf32>
    %281 = vector.broadcast %269 : vector<16x1xf32> to vector<16x32xf32>
    %282 = arith.subf %265, %281 : vector<16x32xf32>
    %283 = vector.broadcast %9 : vector<1x32xf32> to vector<16x32xf32>
    %284 = arith.mulf %283, %282 : vector<16x32xf32>
    %285 = vector.broadcast %280 : vector<16x1xf32> to vector<16x32xf32>
    %286 = arith.mulf %284, %285 : vector<16x32xf32>
    %287 = vector.broadcast %10 : vector<1x32xf32> to vector<16x32xf32>
    %288 = arith.addf %286, %287 : vector<16x32xf32>
    %c0_105 = arith.constant 0 : index
    %c0_106 = arith.constant 0 : index
    %289 = vector.load %arg9[%c0_105, %c0_106] : memref<32x32xbf16, #tpu.memory_space<vmem>>, vector<32x32xbf16>
    %290 = arith.truncf %288 : vector<16x32xf32> to vector<16x32xbf16>
    %cst_107 = arith.constant dense<0.000000e+00> : vector<16x32xf32>
    %291 = tpu.matmul %290, %289, %cst_107 {dimension_numbers = #tpu.dot_dimension_numbers<[1], [0], [0], [1], [0, 0, 1, 1], [], []>} : vector<16x32xbf16>, vector<32x32xbf16>, vector<16x32xf32> -> vector<16x32xf32>
    %292 = vector.broadcast %4 : vector<1x32xf32> to vector<16x32xf32>
    %293 = arith.addf %291, %292 : vector<16x32xf32>
    %c0_108 = arith.constant 0 : index
    %c0_109 = arith.constant 0 : index
    %294 = vector.load %arg10[%c0_108, %c0_109] : memref<32x64xbf16, #tpu.memory_space<vmem>>, vector<32x64xbf16>
    %295 = arith.truncf %12 : vector<16x32xf32> to vector<16x32xbf16>
    %cst_110 = arith.constant dense<0.000000e+00> : vector<16x64xf32>
    %296 = tpu.matmul %295, %294, %cst_110 {dimension_numbers = #tpu.dot_dimension_numbers<[1], [0], [0], [1], [0, 0, 1, 1], [], []>} : vector<16x32xbf16>, vector<32x64xbf16>, vector<16x64xf32> -> vector<16x64xf32>
    %297 = vector.broadcast %1 : vector<1x64xf32> to vector<16x64xf32>
    %298 = arith.addf %296, %297 : vector<16x64xf32>
    %299 = vector.extract_strided_slice %298 {offsets = [0, 0], sizes = [16, 32], strides = [1, 1]} : vector<16x64xf32> to vector<16x32xf32>
    %300 = vector.extract_strided_slice %298 {offsets = [0, 32], sizes = [16, 32], strides = [1, 1]} : vector<16x64xf32> to vector<16x32xf32>
    %c0_111 = arith.constant 0 : index
    %c0_112 = arith.constant 0 : index
    %c0_113 = arith.constant 0 : index
    %301 = vector.load %arg3[%c0_111, %c0_112, %c0_113] : memref<2x8x8xbf16, #tpu.memory_space<vmem>>, vector<1x8x8xbf16>
    %302 = vector.shape_cast %301 : vector<1x8x8xbf16> to vector<8x8xbf16>
    %303 = arith.extf %302 : vector<8x8xbf16> to vector<8x8xf32>
    %304 = vector.extract_strided_slice %293 {offsets = [0, 0], sizes = [8, 32], strides = [1, 1]} : vector<16x32xf32> to vector<8x32xf32>
    %305 = vector.extract_strided_slice %299 {offsets = [0, 0], sizes = [8, 32], strides = [1, 1]} : vector<16x32xf32> to vector<8x32xf32>
    %306 = vector.extract_strided_slice %300 {offsets = [0, 0], sizes = [8, 32], strides = [1, 1]} : vector<16x32xf32> to vector<8x32xf32>
    %307 = vector.extract_strided_slice %304 {offsets = [0, 0], sizes = [8, 8], strides = [1, 1]} : vector<8x32xf32> to vector<8x8xf32>
    %308 = arith.truncf %307 : vector<8x8xf32> to vector<8x8xbf16>
    %309 = vector.extract_strided_slice %305 {offsets = [0, 0], sizes = [8, 8], strides = [1, 1]} : vector<8x32xf32> to vector<8x8xf32>
    %310 = arith.truncf %309 : vector<8x8xf32> to vector<8x8xbf16>
    %cst_114 = arith.constant dense<0.000000e+00> : vector<8x8xf32>
    %311 = tpu.matmul %308, %310, %cst_114 {dimension_numbers = #tpu.dot_dimension_numbers<[1], [1], [0], [0], [0, 0, 1, 0], [], []>} : vector<8x8xbf16>, vector<8x8xbf16>, vector<8x8xf32> -> vector<8x8xf32>
    %cst_115 = arith.constant 0.353553385 : f32
    %312 = vector.broadcast %cst_115 : f32 to vector<8x8xf32>
    %313 = arith.mulf %311, %312 : vector<8x8xf32>
    %cst_116 = arith.constant 0.000000e+00 : f32
    %314 = vector.broadcast %cst_116 : f32 to vector<8x8xf32>
    %315 = arith.cmpf oeq, %303, %314 : vector<8x8xf32>
    %cst_117 = arith.constant -1.000000e+09 : f32
    %316 = vector.broadcast %cst_117 : f32 to vector<8x8xf32>
    %317 = arith.select %315, %316, %313 : vector<8x8xi1>, vector<8x8xf32>
    %cst_118 = arith.constant dense<0xFF800000> : vector<8xf32>
    %318 = vector.multi_reduction <maximumf>, %317, %cst_118 [1] : vector<8x8xf32> to vector<8xf32>
    %319 = vector.shape_cast %318 : vector<8xf32> to vector<8x1xf32>
    %320 = vector.broadcast %319 : vector<8x1xf32> to vector<8x8xf32>
    %321 = arith.subf %317, %320 : vector<8x8xf32>
    %322 = math.exp %321 : vector<8x8xf32>
    %cst_119 = arith.constant dense<0.000000e+00> : vector<8xf32>
    %323 = vector.multi_reduction <add>, %322, %cst_119 [1] : vector<8x8xf32> to vector<8xf32>
    %324 = vector.shape_cast %323 : vector<8xf32> to vector<8x1xf32>
    %325 = tpu.reciprocal %324 {approx = true} : vector<8x1xf32> -> vector<8x1xf32>
    %326 = vector.broadcast %325 : vector<8x1xf32> to vector<8x8xf32>
    %327 = arith.mulf %322, %326 : vector<8x8xf32>
    %328 = arith.truncf %327 : vector<8x8xf32> to vector<8x8xbf16>
    %329 = vector.extract_strided_slice %306 {offsets = [0, 0], sizes = [8, 8], strides = [1, 1]} : vector<8x32xf32> to vector<8x8xf32>
    %330 = arith.truncf %329 : vector<8x8xf32> to vector<8x8xbf16>
    %cst_120 = arith.constant dense<0.000000e+00> : vector<8x8xf32>
    %331 = tpu.matmul %328, %330, %cst_120 {dimension_numbers = #tpu.dot_dimension_numbers<[1], [0], [0], [1], [0, 0, 1, 1], [], []>} : vector<8x8xbf16>, vector<8x8xbf16>, vector<8x8xf32> -> vector<8x8xf32>
    %332 = arith.truncf %331 : vector<8x8xf32> to vector<8x8xbf16>
    %c0_121 = arith.constant 0 : index
    %c0_122 = arith.constant 0 : index
    %c0_123 = arith.constant 0 : index
    %333 = vector.load %arg11[%c0_121, %c0_122, %c0_123] : memref<4x8x32xbf16, #tpu.memory_space<vmem>>, vector<1x8x32xbf16>
    %334 = vector.shape_cast %333 : vector<1x8x32xbf16> to vector<8x32xbf16>
    %cst_124 = arith.constant dense<0.000000e+00> : vector<8x32xf32>
    %335 = tpu.matmul %332, %334, %cst_124 {dimension_numbers = #tpu.dot_dimension_numbers<[1], [0], [0], [1], [0, 0, 1, 1], [], []>} : vector<8x8xbf16>, vector<8x32xbf16>, vector<8x32xf32> -> vector<8x32xf32>
    %336 = vector.extract_strided_slice %304 {offsets = [0, 8], sizes = [8, 8], strides = [1, 1]} : vector<8x32xf32> to vector<8x8xf32>
    %337 = arith.truncf %336 : vector<8x8xf32> to vector<8x8xbf16>
    %338 = vector.extract_strided_slice %305 {offsets = [0, 8], sizes = [8, 8], strides = [1, 1]} : vector<8x32xf32> to vector<8x8xf32>
    %339 = arith.truncf %338 : vector<8x8xf32> to vector<8x8xbf16>
    %cst_125 = arith.constant dense<0.000000e+00> : vector<8x8xf32>
    %340 = tpu.matmul %337, %339, %cst_125 {dimension_numbers = #tpu.dot_dimension_numbers<[1], [1], [0], [0], [0, 0, 1, 0], [], []>} : vector<8x8xbf16>, vector<8x8xbf16>, vector<8x8xf32> -> vector<8x8xf32>
    %cst_126 = arith.constant 0.353553385 : f32
    %341 = vector.broadcast %cst_126 : f32 to vector<8x8xf32>
    %342 = arith.mulf %340, %341 : vector<8x8xf32>
    %cst_127 = arith.constant 0.000000e+00 : f32
    %343 = vector.broadcast %cst_127 : f32 to vector<8x8xf32>
    %344 = arith.cmpf oeq, %303, %343 : vector<8x8xf32>
    %cst_128 = arith.constant -1.000000e+09 : f32
    %345 = vector.broadcast %cst_128 : f32 to vector<8x8xf32>
    %346 = arith.select %344, %345, %342 : vector<8x8xi1>, vector<8x8xf32>
    %cst_129 = arith.constant dense<0xFF800000> : vector<8xf32>
    %347 = vector.multi_reduction <maximumf>, %346, %cst_129 [1] : vector<8x8xf32> to vector<8xf32>
    %348 = vector.shape_cast %347 : vector<8xf32> to vector<8x1xf32>
    %349 = vector.broadcast %348 : vector<8x1xf32> to vector<8x8xf32>
    %350 = arith.subf %346, %349 : vector<8x8xf32>
    %351 = math.exp %350 : vector<8x8xf32>
    %cst_130 = arith.constant dense<0.000000e+00> : vector<8xf32>
    %352 = vector.multi_reduction <add>, %351, %cst_130 [1] : vector<8x8xf32> to vector<8xf32>
    %353 = vector.shape_cast %352 : vector<8xf32> to vector<8x1xf32>
    %354 = tpu.reciprocal %353 {approx = true} : vector<8x1xf32> -> vector<8x1xf32>
    %355 = vector.broadcast %354 : vector<8x1xf32> to vector<8x8xf32>
    %356 = arith.mulf %351, %355 : vector<8x8xf32>
    %357 = arith.truncf %356 : vector<8x8xf32> to vector<8x8xbf16>
    %358 = vector.extract_strided_slice %306 {offsets = [0, 8], sizes = [8, 8], strides = [1, 1]} : vector<8x32xf32> to vector<8x8xf32>
    %359 = arith.truncf %358 : vector<8x8xf32> to vector<8x8xbf16>
    %cst_131 = arith.constant dense<0.000000e+00> : vector<8x8xf32>
    %360 = tpu.matmul %357, %359, %cst_131 {dimension_numbers = #tpu.dot_dimension_numbers<[1], [0], [0], [1], [0, 0, 1, 1], [], []>} : vector<8x8xbf16>, vector<8x8xbf16>, vector<8x8xf32> -> vector<8x8xf32>
    %361 = arith.truncf %360 : vector<8x8xf32> to vector<8x8xbf16>
    %c1_132 = arith.constant 1 : index
    %c0_133 = arith.constant 0 : index
    %c0_134 = arith.constant 0 : index
    %362 = vector.load %arg11[%c1_132, %c0_133, %c0_134] : memref<4x8x32xbf16, #tpu.memory_space<vmem>>, vector<1x8x32xbf16>
    %363 = vector.shape_cast %362 : vector<1x8x32xbf16> to vector<8x32xbf16>
    %cst_135 = arith.constant dense<0.000000e+00> : vector<8x32xf32>
    %364 = tpu.matmul %361, %363, %cst_135 {dimension_numbers = #tpu.dot_dimension_numbers<[1], [0], [0], [1], [0, 0, 1, 1], [], []>} : vector<8x8xbf16>, vector<8x32xbf16>, vector<8x32xf32> -> vector<8x32xf32>
    %365 = arith.addf %335, %364 : vector<8x32xf32>
    %366 = vector.extract_strided_slice %304 {offsets = [0, 16], sizes = [8, 8], strides = [1, 1]} : vector<8x32xf32> to vector<8x8xf32>
    %367 = arith.truncf %366 : vector<8x8xf32> to vector<8x8xbf16>
    %368 = vector.extract_strided_slice %305 {offsets = [0, 16], sizes = [8, 8], strides = [1, 1]} : vector<8x32xf32> to vector<8x8xf32>
    %369 = arith.truncf %368 : vector<8x8xf32> to vector<8x8xbf16>
    %cst_136 = arith.constant dense<0.000000e+00> : vector<8x8xf32>
    %370 = tpu.matmul %367, %369, %cst_136 {dimension_numbers = #tpu.dot_dimension_numbers<[1], [1], [0], [0], [0, 0, 1, 0], [], []>} : vector<8x8xbf16>, vector<8x8xbf16>, vector<8x8xf32> -> vector<8x8xf32>
    %cst_137 = arith.constant 0.353553385 : f32
    %371 = vector.broadcast %cst_137 : f32 to vector<8x8xf32>
    %372 = arith.mulf %370, %371 : vector<8x8xf32>
    %cst_138 = arith.constant 0.000000e+00 : f32
    %373 = vector.broadcast %cst_138 : f32 to vector<8x8xf32>
    %374 = arith.cmpf oeq, %303, %373 : vector<8x8xf32>
    %cst_139 = arith.constant -1.000000e+09 : f32
    %375 = vector.broadcast %cst_139 : f32 to vector<8x8xf32>
    %376 = arith.select %374, %375, %372 : vector<8x8xi1>, vector<8x8xf32>
    %cst_140 = arith.constant dense<0xFF800000> : vector<8xf32>
    %377 = vector.multi_reduction <maximumf>, %376, %cst_140 [1] : vector<8x8xf32> to vector<8xf32>
    %378 = vector.shape_cast %377 : vector<8xf32> to vector<8x1xf32>
    %379 = vector.broadcast %378 : vector<8x1xf32> to vector<8x8xf32>
    %380 = arith.subf %376, %379 : vector<8x8xf32>
    %381 = math.exp %380 : vector<8x8xf32>
    %cst_141 = arith.constant dense<0.000000e+00> : vector<8xf32>
    %382 = vector.multi_reduction <add>, %381, %cst_141 [1] : vector<8x8xf32> to vector<8xf32>
    %383 = vector.shape_cast %382 : vector<8xf32> to vector<8x1xf32>
    %384 = tpu.reciprocal %383 {approx = true} : vector<8x1xf32> -> vector<8x1xf32>
    %385 = vector.broadcast %384 : vector<8x1xf32> to vector<8x8xf32>
    %386 = arith.mulf %381, %385 : vector<8x8xf32>
    %387 = arith.truncf %386 : vector<8x8xf32> to vector<8x8xbf16>
    %388 = vector.extract_strided_slice %306 {offsets = [0, 16], sizes = [8, 8], strides = [1, 1]} : vector<8x32xf32> to vector<8x8xf32>
    %389 = arith.truncf %388 : vector<8x8xf32> to vector<8x8xbf16>
    %cst_142 = arith.constant dense<0.000000e+00> : vector<8x8xf32>
    %390 = tpu.matmul %387, %389, %cst_142 {dimension_numbers = #tpu.dot_dimension_numbers<[1], [0], [0], [1], [0, 0, 1, 1], [], []>} : vector<8x8xbf16>, vector<8x8xbf16>, vector<8x8xf32> -> vector<8x8xf32>
    %391 = arith.truncf %390 : vector<8x8xf32> to vector<8x8xbf16>
    %c2_143 = arith.constant 2 : index
    %c0_144 = arith.constant 0 : index
    %c0_145 = arith.constant 0 : index
    %392 = vector.load %arg11[%c2_143, %c0_144, %c0_145] : memref<4x8x32xbf16, #tpu.memory_space<vmem>>, vector<1x8x32xbf16>
    %393 = vector.shape_cast %392 : vector<1x8x32xbf16> to vector<8x32xbf16>
    %cst_146 = arith.constant dense<0.000000e+00> : vector<8x32xf32>
    %394 = tpu.matmul %391, %393, %cst_146 {dimension_numbers = #tpu.dot_dimension_numbers<[1], [0], [0], [1], [0, 0, 1, 1], [], []>} : vector<8x8xbf16>, vector<8x32xbf16>, vector<8x32xf32> -> vector<8x32xf32>
    %395 = arith.addf %365, %394 : vector<8x32xf32>
    %396 = vector.extract_strided_slice %304 {offsets = [0, 24], sizes = [8, 8], strides = [1, 1]} : vector<8x32xf32> to vector<8x8xf32>
    %397 = arith.truncf %396 : vector<8x8xf32> to vector<8x8xbf16>
    %398 = vector.extract_strided_slice %305 {offsets = [0, 24], sizes = [8, 8], strides = [1, 1]} : vector<8x32xf32> to vector<8x8xf32>
    %399 = arith.truncf %398 : vector<8x8xf32> to vector<8x8xbf16>
    %cst_147 = arith.constant dense<0.000000e+00> : vector<8x8xf32>
    %400 = tpu.matmul %397, %399, %cst_147 {dimension_numbers = #tpu.dot_dimension_numbers<[1], [1], [0], [0], [0, 0, 1, 0], [], []>} : vector<8x8xbf16>, vector<8x8xbf16>, vector<8x8xf32> -> vector<8x8xf32>
    %cst_148 = arith.constant 0.353553385 : f32
    %401 = vector.broadcast %cst_148 : f32 to vector<8x8xf32>
    %402 = arith.mulf %400, %401 : vector<8x8xf32>
    %cst_149 = arith.constant 0.000000e+00 : f32
    %403 = vector.broadcast %cst_149 : f32 to vector<8x8xf32>
    %404 = arith.cmpf oeq, %303, %403 : vector<8x8xf32>
    %cst_150 = arith.constant -1.000000e+09 : f32
    %405 = vector.broadcast %cst_150 : f32 to vector<8x8xf32>
    %406 = arith.select %404, %405, %402 : vector<8x8xi1>, vector<8x8xf32>
    %cst_151 = arith.constant dense<0xFF800000> : vector<8xf32>
    %407 = vector.multi_reduction <maximumf>, %406, %cst_151 [1] : vector<8x8xf32> to vector<8xf32>
    %408 = vector.shape_cast %407 : vector<8xf32> to vector<8x1xf32>
    %409 = vector.broadcast %408 : vector<8x1xf32> to vector<8x8xf32>
    %410 = arith.subf %406, %409 : vector<8x8xf32>
    %411 = math.exp %410 : vector<8x8xf32>
    %cst_152 = arith.constant dense<0.000000e+00> : vector<8xf32>
    %412 = vector.multi_reduction <add>, %411, %cst_152 [1] : vector<8x8xf32> to vector<8xf32>
    %413 = vector.shape_cast %412 : vector<8xf32> to vector<8x1xf32>
    %414 = tpu.reciprocal %413 {approx = true} : vector<8x1xf32> -> vector<8x1xf32>
    %415 = vector.broadcast %414 : vector<8x1xf32> to vector<8x8xf32>
    %416 = arith.mulf %411, %415 : vector<8x8xf32>
    %417 = arith.truncf %416 : vector<8x8xf32> to vector<8x8xbf16>
    %418 = vector.extract_strided_slice %306 {offsets = [0, 24], sizes = [8, 8], strides = [1, 1]} : vector<8x32xf32> to vector<8x8xf32>
    %419 = arith.truncf %418 : vector<8x8xf32> to vector<8x8xbf16>
    %cst_153 = arith.constant dense<0.000000e+00> : vector<8x8xf32>
    %420 = tpu.matmul %417, %419, %cst_153 {dimension_numbers = #tpu.dot_dimension_numbers<[1], [0], [0], [1], [0, 0, 1, 1], [], []>} : vector<8x8xbf16>, vector<8x8xbf16>, vector<8x8xf32> -> vector<8x8xf32>
    %421 = arith.truncf %420 : vector<8x8xf32> to vector<8x8xbf16>
    %c3_154 = arith.constant 3 : index
    %c0_155 = arith.constant 0 : index
    %c0_156 = arith.constant 0 : index
    %422 = vector.load %arg11[%c3_154, %c0_155, %c0_156] : memref<4x8x32xbf16, #tpu.memory_space<vmem>>, vector<1x8x32xbf16>
    %423 = vector.shape_cast %422 : vector<1x8x32xbf16> to vector<8x32xbf16>
    %cst_157 = arith.constant dense<0.000000e+00> : vector<8x32xf32>
    %424 = tpu.matmul %421, %423, %cst_157 {dimension_numbers = #tpu.dot_dimension_numbers<[1], [0], [0], [1], [0, 0, 1, 1], [], []>} : vector<8x8xbf16>, vector<8x32xbf16>, vector<8x32xf32> -> vector<8x32xf32>
    %425 = arith.addf %395, %424 : vector<8x32xf32>
    %c1_158 = arith.constant 1 : index
    %c0_159 = arith.constant 0 : index
    %c0_160 = arith.constant 0 : index
    %426 = vector.load %arg3[%c1_158, %c0_159, %c0_160] : memref<2x8x8xbf16, #tpu.memory_space<vmem>>, vector<1x8x8xbf16>
    %427 = vector.shape_cast %426 : vector<1x8x8xbf16> to vector<8x8xbf16>
    %428 = arith.extf %427 : vector<8x8xbf16> to vector<8x8xf32>
    %429 = vector.extract_strided_slice %293 {offsets = [8, 0], sizes = [8, 32], strides = [1, 1]} : vector<16x32xf32> to vector<8x32xf32>
    %430 = vector.extract_strided_slice %299 {offsets = [8, 0], sizes = [8, 32], strides = [1, 1]} : vector<16x32xf32> to vector<8x32xf32>
    %431 = vector.extract_strided_slice %300 {offsets = [8, 0], sizes = [8, 32], strides = [1, 1]} : vector<16x32xf32> to vector<8x32xf32>
    %432 = vector.extract_strided_slice %429 {offsets = [0, 0], sizes = [8, 8], strides = [1, 1]} : vector<8x32xf32> to vector<8x8xf32>
    %433 = arith.truncf %432 : vector<8x8xf32> to vector<8x8xbf16>
    %434 = vector.extract_strided_slice %430 {offsets = [0, 0], sizes = [8, 8], strides = [1, 1]} : vector<8x32xf32> to vector<8x8xf32>
    %435 = arith.truncf %434 : vector<8x8xf32> to vector<8x8xbf16>
    %cst_161 = arith.constant dense<0.000000e+00> : vector<8x8xf32>
    %436 = tpu.matmul %433, %435, %cst_161 {dimension_numbers = #tpu.dot_dimension_numbers<[1], [1], [0], [0], [0, 0, 1, 0], [], []>} : vector<8x8xbf16>, vector<8x8xbf16>, vector<8x8xf32> -> vector<8x8xf32>
    %cst_162 = arith.constant 0.353553385 : f32
    %437 = vector.broadcast %cst_162 : f32 to vector<8x8xf32>
    %438 = arith.mulf %436, %437 : vector<8x8xf32>
    %cst_163 = arith.constant 0.000000e+00 : f32
    %439 = vector.broadcast %cst_163 : f32 to vector<8x8xf32>
    %440 = arith.cmpf oeq, %428, %439 : vector<8x8xf32>
    %cst_164 = arith.constant -1.000000e+09 : f32
    %441 = vector.broadcast %cst_164 : f32 to vector<8x8xf32>
    %442 = arith.select %440, %441, %438 : vector<8x8xi1>, vector<8x8xf32>
    %cst_165 = arith.constant dense<0xFF800000> : vector<8xf32>
    %443 = vector.multi_reduction <maximumf>, %442, %cst_165 [1] : vector<8x8xf32> to vector<8xf32>
    %444 = vector.shape_cast %443 : vector<8xf32> to vector<8x1xf32>
    %445 = vector.broadcast %444 : vector<8x1xf32> to vector<8x8xf32>
    %446 = arith.subf %442, %445 : vector<8x8xf32>
    %447 = math.exp %446 : vector<8x8xf32>
    %cst_166 = arith.constant dense<0.000000e+00> : vector<8xf32>
    %448 = vector.multi_reduction <add>, %447, %cst_166 [1] : vector<8x8xf32> to vector<8xf32>
    %449 = vector.shape_cast %448 : vector<8xf32> to vector<8x1xf32>
    %450 = tpu.reciprocal %449 {approx = true} : vector<8x1xf32> -> vector<8x1xf32>
    %451 = vector.broadcast %450 : vector<8x1xf32> to vector<8x8xf32>
    %452 = arith.mulf %447, %451 : vector<8x8xf32>
    %453 = arith.truncf %452 : vector<8x8xf32> to vector<8x8xbf16>
    %454 = vector.extract_strided_slice %431 {offsets = [0, 0], sizes = [8, 8], strides = [1, 1]} : vector<8x32xf32> to vector<8x8xf32>
    %455 = arith.truncf %454 : vector<8x8xf32> to vector<8x8xbf16>
    %cst_167 = arith.constant dense<0.000000e+00> : vector<8x8xf32>
    %456 = tpu.matmul %453, %455, %cst_167 {dimension_numbers = #tpu.dot_dimension_numbers<[1], [0], [0], [1], [0, 0, 1, 1], [], []>} : vector<8x8xbf16>, vector<8x8xbf16>, vector<8x8xf32> -> vector<8x8xf32>
    %457 = arith.truncf %456 : vector<8x8xf32> to vector<8x8xbf16>
    %c0_168 = arith.constant 0 : index
    %c0_169 = arith.constant 0 : index
    %c0_170 = arith.constant 0 : index
    %458 = vector.load %arg11[%c0_168, %c0_169, %c0_170] : memref<4x8x32xbf16, #tpu.memory_space<vmem>>, vector<1x8x32xbf16>
    %459 = vector.shape_cast %458 : vector<1x8x32xbf16> to vector<8x32xbf16>
    %cst_171 = arith.constant dense<0.000000e+00> : vector<8x32xf32>
    %460 = tpu.matmul %457, %459, %cst_171 {dimension_numbers = #tpu.dot_dimension_numbers<[1], [0], [0], [1], [0, 0, 1, 1], [], []>} : vector<8x8xbf16>, vector<8x32xbf16>, vector<8x32xf32> -> vector<8x32xf32>
    %461 = vector.extract_strided_slice %429 {offsets = [0, 8], sizes = [8, 8], strides = [1, 1]} : vector<8x32xf32> to vector<8x8xf32>
    %462 = arith.truncf %461 : vector<8x8xf32> to vector<8x8xbf16>
    %463 = vector.extract_strided_slice %430 {offsets = [0, 8], sizes = [8, 8], strides = [1, 1]} : vector<8x32xf32> to vector<8x8xf32>
    %464 = arith.truncf %463 : vector<8x8xf32> to vector<8x8xbf16>
    %cst_172 = arith.constant dense<0.000000e+00> : vector<8x8xf32>
    %465 = tpu.matmul %462, %464, %cst_172 {dimension_numbers = #tpu.dot_dimension_numbers<[1], [1], [0], [0], [0, 0, 1, 0], [], []>} : vector<8x8xbf16>, vector<8x8xbf16>, vector<8x8xf32> -> vector<8x8xf32>
    %cst_173 = arith.constant 0.353553385 : f32
    %466 = vector.broadcast %cst_173 : f32 to vector<8x8xf32>
    %467 = arith.mulf %465, %466 : vector<8x8xf32>
    %cst_174 = arith.constant 0.000000e+00 : f32
    %468 = vector.broadcast %cst_174 : f32 to vector<8x8xf32>
    %469 = arith.cmpf oeq, %428, %468 : vector<8x8xf32>
    %cst_175 = arith.constant -1.000000e+09 : f32
    %470 = vector.broadcast %cst_175 : f32 to vector<8x8xf32>
    %471 = arith.select %469, %470, %467 : vector<8x8xi1>, vector<8x8xf32>
    %cst_176 = arith.constant dense<0xFF800000> : vector<8xf32>
    %472 = vector.multi_reduction <maximumf>, %471, %cst_176 [1] : vector<8x8xf32> to vector<8xf32>
    %473 = vector.shape_cast %472 : vector<8xf32> to vector<8x1xf32>
    %474 = vector.broadcast %473 : vector<8x1xf32> to vector<8x8xf32>
    %475 = arith.subf %471, %474 : vector<8x8xf32>
    %476 = math.exp %475 : vector<8x8xf32>
    %cst_177 = arith.constant dense<0.000000e+00> : vector<8xf32>
    %477 = vector.multi_reduction <add>, %476, %cst_177 [1] : vector<8x8xf32> to vector<8xf32>
    %478 = vector.shape_cast %477 : vector<8xf32> to vector<8x1xf32>
    %479 = tpu.reciprocal %478 {approx = true} : vector<8x1xf32> -> vector<8x1xf32>
    %480 = vector.broadcast %479 : vector<8x1xf32> to vector<8x8xf32>
    %481 = arith.mulf %476, %480 : vector<8x8xf32>
    %482 = arith.truncf %481 : vector<8x8xf32> to vector<8x8xbf16>
    %483 = vector.extract_strided_slice %431 {offsets = [0, 8], sizes = [8, 8], strides = [1, 1]} : vector<8x32xf32> to vector<8x8xf32>
    %484 = arith.truncf %483 : vector<8x8xf32> to vector<8x8xbf16>
    %cst_178 = arith.constant dense<0.000000e+00> : vector<8x8xf32>
    %485 = tpu.matmul %482, %484, %cst_178 {dimension_numbers = #tpu.dot_dimension_numbers<[1], [0], [0], [1], [0, 0, 1, 1], [], []>} : vector<8x8xbf16>, vector<8x8xbf16>, vector<8x8xf32> -> vector<8x8xf32>
    %486 = arith.truncf %485 : vector<8x8xf32> to vector<8x8xbf16>
    %c1_179 = arith.constant 1 : index
    %c0_180 = arith.constant 0 : index
    %c0_181 = arith.constant 0 : index
    %487 = vector.load %arg11[%c1_179, %c0_180, %c0_181] : memref<4x8x32xbf16, #tpu.memory_space<vmem>>, vector<1x8x32xbf16>
    %488 = vector.shape_cast %487 : vector<1x8x32xbf16> to vector<8x32xbf16>
    %cst_182 = arith.constant dense<0.000000e+00> : vector<8x32xf32>
    %489 = tpu.matmul %486, %488, %cst_182 {dimension_numbers = #tpu.dot_dimension_numbers<[1], [0], [0], [1], [0, 0, 1, 1], [], []>} : vector<8x8xbf16>, vector<8x32xbf16>, vector<8x32xf32> -> vector<8x32xf32>
    %490 = arith.addf %460, %489 : vector<8x32xf32>
    %491 = vector.extract_strided_slice %429 {offsets = [0, 16], sizes = [8, 8], strides = [1, 1]} : vector<8x32xf32> to vector<8x8xf32>
    %492 = arith.truncf %491 : vector<8x8xf32> to vector<8x8xbf16>
    %493 = vector.extract_strided_slice %430 {offsets = [0, 16], sizes = [8, 8], strides = [1, 1]} : vector<8x32xf32> to vector<8x8xf32>
    %494 = arith.truncf %493 : vector<8x8xf32> to vector<8x8xbf16>
    %cst_183 = arith.constant dense<0.000000e+00> : vector<8x8xf32>
    %495 = tpu.matmul %492, %494, %cst_183 {dimension_numbers = #tpu.dot_dimension_numbers<[1], [1], [0], [0], [0, 0, 1, 0], [], []>} : vector<8x8xbf16>, vector<8x8xbf16>, vector<8x8xf32> -> vector<8x8xf32>
    %cst_184 = arith.constant 0.353553385 : f32
    %496 = vector.broadcast %cst_184 : f32 to vector<8x8xf32>
    %497 = arith.mulf %495, %496 : vector<8x8xf32>
    %cst_185 = arith.constant 0.000000e+00 : f32
    %498 = vector.broadcast %cst_185 : f32 to vector<8x8xf32>
    %499 = arith.cmpf oeq, %428, %498 : vector<8x8xf32>
    %cst_186 = arith.constant -1.000000e+09 : f32
    %500 = vector.broadcast %cst_186 : f32 to vector<8x8xf32>
    %501 = arith.select %499, %500, %497 : vector<8x8xi1>, vector<8x8xf32>
    %cst_187 = arith.constant dense<0xFF800000> : vector<8xf32>
    %502 = vector.multi_reduction <maximumf>, %501, %cst_187 [1] : vector<8x8xf32> to vector<8xf32>
    %503 = vector.shape_cast %502 : vector<8xf32> to vector<8x1xf32>
    %504 = vector.broadcast %503 : vector<8x1xf32> to vector<8x8xf32>
    %505 = arith.subf %501, %504 : vector<8x8xf32>
    %506 = math.exp %505 : vector<8x8xf32>
    %cst_188 = arith.constant dense<0.000000e+00> : vector<8xf32>
    %507 = vector.multi_reduction <add>, %506, %cst_188 [1] : vector<8x8xf32> to vector<8xf32>
    %508 = vector.shape_cast %507 : vector<8xf32> to vector<8x1xf32>
    %509 = tpu.reciprocal %508 {approx = true} : vector<8x1xf32> -> vector<8x1xf32>
    %510 = vector.broadcast %509 : vector<8x1xf32> to vector<8x8xf32>
    %511 = arith.mulf %506, %510 : vector<8x8xf32>
    %512 = arith.truncf %511 : vector<8x8xf32> to vector<8x8xbf16>
    %513 = vector.extract_strided_slice %431 {offsets = [0, 16], sizes = [8, 8], strides = [1, 1]} : vector<8x32xf32> to vector<8x8xf32>
    %514 = arith.truncf %513 : vector<8x8xf32> to vector<8x8xbf16>
    %cst_189 = arith.constant dense<0.000000e+00> : vector<8x8xf32>
    %515 = tpu.matmul %512, %514, %cst_189 {dimension_numbers = #tpu.dot_dimension_numbers<[1], [0], [0], [1], [0, 0, 1, 1], [], []>} : vector<8x8xbf16>, vector<8x8xbf16>, vector<8x8xf32> -> vector<8x8xf32>
    %516 = arith.truncf %515 : vector<8x8xf32> to vector<8x8xbf16>
    %c2_190 = arith.constant 2 : index
    %c0_191 = arith.constant 0 : index
    %c0_192 = arith.constant 0 : index
    %517 = vector.load %arg11[%c2_190, %c0_191, %c0_192] : memref<4x8x32xbf16, #tpu.memory_space<vmem>>, vector<1x8x32xbf16>
    %518 = vector.shape_cast %517 : vector<1x8x32xbf16> to vector<8x32xbf16>
    %cst_193 = arith.constant dense<0.000000e+00> : vector<8x32xf32>
    %519 = tpu.matmul %516, %518, %cst_193 {dimension_numbers = #tpu.dot_dimension_numbers<[1], [0], [0], [1], [0, 0, 1, 1], [], []>} : vector<8x8xbf16>, vector<8x32xbf16>, vector<8x32xf32> -> vector<8x32xf32>
    %520 = arith.addf %490, %519 : vector<8x32xf32>
    %521 = vector.extract_strided_slice %429 {offsets = [0, 24], sizes = [8, 8], strides = [1, 1]} : vector<8x32xf32> to vector<8x8xf32>
    %522 = arith.truncf %521 : vector<8x8xf32> to vector<8x8xbf16>
    %523 = vector.extract_strided_slice %430 {offsets = [0, 24], sizes = [8, 8], strides = [1, 1]} : vector<8x32xf32> to vector<8x8xf32>
    %524 = arith.truncf %523 : vector<8x8xf32> to vector<8x8xbf16>
    %cst_194 = arith.constant dense<0.000000e+00> : vector<8x8xf32>
    %525 = tpu.matmul %522, %524, %cst_194 {dimension_numbers = #tpu.dot_dimension_numbers<[1], [1], [0], [0], [0, 0, 1, 0], [], []>} : vector<8x8xbf16>, vector<8x8xbf16>, vector<8x8xf32> -> vector<8x8xf32>
    %cst_195 = arith.constant 0.353553385 : f32
    %526 = vector.broadcast %cst_195 : f32 to vector<8x8xf32>
    %527 = arith.mulf %525, %526 : vector<8x8xf32>
    %cst_196 = arith.constant 0.000000e+00 : f32
    %528 = vector.broadcast %cst_196 : f32 to vector<8x8xf32>
    %529 = arith.cmpf oeq, %428, %528 : vector<8x8xf32>
    %cst_197 = arith.constant -1.000000e+09 : f32
    %530 = vector.broadcast %cst_197 : f32 to vector<8x8xf32>
    %531 = arith.select %529, %530, %527 : vector<8x8xi1>, vector<8x8xf32>
    %cst_198 = arith.constant dense<0xFF800000> : vector<8xf32>
    %532 = vector.multi_reduction <maximumf>, %531, %cst_198 [1] : vector<8x8xf32> to vector<8xf32>
    %533 = vector.shape_cast %532 : vector<8xf32> to vector<8x1xf32>
    %534 = vector.broadcast %533 : vector<8x1xf32> to vector<8x8xf32>
    %535 = arith.subf %531, %534 : vector<8x8xf32>
    %536 = math.exp %535 : vector<8x8xf32>
    %cst_199 = arith.constant dense<0.000000e+00> : vector<8xf32>
    %537 = vector.multi_reduction <add>, %536, %cst_199 [1] : vector<8x8xf32> to vector<8xf32>
    %538 = vector.shape_cast %537 : vector<8xf32> to vector<8x1xf32>
    %539 = tpu.reciprocal %538 {approx = true} : vector<8x1xf32> -> vector<8x1xf32>
    %540 = vector.broadcast %539 : vector<8x1xf32> to vector<8x8xf32>
    %541 = arith.mulf %536, %540 : vector<8x8xf32>
    %542 = arith.truncf %541 : vector<8x8xf32> to vector<8x8xbf16>
    %543 = vector.extract_strided_slice %431 {offsets = [0, 24], sizes = [8, 8], strides = [1, 1]} : vector<8x32xf32> to vector<8x8xf32>
    %544 = arith.truncf %543 : vector<8x8xf32> to vector<8x8xbf16>
    %cst_200 = arith.constant dense<0.000000e+00> : vector<8x8xf32>
    %545 = tpu.matmul %542, %544, %cst_200 {dimension_numbers = #tpu.dot_dimension_numbers<[1], [0], [0], [1], [0, 0, 1, 1], [], []>} : vector<8x8xbf16>, vector<8x8xbf16>, vector<8x8xf32> -> vector<8x8xf32>
    %546 = arith.truncf %545 : vector<8x8xf32> to vector<8x8xbf16>
    %c3_201 = arith.constant 3 : index
    %c0_202 = arith.constant 0 : index
    %c0_203 = arith.constant 0 : index
    %547 = vector.load %arg11[%c3_201, %c0_202, %c0_203] : memref<4x8x32xbf16, #tpu.memory_space<vmem>>, vector<1x8x32xbf16>
    %548 = vector.shape_cast %547 : vector<1x8x32xbf16> to vector<8x32xbf16>
    %cst_204 = arith.constant dense<0.000000e+00> : vector<8x32xf32>
    %549 = tpu.matmul %546, %548, %cst_204 {dimension_numbers = #tpu.dot_dimension_numbers<[1], [0], [0], [1], [0, 0, 1, 1], [], []>} : vector<8x8xbf16>, vector<8x32xbf16>, vector<8x32xf32> -> vector<8x32xf32>
    %550 = arith.addf %520, %549 : vector<8x32xf32>
    %551 = tpu.concatenate %425, %550 in 0 : vector<8x32xf32>, vector<8x32xf32> -> vector<16x32xf32>
    %552 = arith.addf %265, %551 : vector<16x32xf32>
    %553 = vector.broadcast %5 : vector<1x32xf32> to vector<16x32xf32>
    %554 = arith.addf %552, %553 : vector<16x32xf32>
    %cst_205 = arith.constant dense<0.000000e+00> : vector<16xf32>
    %555 = vector.multi_reduction <add>, %554, %cst_205 [1] : vector<16x32xf32> to vector<16xf32>
    %556 = vector.shape_cast %555 : vector<16xf32> to vector<16x1xf32>
    %cst_206 = arith.constant 3.200000e+01 : f32
    %557 = vector.broadcast %cst_206 : f32 to vector<16x1xf32>
    %558 = arith.divf %556, %557 : vector<16x1xf32>
    %559 = vector.broadcast %558 : vector<16x1xf32> to vector<16x32xf32>
    %560 = arith.subf %554, %559 : vector<16x32xf32>
    %561 = arith.mulf %560, %560 : vector<16x32xf32>
    %cst_207 = arith.constant dense<0.000000e+00> : vector<16xf32>
    %562 = vector.multi_reduction <add>, %561, %cst_207 [1] : vector<16x32xf32> to vector<16xf32>
    %563 = vector.shape_cast %562 : vector<16xf32> to vector<16x1xf32>
    %cst_208 = arith.constant 0.0322580636 : f32
    %564 = vector.broadcast %cst_208 : f32 to vector<16x1xf32>
    %565 = arith.mulf %563, %564 : vector<16x1xf32>
    %566 = math.sqrt %565 : vector<16x1xf32>
    %cst_209 = arith.constant 9.99999997E-7 : f32
    %567 = vector.broadcast %cst_209 : f32 to vector<16x1xf32>
    %568 = arith.addf %566, %567 : vector<16x1xf32>
    %569 = tpu.reciprocal %568 {approx = true} : vector<16x1xf32> -> vector<16x1xf32>
    %570 = vector.broadcast %558 : vector<16x1xf32> to vector<16x32xf32>
    %571 = arith.subf %554, %570 : vector<16x32xf32>
    %572 = vector.broadcast %9 : vector<1x32xf32> to vector<16x32xf32>
    %573 = arith.mulf %572, %571 : vector<16x32xf32>
    %574 = vector.broadcast %569 : vector<16x1xf32> to vector<16x32xf32>
    %575 = arith.mulf %573, %574 : vector<16x32xf32>
    %576 = vector.broadcast %10 : vector<1x32xf32> to vector<16x32xf32>
    %577 = arith.addf %575, %576 : vector<16x32xf32>
    %c0_210 = arith.constant 0 : index
    %c0_211 = arith.constant 0 : index
    %578 = vector.load %arg12[%c0_210, %c0_211] : memref<32x128xbf16, #tpu.memory_space<vmem>>, vector<32x128xbf16>
    %579 = arith.truncf %577 : vector<16x32xf32> to vector<16x32xbf16>
    %cst_212 = arith.constant dense<0.000000e+00> : vector<16x128xf32>
    %580 = tpu.matmul %579, %578, %cst_212 {dimension_numbers = #tpu.dot_dimension_numbers<[1], [0], [0], [1], [0, 0, 1, 1], [], []>} : vector<16x32xbf16>, vector<32x128xbf16>, vector<16x128xf32> -> vector<16x128xf32>
    %581 = vector.broadcast %2 : vector<1x128xf32> to vector<16x128xf32>
    %582 = arith.addf %580, %581 : vector<16x128xf32>
    %cst_213 = arith.constant 5.000000e-01 : f32
    %583 = vector.broadcast %cst_213 : f32 to vector<16x128xf32>
    %584 = arith.mulf %583, %582 : vector<16x128xf32>
    %cst_214 = arith.constant 4.471500e-02 : f32
    %585 = vector.broadcast %cst_214 : f32 to vector<16x128xf32>
    %586 = arith.mulf %585, %582 : vector<16x128xf32>
    %587 = arith.mulf %586, %582 : vector<16x128xf32>
    %588 = arith.mulf %587, %582 : vector<16x128xf32>
    %589 = arith.addf %582, %588 : vector<16x128xf32>
    %cst_215 = arith.constant 0.797884583 : f32
    %590 = vector.broadcast %cst_215 : f32 to vector<16x128xf32>
    %591 = arith.mulf %590, %589 : vector<16x128xf32>
    %592 = math.tanh %591 : vector<16x128xf32>
    %cst_216 = arith.constant 1.000000e+00 : f32
    %593 = vector.broadcast %cst_216 : f32 to vector<16x128xf32>
    %594 = arith.addf %593, %592 : vector<16x128xf32>
    %595 = arith.mulf %584, %594 : vector<16x128xf32>
    %c0_217 = arith.constant 0 : index
    %c0_218 = arith.constant 0 : index
    %596 = vector.load %arg13[%c0_217, %c0_218] : memref<128x32xbf16, #tpu.memory_space<vmem>>, vector<128x32xbf16>
    %597 = arith.truncf %595 : vector<16x128xf32> to vector<16x128xbf16>
    %cst_219 = arith.constant dense<0.000000e+00> : vector<16x32xf32>
    %598 = tpu.matmul %597, %596, %cst_219 {dimension_numbers = #tpu.dot_dimension_numbers<[1], [0], [0], [1], [0, 0, 1, 1], [], []>} : vector<16x128xbf16>, vector<128x32xbf16>, vector<16x32xf32> -> vector<16x32xf32>
    %599 = arith.addf %554, %598 : vector<16x32xf32>
    %600 = vector.broadcast %6 : vector<1x32xf32> to vector<16x32xf32>
    %601 = arith.addf %599, %600 : vector<16x32xf32>
    %c0_220 = arith.constant 0 : index
    %c0_221 = arith.constant 0 : index
    %602 = vector.load %arg15[%c0_220, %c0_221] : memref<16x32xf32, #tpu.memory_space<vmem>>, vector<16x32xf32>
    tpu.vector_store %arg15[%c0_220, %c0_221], %601 {strides = array<i32>} : memref<16x32xf32, #tpu.memory_space<vmem>>, vector<16x32xf32>,
    return
  }
  func.func @transform_0(%arg0: i32) -> (i32, i32) {
    %c0_i32 = arith.constant 0 : i32
    %c0_i32_0 = arith.constant 0 : i32
    return %arg0, %c0_i32 : i32, i32
  }
  func.func @transform_1(%arg0: i32) -> (i32, i32) {
    %c0_i32 = arith.constant 0 : i32
    %c0_i32_0 = arith.constant 0 : i32
    return %arg0, %c0_i32 : i32, i32
  }
  func.func @transform_2(%arg0: i32) -> (i32, i32, i32) {
    %c0_i32 = arith.constant 0 : i32
    %c0_i32_0 = arith.constant 0 : i32
    %c0_i32_1 = arith.constant 0 : i32
    return %arg0, %c0_i32, %c0_i32_0 : i32, i32, i32
  }
  func.func @transform_3(%arg0: i32) -> (i32, i32) {
    %c0_i32 = arith.constant 0 : i32
    %c0_i32_0 = arith.constant 0 : i32
    return %arg0, %c0_i32 : i32, i32
  }
  func.func @transform_4(%arg0: i32) -> (i32, i32) {
    %c0_i32 = arith.constant 0 : i32
    %c0_i32_0 = arith.constant 0 : i32
    return %arg0, %c0_i32 : i32, i32
  }
  func.func @transform_5(%arg0: i32) -> (i32, i32) {
    %c0_i32 = arith.constant 0 : i32
    %c0_i32_0 = arith.constant 0 : i32
    return %arg0, %c0_i32 : i32, i32
  }
  func.func @transform_6(%arg0: i32) -> (i32, i32) {
    %c0_i32 = arith.constant 0 : i32
    %c0_i32_0 = arith.constant 0 : i32
    %c0_i32_1 = arith.constant 0 : i32
    return %c0_i32, %c0_i32_0 : i32, i32
  }
  func.func @transform_7(%arg0: i32) -> (i32, i32, i32) {
    %c0_i32 = arith.constant 0 : i32
    %c0_i32_0 = arith.constant 0 : i32
    %c0_i32_1 = arith.constant 0 : i32
    %c0_i32_2 = arith.constant 0 : i32
    return %c0_i32, %c0_i32_0, %c0_i32_1 : i32, i32, i32
  }
  func.func @transform_8(%arg0: i32) -> (i32, i32) {
    %c0_i32 = arith.constant 0 : i32
    %c0_i32_0 = arith.constant 0 : i32
    %c0_i32_1 = arith.constant 0 : i32
    return %c0_i32, %c0_i32_0 : i32, i32
  }
  func.func @transform_9(%arg0: i32) -> (i32, i32) {
    %c0_i32 = arith.constant 0 : i32
    %c0_i32_0 = arith.constant 0 : i32
    %c0_i32_1 = arith.constant 0 : i32
    return %c0_i32, %c0_i32_0 : i32, i32
  }
  func.func @transform_10(%arg0: i32) -> (i32, i32, i32) {
    %c0_i32 = arith.constant 0 : i32
    %c0_i32_0 = arith.constant 0 : i32
    %c0_i32_1 = arith.constant 0 : i32
    %c0_i32_2 = arith.constant 0 : i32
    return %c0_i32, %c0_i32_0, %c0_i32_1 : i32, i32, i32
  }
  func.func @transform_11(%arg0: i32) -> (i32, i32) {
    %c0_i32 = arith.constant 0 : i32
    %c0_i32_0 = arith.constant 0 : i32
    %c0_i32_1 = arith.constant 0 : i32
    return %c0_i32, %c0_i32_0 : i32, i32
  }
  func.func @transform_12(%arg0: i32) -> (i32, i32) {
    %c0_i32 = arith.constant 0 : i32
    %c0_i32_0 = arith.constant 0 : i32
    %c0_i32_1 = arith.constant 0 : i32
    return %c0_i32, %c0_i32_0 : i32, i32
  }
  func.func @transform_13(%arg0: i32) -> (i32, i32) {
    %c0_i32 = arith.constant 0 : i32
    %c0_i32_0 = arith.constant 0 : i32
    %c0_i32_1 = arith.constant 0 : i32
    return %c0_i32, %c0_i32_0 : i32, i32
  }
  func.func @transform_14(%arg0: i32) -> (i32, i32) {
    %c0_i32 = arith.constant 0 : i32
    %c0_i32_0 = arith.constant 0 : i32
    return %arg0, %c0_i32 : i32, i32
  }
}

</mosaic_0001>

<llo_original>
// kernel: fast_transformer_block.1
$region0: #{fast_transformer_block.1}
  #allocation0 [shape = 'u32[]', space=smem, size = 0x4, offset = 0x4, fixed_abs, tag = 'smem constant byte address 0x4 - core index']
  #allocation1 [shape = 'u32[144,128]{1,0:T(1,128)}', space=vmem, size = 0x12000, scoped, tag = 'internal scratch']
  %s0 = inlined_call_operand.vmem [shape: f32[32,32], index: 0, kind: input, shape index: {}]
  %s1 = inlined_call_operand.vmem [shape: f32[32,32], index: 1, kind: input, shape index: {}]
  %s2 = inlined_call_operand.vmem [shape: bf16[4,8,8], index: 2, kind: input, shape index: {}]
  %s3 = inlined_call_operand.vmem [shape: f32[32,32], index: 3, kind: input, shape index: {}]
  %s4 = inlined_call_operand.vmem [shape: f32[32,32], index: 4, kind: input, shape index: {}]
  %s5 = inlined_call_operand.vmem [shape: f32[32,32], index: 5, kind: input, shape index: {}]
  %s6 = inlined_call_operand.vmem [shape: bf16[32,96], index: 6, kind: input, shape index: {}]
  %s7 = inlined_call_operand.vmem [shape: bf16[4,8,32], index: 7, kind: input, shape index: {}]
  %s8 = inlined_call_operand.vmem [shape: bf16[32,32], index: 8, kind: input, shape index: {}]
  %s9 = inlined_call_operand.vmem [shape: bf16[32,64], index: 9, kind: input, shape index: {}]
  %s10 = inlined_call_operand.vmem [shape: bf16[4,8,32], index: 10, kind: input, shape index: {}]
  %s11 = inlined_call_operand.vmem [shape: bf16[32,128], index: 11, kind: input, shape index: {}]
  %s12 = inlined_call_operand.vmem [shape: bf16[128,32], index: 12, kind: input, shape index: {}]
  %s13 = inlined_call_operand.vmem [shape: f32[11,128], index: 13, kind: input, shape index: {}]
  %s14 = inlined_call_operand.hbm [shape: f32[32,32], index: 14, kind: output, shape index: {}]
  %s15 = sld [smem:[#allocation0]]
  $region89: #{fast_transformer_block.1} parent=0
    _
  %s17 = ssub.s32 1, %s15
  %s18 = scalar_select 0, %s17, %s15
  $region1: #{fast_transformer_block.1} parent=0
    #allocation2 [shape = 'u8[16384]{0}', space=vmem, size = 0x4000, scoped, tag = 'output window, operand 0']
    #allocation3 [shape = 's32[2]{0}', space=sflag, size = 0x8, scoped, tag = 'scoped memory for fast_transformer_block.1']
    %19 = vsyncpa [#allocation3], 0
    %s20 = scalar_lea.sflag [#allocation3], 1
    %21 = vsyncpa %s20, 0
    loop: start=0, step=1, limit=4
    $region2: #{fast_transformer_block.1} parent=1 // loop_pre_header
      _
    $region3: #{fast_transformer_block.1} parent=1 // loop_header
      %s23 = sphi 0, %s27
      %p24 = scmp.ge.s32.totalorder %s23, 4
      %s33 = sphi 0, %s35
      %s36 = sphi 0, %s33
      %s37 = sphi 0, %s36
      %s53 = sphi 0, %s37
      %s59 = sphi 0, %s61
      %s62 = sphi 0, %s59
      %s63 = sphi 0, %s62
      %s79 = sphi 0, %s63
      %s85 = sphi 0, %s87
      %s88 = sphi 0, %s85
      %s89 = sphi 0, %s88
      %s105 = sphi 0, %s89
      %s111 = sphi 0, %s113
      %s114 = sphi 0, %s111
      %s115 = sphi 0, %s114
      %s131 = sphi 0, %s115
      %s137 = sphi 0, %s139
      %s140 = sphi 0, %s137
      %s141 = sphi 0, %s140
      %s157 = sphi 0, %s141
      %s163 = sphi 0, %s165
      %s166 = sphi 0, %s163
      %s167 = sphi 0, %s166
      %s183 = sphi 0, %s167
      %s187 = sphi 0, %s187
      %s189 = sphi 0, %s187
      %s190 = sphi 0, %s189
      %s204 = sphi 0, %s190
      %s208 = sphi 0, %s208
      %s210 = sphi 0, %s208
      %s211 = sphi 0, %s210
      %s225 = sphi 0, %s211
      %s229 = sphi 0, %s229
      %s231 = sphi 0, %s229
      %s232 = sphi 0, %s231
      %s246 = sphi 0, %s232
      %s250 = sphi 0, %s250
      %s252 = sphi 0, %s250
      %s253 = sphi 0, %s252
      %s267 = sphi 0, %s253
      %s271 = sphi 0, %s271
      %s273 = sphi 0, %s271
      %s274 = sphi 0, %s273
      %s288 = sphi 0, %s274
      %s292 = sphi 0, %s292
      %s294 = sphi 0, %s292
      %s295 = sphi 0, %s294
      %s309 = sphi 0, %s295
      %s313 = sphi 0, %s313
      %s315 = sphi 0, %s313
      %s316 = sphi 0, %s315
      %s330 = sphi 0, %s316
      %s334 = sphi 0, %s334
      %s336 = sphi 0, %s334
      %s337 = sphi 0, %s336
      %s351 = sphi 0, %s337
      %s357 = sphi 0, %s359
      %s360 = sphi 0, %s357
      %s361 = sphi 0, %s360
      %s377 = sphi 0, %s361
    $region4: #{fast_transformer_block.1} parent=1 // loop_header_branch
      %26 = sbr.rel (%p24) target = $region8
    $region5: #{fast_transformer_block.1} parent=1 // loop_body
      %s28 = ssub.s32 %s23, 1
      %s29 = ssub.s32 %s23, 2
      %s30 = sadd.s32 %s23, 1
      %s31 = ssub.s32 %s23, %s30
      %p32 = scmp.eq.s32.totalorder %s31, 0
      %s34 = sadd.s32 %s33, 1
      %s35 = scalar_select %p32, %s33, %s34
      %p38 = pneg %p32
      %p39 = scmp.eq.s32.totalorder %s23, 1
      %p40 = por %p38, %p39
      %p41 = scmp.ne.s32.totalorder %s33, %s36
      %p42 = scmp.eq.s32.totalorder %s23, 0
      %p43 = por %p41, %p42
      %p44 = scmp.ne.s32.totalorder %s33, %s36
      %p45 = scmp.eq.s32.totalorder %s28, 1
      %p46 = por %p44, %p45
      %p47 = scmp.ne.s32.totalorder %s36, %s37
      %p48 = scmp.eq.s32.totalorder %s28, 0
      %p49 = por %p47, %p48
      %p50 = scmp.ne.s32.totalorder %s36, %s37
      %p51 = scmp.eq.s32.totalorder %s29, 1
      %p52 = por %p50, %p51
      %p54 = scmp.ne.s32.totalorder %s37, %s53
      %p55 = scmp.eq.s32.totalorder %s29, 0
      %p56 = por %p54, %p55
      %s57 = ssub.s32 %s23, %s30
      %p58 = scmp.eq.s32.totalorder %s57, 0
      %s60 = sadd.s32 %s59, 1
      %s61 = scalar_select %p58, %s59, %s60
      %p64 = pneg %p58
      %p65 = scmp.eq.s32.totalorder %s23, 1
      %p66 = por %p64, %p65
      %p67 = scmp.ne.s32.totalorder %s59, %s62
      %p68 = scmp.eq.s32.totalorder %s23, 0
      %p69 = por %p67, %p68
      %p70 = scmp.ne.s32.totalorder %s59, %s62
      %p71 = scmp.eq.s32.totalorder %s28, 1
      %p72 = por %p70, %p71
      %p73 = scmp.ne.s32.totalorder %s62, %s63
      %p74 = scmp.eq.s32.totalorder %s28, 0
      %p75 = por %p73, %p74
      %p76 = scmp.ne.s32.totalorder %s62, %s63
      %p77 = scmp.eq.s32.totalorder %s29, 1
      %p78 = por %p76, %p77
      %p80 = scmp.ne.s32.totalorder %s63, %s79
      %p81 = scmp.eq.s32.totalorder %s29, 0
      %p82 = por %p80, %p81
      %s83 = ssub.s32 %s23, %s30
      %p84 = scmp.eq.s32.totalorder %s83, 0
      %s86 = sadd.s32 %s85, 1
      %s87 = scalar_select %p84, %s85, %s86
      %p90 = pneg %p84
      %p91 = scmp.eq.s32.totalorder %s23, 1
      %p92 = por %p90, %p91
      %p93 = scmp.ne.s32.totalorder %s85, %s88
      %p94 = scmp.eq.s32.totalorder %s23, 0
      %p95 = por %p93, %p94
      %p96 = scmp.ne.s32.totalorder %s85, %s88
      %p97 = scmp.eq.s32.totalorder %s28, 1
      %p98 = por %p96, %p97
      %p99 = scmp.ne.s32.totalorder %s88, %s89
      %p100 = scmp.eq.s32.totalorder %s28, 0
      %p101 = por %p99, %p100
      %p102 = scmp.ne.s32.totalorder %s88, %s89
      %p103 = scmp.eq.s32.totalorder %s29, 1
      %p104 = por %p102, %p103
      %p106 = scmp.ne.s32.totalorder %s89, %s105
      %p107 = scmp.eq.s32.totalorder %s29, 0
      %p108 = por %p106, %p107
      %s109 = ssub.s32 %s23, %s30
      %p110 = scmp.eq.s32.totalorder %s109, 0
      %s112 = sadd.s32 %s111, 1
      %s113 = scalar_select %p110, %s111, %s112
      %p116 = pneg %p110
      %p117 = scmp.eq.s32.totalorder %s23, 1
      %p118 = por %p116, %p117
      %p119 = scmp.ne.s32.totalorder %s111, %s114
      %p120 = scmp.eq.s32.totalorder %s23, 0
      %p121 = por %p119, %p120
      %p122 = scmp.ne.s32.totalorder %s111, %s114
      %p123 = scmp.eq.s32.totalorder %s28, 1
      %p124 = por %p122, %p123
      %p125 = scmp.ne.s32.totalorder %s114, %s115
      %p126 = scmp.eq.s32.totalorder %s28, 0
      %p127 = por %p125, %p126
      %p128 = scmp.ne.s32.totalorder %s114, %s115
      %p129 = scmp.eq.s32.totalorder %s29, 1
      %p130 = por %p128, %p129
      %p132 = scmp.ne.s32.totalorder %s115, %s131
      %p133 = scmp.eq.s32.totalorder %s29, 0
      %p134 = por %p132, %p133
      %s135 = ssub.s32 %s23, %s30
      %p136 = scmp.eq.s32.totalorder %s135, 0
      %s138 = sadd.s32 %s137, 1
      %s139 = scalar_select %p136, %s137, %s138
      %p142 = pneg %p136
      %p143 = scmp.eq.s32.totalorder %s23, 1
      %p144 = por %p142, %p143
      %p145 = scmp.ne.s32.totalorder %s137, %s140
      %p146 = scmp.eq.s32.totalorder %s23, 0
      %p147 = por %p145, %p146
      %p148 = scmp.ne.s32.totalorder %s137, %s140
      %p149 = scmp.eq.s32.totalorder %s28, 1
      %p150 = por %p148, %p149
      %p151 = scmp.ne.s32.totalorder %s140, %s141
      %p152 = scmp.eq.s32.totalorder %s28, 0
      %p153 = por %p151, %p152
      %p154 = scmp.ne.s32.totalorder %s140, %s141
      %p155 = scmp.eq.s32.totalorder %s29, 1
      %p156 = por %p154, %p155
      %p158 = scmp.ne.s32.totalorder %s141, %s157
      %p159 = scmp.eq.s32.totalorder %s29, 0
      %p160 = por %p158, %p159
      %s161 = ssub.s32 %s23, %s30
      %p162 = scmp.eq.s32.totalorder %s161, 0
      %s164 = sadd.s32 %s163, 1
      %s165 = scalar_select %p162, %s163, %s164
      %p168 = pneg %p162
      %p169 = scmp.eq.s32.totalorder %s23, 1
      %p170 = por %p168, %p169
      %p171 = scmp.ne.s32.totalorder %s163, %s166
      %p172 = scmp.eq.s32.totalorder %s23, 0
      %p173 = por %p171, %p172
      %p174 = scmp.ne.s32.totalorder %s163, %s166
      %p175 = scmp.eq.s32.totalorder %s28, 1
      %p176 = por %p174, %p175
      %p177 = scmp.ne.s32.totalorder %s166, %s167
      %p178 = scmp.eq.s32.totalorder %s28, 0
      %p179 = por %p177, %p178
      %p180 = scmp.ne.s32.totalorder %s166, %s167
      %p181 = scmp.eq.s32.totalorder %s29, 1
      %p182 = por %p180, %p181
      %p184 = scmp.ne.s32.totalorder %s167, %s183
      %p185 = scmp.eq.s32.totalorder %s29, 0
      %p186 = por %p184, %p185
      %s188 = sadd.s32 %s187, 1
      %p191 = scmp.eq.s32.totalorder %s23, 1
      %p192 = scmp.ne.s32.totalorder %s187, %s189
      %p193 = scmp.eq.s32.totalorder %s23, 0
      %p194 = por %p192, %p193
      %p195 = scmp.ne.s32.totalorder %s187, %s189
      %p196 = scmp.eq.s32.totalorder %s28, 1
      %p197 = por %p195, %p196
      %p198 = scmp.ne.s32.totalorder %s189, %s190
      %p199 = scmp.eq.s32.totalorder %s28, 0
      %p200 = por %p198, %p199
      %p201 = scmp.ne.s32.totalorder %s189, %s190
      %p202 = scmp.eq.s32.totalorder %s29, 1
      %p203 = por %p201, %p202
      %p205 = scmp.ne.s32.totalorder %s190, %s204
      %p206 = scmp.eq.s32.totalorder %s29, 0
      %p207 = por %p205, %p206
      %s209 = sadd.s32 %s208, 1
      %p212 = scmp.eq.s32.totalorder %s23, 1
      %p213 = scmp.ne.s32.totalorder %s208, %s210
      %p214 = scmp.eq.s32.totalorder %s23, 0
      %p215 = por %p213, %p214
      %p216 = scmp.ne.s32.totalorder %s208, %s210
      %p217 = scmp.eq.s32.totalorder %s28, 1
      %p218 = por %p216, %p217
      %p219 = scmp.ne.s32.totalorder %s210, %s211
      %p220 = scmp.eq.s32.totalorder %s28, 0
      %p221 = por %p219, %p220
      %p222 = scmp.ne.s32.totalorder %s210, %s211
      %p223 = scmp.eq.s32.totalorder %s29, 1
      %p224 = por %p222, %p223
      %p226 = scmp.ne.s32.totalorder %s211, %s225
      %p227 = scmp.eq.s32.totalorder %s29, 0
      %p228 = por %p226, %p227
      %s230 = sadd.s32 %s229, 1
      %p233 = scmp.eq.s32.totalorder %s23, 1
      %p234 = scmp.ne.s32.totalorder %s229, %s231
      %p235 = scmp.eq.s32.totalorder %s23, 0
      %p236 = por %p234, %p235
      %p237 = scmp.ne.s32.totalorder %s229, %s231
      %p238 = scmp.eq.s32.totalorder %s28, 1
      %p239 = por %p237, %p238
      %p240 = scmp.ne.s32.totalorder %s231, %s232
      %p241 = scmp.eq.s32.totalorder %s28, 0
      %p242 = por %p240, %p241
      %p243 = scmp.ne.s32.totalorder %s231, %s232
      %p244 = scmp.eq.s32.totalorder %s29, 1
      %p245 = por %p243, %p244
      %p247 = scmp.ne.s32.totalorder %s232, %s246
      %p248 = scmp.eq.s32.totalorder %s29, 0
      %p249 = por %p247, %p248
      %s251 = sadd.s32 %s250, 1
      %p254 = scmp.eq.s32.totalorder %s23, 1
      %p255 = scmp.ne.s32.totalorder %s250, %s252
      %p256 = scmp.eq.s32.totalorder %s23, 0
      %p257 = por %p255, %p256
      %p258 = scmp.ne.s32.totalorder %s250, %s252
      %p259 = scmp.eq.s32.totalorder %s28, 1
      %p260 = por %p258, %p259
      %p261 = scmp.ne.s32.totalorder %s252, %s253
      %p262 = scmp.eq.s32.totalorder %s28, 0
      %p263 = por %p261, %p262
      %p264 = scmp.ne.s32.totalorder %s252, %s253
      %p265 = scmp.eq.s32.totalorder %s29, 1
      %p266 = por %p264, %p265
      %p268 = scmp.ne.s32.totalorder %s253, %s267
      %p269 = scmp.eq.s32.totalorder %s29, 0
      %p270 = por %p268, %p269
      %s272 = sadd.s32 %s271, 1
      %p275 = scmp.eq.s32.totalorder %s23, 1
      %p276 = scmp.ne.s32.totalorder %s271, %s273
      %p277 = scmp.eq.s32.totalorder %s23, 0
      %p278 = por %p276, %p277
      %p279 = scmp.ne.s32.totalorder %s271, %s273
      %p280 = scmp.eq.s32.totalorder %s28, 1
      %p281 = por %p279, %p280
      %p282 = scmp.ne.s32.totalorder %s273, %s274
      %p283 = scmp.eq.s32.totalorder %s28, 0
      %p284 = por %p282, %p283
      %p285 = scmp.ne.s32.totalorder %s273, %s274
      %p286 = scmp.eq.s32.totalorder %s29, 1
      %p287 = por %p285, %p286
      %p289 = scmp.ne.s32.totalorder %s274, %s288
      %p290 = scmp.eq.s32.totalorder %s29, 0
      %p291 = por %p289, %p290
      %s293 = sadd.s32 %s292, 1
      %p296 = scmp.eq.s32.totalorder %s23, 1
      %p297 = scmp.ne.s32.totalorder %s292, %s294
      %p298 = scmp.eq.s32.totalorder %s23, 0
      %p299 = por %p297, %p298
      %p300 = scmp.ne.s32.totalorder %s292, %s294
      %p301 = scmp.eq.s32.totalorder %s28, 1
      %p302 = por %p300, %p301
      %p303 = scmp.ne.s32.totalorder %s294, %s295
      %p304 = scmp.eq.s32.totalorder %s28, 0
      %p305 = por %p303, %p304
      %p306 = scmp.ne.s32.totalorder %s294, %s295
      %p307 = scmp.eq.s32.totalorder %s29, 1
      %p308 = por %p306, %p307
      %p310 = scmp.ne.s32.totalorder %s295, %s309
      %p311 = scmp.eq.s32.totalorder %s29, 0
      %p312 = por %p310, %p311
      %s314 = sadd.s32 %s313, 1
      %p317 = scmp.eq.s32.totalorder %s23, 1
      %p318 = scmp.ne.s32.totalorder %s313, %s315
      %p319 = scmp.eq.s32.totalorder %s23, 0
      %p320 = por %p318, %p319
      %p321 = scmp.ne.s32.totalorder %s313, %s315
      %p322 = scmp.eq.s32.totalorder %s28, 1
      %p323 = por %p321, %p322
      %p324 = scmp.ne.s32.totalorder %s315, %s316
      %p325 = scmp.eq.s32.totalorder %s28, 0
      %p326 = por %p324, %p325
      %p327 = scmp.ne.s32.totalorder %s315, %s316
      %p328 = scmp.eq.s32.totalorder %s29, 1
      %p329 = por %p327, %p328
      %p331 = scmp.ne.s32.totalorder %s316, %s330
      %p332 = scmp.eq.s32.totalorder %s29, 0
      %p333 = por %p331, %p332
      %s335 = sadd.s32 %s334, 1
      %p338 = scmp.eq.s32.totalorder %s23, 1
      %p339 = scmp.ne.s32.totalorder %s334, %s336
      %p340 = scmp.eq.s32.totalorder %s23, 0
      %p341 = por %p339, %p340
      %p342 = scmp.ne.s32.totalorder %s334, %s336
      %p343 = scmp.eq.s32.totalorder %s28, 1
      %p344 = por %p342, %p343
      %p345 = scmp.ne.s32.totalorder %s336, %s337
      %p346 = scmp.eq.s32.totalorder %s28, 0
      %p347 = por %p345, %p346
      %p348 = scmp.ne.s32.totalorder %s336, %s337
      %p349 = scmp.eq.s32.totalorder %s29, 1
      %p350 = por %p348, %p349
      %p352 = scmp.ne.s32.totalorder %s337, %s351
      %p353 = scmp.eq.s32.totalorder %s29, 0
      %p354 = por %p352, %p353
      %s355 = ssub.s32 %s23, %s30
      %p356 = scmp.eq.s32.totalorder %s355, 0
      %s358 = sadd.s32 %s357, 1
      %s359 = scalar_select %p356, %s357, %s358
      %p362 = pneg %p356
      %p363 = scmp.eq.s32.totalorder %s23, 1
      %p364 = por %p362, %p363
      %p365 = scmp.ne.s32.totalorder %s357, %s360
      %p366 = scmp.eq.s32.totalorder %s23, 0
      %p367 = por %p365, %p366
      %p368 = scmp.ne.s32.totalorder %s357, %s360
      %p369 = scmp.eq.s32.totalorder %s28, 1
      %p370 = por %p368, %p369
      %p371 = scmp.ne.s32.totalorder %s360, %s361
      %p372 = scmp.eq.s32.totalorder %s28, 0
      %p373 = por %p371, %p372
      %p374 = scmp.ne.s32.totalorder %s360, %s361
      %p375 = scmp.eq.s32.totalorder %s29, 1
      %p376 = por %p374, %p375
      %p378 = scmp.ne.s32.totalorder %s361, %s377
      %p379 = scmp.eq.s32.totalorder %s29, 0
      %p380 = por %p378, %p379
      %p381 = scmp.le.s32.totalorder 1, %s23
      %p382 = scmp.lt.s32.totalorder %s23, 3
      %p383 = pnand %p381, %p382
      %p384 = pneg %p383
      // Predicated region
      $region9: #{fast_transformer_block.1} parent=5 // pred_check
        _
      $region10: #{fast_transformer_block.1} parent=5 // pred_check_branch
        %386 = sbr.rel (%p383) target = $region12
      $region11: #{fast_transformer_block.1} parent=5 // pred_region
        %s387 = ssub.s32 %s23, 1
        // Predicated region
        $region13: #{fast_transformer_block.1} parent=11 // pred_check
          %p388 = pneg %p200
        $region14: #{fast_transformer_block.1} parent=11 // pred_check_branch
          %390 = sbr.rel (%p388) target = $region16
        $region15: #{fast_transformer_block.1} parent=11 // pred_region
          _
        $region16: #{fast_transformer_block.1} parent=11 // pred_fallthru
          _
        // Predicated region
        $region17: #{fast_transformer_block.1} parent=11 // pred_check
          %p391 = pneg %p221
        $region18: #{fast_transformer_block.1} parent=11 // pred_check_branch
          %393 = sbr.rel (%p391) target = $region20
        $region19: #{fast_transformer_block.1} parent=11 // pred_region
          _
        $region20: #{fast_transformer_block.1} parent=11 // pred_fallthru
          _
        // Predicated region
        $region21: #{fast_transformer_block.1} parent=11 // pred_check
          %p394 = pneg %p242
        $region22: #{fast_transformer_block.1} parent=11 // pred_check_branch
          %396 = sbr.rel (%p394) target = $region24
        $region23: #{fast_transformer_block.1} parent=11 // pred_region
          _
        $region24: #{fast_transformer_block.1} parent=11 // pred_fallthru
          _
        // Predicated region
        $region25: #{fast_transformer_block.1} parent=11 // pred_check
          %p397 = pneg %p263
        $region26: #{fast_transformer_block.1} parent=11 // pred_check_branch
          %399 = sbr.rel (%p397) target = $region28
        $region27: #{fast_transformer_block.1} parent=11 // pred_region
          _
        $region28: #{fast_transformer_block.1} parent=11 // pred_fallthru
          _
        // Predicated region
        $region29: #{fast_transformer_block.1} parent=11 // pred_check
          %p400 = pneg %p284
        $region30: #{fast_transformer_block.1} parent=11 // pred_check_branch
          %402 = sbr.rel (%p400) target = $region32
        $region31: #{fast_transformer_block.1} parent=11 // pred_region
          _
        $region32: #{fast_transformer_block.1} parent=11 // pred_fallthru
          _
        // Predicated region
        $region33: #{fast_transformer_block.1} parent=11 // pred_check
          %p403 = pneg %p305
        $region34: #{fast_transformer_block.1} parent=11 // pred_check_branch
          %405 = sbr.rel (%p403) target = $region36
        $region35: #{fast_transformer_block.1} parent=11 // pred_region
          _
        $region36: #{fast_transformer_block.1} parent=11 // pred_fallthru
          _
        // Predicated region
        $region37: #{fast_transformer_block.1} parent=11 // pred_check
          %p406 = pneg %p326
        $region38: #{fast_transformer_block.1} parent=11 // pred_check_branch
          %408 = sbr.rel (%p406) target = $region40
        $region39: #{fast_transformer_block.1} parent=11 // pred_region
          _
        $region40: #{fast_transformer_block.1} parent=11 // pred_fallthru
          _
        // Predicated region
        $region41: #{fast_transformer_block.1} parent=11 // pred_check
          %p409 = pneg %p347
        $region42: #{fast_transformer_block.1} parent=11 // pred_check_branch
          %411 = sbr.rel (%p409) target = $region44
        $region43: #{fast_transformer_block.1} parent=11 // pred_region
          _
        $region44: #{fast_transformer_block.1} parent=11 // pred_fallthru
          _
      $region12: #{fast_transformer_block.1} parent=5 // pred_fallthru
        _
      %p412 = scmp.lt.s32.totalorder %s23, 2
      // Predicated region
      $region45: #{fast_transformer_block.1} parent=5 // pred_check
        %p413 = pneg %p412
      $region46: #{fast_transformer_block.1} parent=5 // pred_check_branch
        %415 = sbr.rel (%p413) target = $region48
      $region47: #{fast_transformer_block.1} parent=5 // pred_region
        // Predicated region
        $region49: #{fast_transformer_block.1} parent=47 // pred_check
          %p416 = pneg %p43
        $region50: #{fast_transformer_block.1} parent=47 // pred_check_branch
          %418 = sbr.rel (%p416) target = $region52
        $region51: #{fast_transformer_block.1} parent=47 // pred_region
          %s419 = smul.u32 2, %s23
          %p420 = scmp.lt.s32.totalorder %s419, 3
          %s421 = scalar_select %p420, %s419, 3
          %s422 = smul.addr %s421, 8
          %s423 = scalar_lea.vmem %s0, %s422
          %s424 = smul.u32 2, %s23
        $region52: #{fast_transformer_block.1} parent=47 // pred_fallthru
          _
        // Predicated region
        $region53: #{fast_transformer_block.1} parent=47 // pred_check
          %p425 = pneg %p69
        $region54: #{fast_transformer_block.1} parent=47 // pred_check_branch
          %427 = sbr.rel (%p425) target = $region56
        $region55: #{fast_transformer_block.1} parent=47 // pred_region
          %s428 = smul.u32 2, %s23
          %p429 = scmp.lt.s32.totalorder %s428, 3
          %s430 = scalar_select %p429, %s428, 3
          %s431 = smul.addr %s430, 8
          %s432 = scalar_lea.vmem %s1, %s431
          %s433 = smul.u32 2, %s23
        $region56: #{fast_transformer_block.1} parent=47 // pred_fallthru
          _
        // Predicated region
        $region57: #{fast_transformer_block.1} parent=47 // pred_check
          %p434 = pneg %p95
        $region58: #{fast_transformer_block.1} parent=47 // pred_check_branch
          %436 = sbr.rel (%p434) target = $region60
        $region59: #{fast_transformer_block.1} parent=47 // pred_region
          %s437 = smul.u32 2, %s23
          %p438 = scmp.lt.s32.totalorder %s437, 3
          %s439 = scalar_select %p438, %s437, 3
          %s440 = smul.addr %s439, 4
          %s441 = scalar_lea.vmem %s2, %s440
          %s442 = smul.u32 2, %s23
        $region60: #{fast_transformer_block.1} parent=47 // pred_fallthru
          _
        // Predicated region
        $region61: #{fast_transformer_block.1} parent=47 // pred_check
          %p443 = pneg %p121
        $region62: #{fast_transformer_block.1} parent=47 // pred_check_branch
          %445 = sbr.rel (%p443) target = $region64
        $region63: #{fast_transformer_block.1} parent=47 // pred_region
          %s446 = smul.u32 2, %s23
          %p447 = scmp.lt.s32.totalorder %s446, 3
          %s448 = scalar_select %p447, %s446, 3
          %s449 = smul.addr %s448, 8
          %s450 = scalar_lea.vmem %s3, %s449
          %s451 = smul.u32 2, %s23
        $region64: #{fast_transformer_block.1} parent=47 // pred_fallthru
          _
        // Predicated region
        $region65: #{fast_transformer_block.1} parent=47 // pred_check
          %p452 = pneg %p147
        $region66: #{fast_transformer_block.1} parent=47 // pred_check_branch
          %454 = sbr.rel (%p452) target = $region68
        $region67: #{fast_transformer_block.1} parent=47 // pred_region
          %s455 = smul.u32 2, %s23
          %p456 = scmp.lt.s32.totalorder %s455, 3
          %s457 = scalar_select %p456, %s455, 3
          %s458 = smul.addr %s457, 8
          %s459 = scalar_lea.vmem %s4, %s458
          %s460 = smul.u32 2, %s23
        $region68: #{fast_transformer_block.1} parent=47 // pred_fallthru
          _
        // Predicated region
        $region69: #{fast_transformer_block.1} parent=47 // pred_check
          %p461 = pneg %p173
        $region70: #{fast_transformer_block.1} parent=47 // pred_check_branch
          %463 = sbr.rel (%p461) target = $region72
        $region71: #{fast_transformer_block.1} parent=47 // pred_region
          %s464 = smul.u32 2, %s23
          %p465 = scmp.lt.s32.totalorder %s464, 3
          %s466 = scalar_select %p465, %s464, 3
          %s467 = smul.addr %s466, 8
          %s468 = scalar_lea.vmem %s5, %s467
          %s469 = smul.u32 2, %s23
        $region72: #{fast_transformer_block.1} parent=47 // pred_fallthru
          _
      $region48: #{fast_transformer_block.1} parent=5 // pred_fallthru
        _
      %p470 = scmp.le.s32.totalorder 1, %s23
      %p471 = scmp.lt.s32.totalorder %s23, 3
      %p472 = pnand %p470, %p471
      %p473 = pneg %p472
      // Predicated region
      $region73: #{fast_transformer_block.1} parent=5 // pred_check
        _
      $region74: #{fast_transformer_block.1} parent=5 // pred_check_branch
        %475 = sbr.rel (%p472) target = $region76
      $region75: #{fast_transformer_block.1} parent=5 // pred_region
        %s476 = ssub.s32 %s23, 1
        %s477 = smul.u32 2, %s28
        %p478 = scmp.lt.s32.totalorder %s477, 3
        %s479 = scalar_select %p478, %s477, 3
        %s480 = smul.addr %s479, 8
        %s481 = scalar_lea.vmem %s0, %s480
        %p482 = pneg %p49
        %p483 = pneg %p46
        %s484 = smul.u32 2, %s28
        %p485 = scmp.lt.s32.totalorder %s484, 3
        %s486 = scalar_select %p485, %s484, 3
        %s487 = smul.addr %s486, 8
        %s488 = scalar_lea.vmem %s1, %s487
        %p489 = pneg %p75
        %p490 = pneg %p72
        %s491 = smul.u32 2, %s28
        %p492 = scmp.lt.s32.totalorder %s491, 3
        %s493 = scalar_select %p492, %s491, 3
        %s494 = smul.addr %s493, 4
        %s495 = scalar_lea.vmem %s2, %s494
        %p496 = pneg %p101
        %p497 = pneg %p98
        %s498 = smul.u32 2, %s28
        %p499 = scmp.lt.s32.totalorder %s498, 3
        %s500 = scalar_select %p499, %s498, 3
        %s501 = smul.addr %s500, 8
        %s502 = scalar_lea.vmem %s3, %s501
        %p503 = pneg %p127
        %p504 = pneg %p124
        %s505 = smul.u32 2, %s28
        %p506 = scmp.lt.s32.totalorder %s505, 3
        %s507 = scalar_select %p506, %s505, 3
        %s508 = smul.addr %s507, 8
        %s509 = scalar_lea.vmem %s4, %s508
        %p510 = pneg %p153
        %p511 = pneg %p150
        %s512 = smul.u32 2, %s28
        %p513 = scmp.lt.s32.totalorder %s512, 3
        %s514 = scalar_select %p513, %s512, 3
        %s515 = smul.addr %s514, 8
        %s516 = scalar_lea.vmem %s5, %s515
        %p517 = pneg %p179
        %p518 = pneg %p176
        %p519 = pneg %p200
        %p520 = pneg %p197
        %p521 = pneg %p221
        %p522 = pneg %p218
        %p523 = pneg %p242
        %p524 = pneg %p239
        %p525 = pneg %p263
        %p526 = pneg %p260
        %p527 = pneg %p284
        %p528 = pneg %p281
        %p529 = pneg %p305
        %p530 = pneg %p302
        %p531 = pneg %p326
        %p532 = pneg %p323
        %p533 = pneg %p347
        %p534 = pneg %p344
        %p535 = pneg %p373
        %p536 = pneg %p370
        %s537 = sand.u32 %s360, 1
        %s538 = scalar_lea.sflag [#allocation3], %s537
        %s539 = sand.u32 %s360, 1
        %s540 = smul.addr %s539, 16
        %s541 = scalar_lea.vmem [#allocation2], %s540
        %s542 = smul.u32 2, %s28
        %p543 = scmp.lt.s32.totalorder %s542, 3
        %s544 = scalar_select %p543, %s542, 3
        %s545 = smul.addr %s544, 8
        %s546 = scalar_lea.vmem %s0, %s545
        %s547 = smul.u32 2, %s28
        %s548 = smul.u32 2, %s28
        %p549 = scmp.lt.s32.totalorder %s548, 3
        %s550 = scalar_select %p549, %s548, 3
        %s551 = smul.addr %s550, 8
        %s552 = scalar_lea.vmem %s1, %s551
        %s553 = smul.u32 2, %s28
        %s554 = smul.u32 2, %s28
        %p555 = scmp.lt.s32.totalorder %s554, 3
        %s556 = scalar_select %p555, %s554, 3
        %s557 = smul.addr %s556, 4
        %s558 = scalar_lea.vmem %s2, %s557
        %s559 = smul.u32 2, %s28
        %s560 = smul.u32 2, %s28
        %p561 = scmp.lt.s32.totalorder %s560, 3
        %s562 = scalar_select %p561, %s560, 3
        %s563 = smul.addr %s562, 8
        %s564 = scalar_lea.vmem %s3, %s563
        %s565 = smul.u32 2, %s28
        %s566 = smul.u32 2, %s28
        %p567 = scmp.lt.s32.totalorder %s566, 3
        %s568 = scalar_select %p567, %s566, 3
        %s569 = smul.addr %s568, 8
        %s570 = scalar_lea.vmem %s4, %s569
        %s571 = smul.u32 2, %s28
        %s572 = smul.u32 2, %s28
        %p573 = scmp.lt.s32.totalorder %s572, 3
        %s574 = scalar_select %p573, %s572, 3
        %s575 = smul.addr %s574, 8
        %s576 = scalar_lea.vmem %s5, %s575
        %s577 = smul.u32 2, %s28
        %s578 = smul.u32 2, %s28
        %v580 = vld [vmem:[%s13] sm:$0x1]
        %v581 = vld [vmem:[%s13 + $0x1] sm:$0x1]
        %v582 = vld [vmem:[%s13 + $0x2] sm:$0x1]
        %v583 = vld [vmem:[%s13 + $0x3] sm:$0x1]
        %v584 = vld [vmem:[%s13 + $0x4] sm:$0x1]
        %v585 = vld [vmem:[%s13 + $0x5] sm:$0x1]
        %v586 = vld [vmem:[%s13 + $0x6] sm:$0x1]
        %v587 = vld [vmem:[%s13 + $0x7] sm:$0x1]
        %v588 = vld [vmem:[%s13 + $0x8] sm:$0x1]
        %v589 = vld [vmem:[%s13 + $0x9] sm:$0x1]
        %v590 = vld [vmem:[%s13 + $0xa] sm:$0x1]
        %v591 = vld [vmem:[%s546] sm:$0xff]
        %v592 = vld [vmem:[%s546 + $0x8] sm:$0xff]
        %v593 = vld [vmem:[%s552] sm:$0xff]
        %v594 = vld [vmem:[%s552 + $0x8] sm:$0xff]
        %vm595 = vcmask 261120
        %v596 = vsel %vm595, %v591, 0.0
        %597 = vadd.xlane.f32.xlu0 %v596
        %v598 = vpop.xlane.xlu0 %597
        %v599 = vsel %vm595, %v592, 0.0
        %600 = vadd.xlane.f32.xlu0 %v599
        %v601 = vpop.xlane.xlu0 %600
        %v602 = vrcp.pop 32.0
        %v603 = vmul.f32 %v598, %v602
        %v604 = vmul.f32 %v601, %v602
        %v605 = vsub.f32 %v591, %v603
        %v606 = vsub.f32 %v592, %v604
        %v607 = vmul.f32 %v605, %v605
        %v608 = vmul.f32 %v606, %v606
        %v609 = vsel %vm595, %v607, 0.0
        %610 = vadd.xlane.f32.xlu0 %v609
        %v611 = vpop.xlane.xlu0 %610
        %v612 = vsel %vm595, %v608, 0.0
        %613 = vadd.xlane.f32.xlu0 %v612
        %v614 = vpop.xlane.xlu0 %613
        %v615 = vmul.f32 %v611, 0.032258064
        %v616 = vmul.f32 %v614, 0.032258064
        %v617 = vrsqrt.pop %v615
        %v618 = vmul.f32 %v615, %v617
        %vm619 = vcmp.eq.f32.partialorder %v615, inf
        %v620 = vsel %vm619, %v615, %v618
        %vm621 = vcmp.eq.f32.partialorder %v615, 0.0
        %v622 = vand.u32 %v615, 2147483648
        %v623 = vsel %vm621, %v622, %v620
        %v624 = vrsqrt.pop %v616
        %v625 = vmul.f32 %v616, %v624
        %vm626 = vcmp.eq.f32.partialorder %v616, inf
        %v627 = vsel %vm626, %v616, %v625
        %vm628 = vcmp.eq.f32.partialorder %v616, 0.0
        %v629 = vand.u32 %v616, 2147483648
        %v630 = vsel %vm628, %v629, %v627
        %v631 = vadd.f32 %v623, 1e-06
        %v632 = vadd.f32 %v630, 1e-06
        %v633 = vrcp.pop %v631
        %v634 = vrcp.pop %v632
        %v635 = vlaneseq
        %v636 = vshrl.u32 %v635, 7
        %v637 = vsub.s32 0, %v636
        %v638 = vrot.slane %v587, %v637
        %v639 = vmul.f32 %v638, %v605
        %v640 = vmul.f32 %v638, %v606
        %v641 = vmul.f32 %v639, %v633
        %v642 = vmul.f32 %v640, %v634
        %v643 = vlaneseq
        %v644 = vshrl.u32 %v643, 7
        %v645 = vsub.s32 0, %v644
        %v646 = vrot.slane %v588, %v645
        %v647 = vadd.f32 %v641, %v646
        %v648 = vadd.f32 %v642, %v646
        %v649 = vld [vmem:[%s6] sm:$0xf]
        %v650 = vld [vmem:[%s6 + $0x4] sm:$0xf]
        %v651 = vld [vmem:[%s6 + $0x8] sm:$0xf]
        %v652 = vld [vmem:[%s6 + $0xc] sm:$0xf]
        %v653 = vpack.c.bf16 %v648, %v647
        %v654 = vlaneseq
        %v655 = vshrl.u32 %v654, 7
        %v656 = vsub.s32 0, %v655
        %v657 = vrot.slane %v580, %v656
        %v662 = vunpack.c.l.b16 %v649
        %v663 = vunpack.c.l.b16 %v650
        %v664 = vunpack.c.l.b16 %v651
        %v665 = vunpack.c.l.b16 %v652
        %v666 = vpack.c.b16 %v663, %v662
        %v667 = vpack.c.b16 %v665, %v664
        %v671 = vsel %vm595, %v653, 0
        %673 = vmatprep.subr.bf16.mxu0 0
        %674 = vmatpush1.bf16.msra.mxu0 0
        %675 = vmatprep.subr.bf16.mxu0 0
        %676 = vmatpush1.bf16.msra.mxu0 0
        %677 = vmatprep.subr.bf16.mxu0 0
        %678 = vmatpush1.bf16.msra.mxu0 0
        %679 = vmatprep.subr.bf16.mxu0 0
        %680 = vmatpush1.bf16.msra.mxu0 0
        %681 = vmatprep.subr.bf16.mxu0 0
        %682 = vmatpush1.bf16.msra.mxu0 0
        %683 = vmatprep.subr.bf16.mxu0 0
        %684 = vmatpush1.bf16.msra.mxu0 0
        %685 = vmatprep.subr.bf16.mxu0 0
        %686 = vmatpush1.bf16.msra.mxu0 %v667
        %687 = vmatprep.subr.bf16.mxu0 0
        %688 = vmatpush1.bf16.msra.mxu0 %v666
        %689 = vmatprep.subr.bf16.mxu0 0
        %690 = vmatpush2.bf16.msra.mxu0 0
        %691 = vmatprep.subr.bf16.mxu0 0
        %692 = vmatpush2.bf16.msra.mxu0 0
        %693 = vmatprep.subr.bf16.mxu0 0
        %694 = vmatpush2.bf16.msra.mxu0 0
        %695 = vmatprep.subr.bf16.mxu0 0
        %696 = vmatpush2.bf16.msra.mxu0 0
        %697 = vmatprep.subr.bf16.mxu0 0
        %698 = vmatpush2.bf16.msra.mxu0 0
        %699 = vmatprep.subr.bf16.mxu0 0
        %700 = vmatpush2.bf16.msra.mxu0 0
        %701 = vmatprep.subr.bf16.mxu0 0
        %702 = vmatpush2.bf16.msra.mxu0 0
        %703 = vmatprep.subr.bf16.mxu0 0
        %704 = vmatpush2.bf16.msra.mxu0 0
        %705 = vmatprep.mubr.bf16.mxu0 0
        %706 = vmatmul.mubr.bf16.gmra.mxu0 %v671
        %v707 = vpop.f32.mrf.mxu0
        %v708 = vadd.f32 %v657, %v707
        %v709 = vpop.f32.mrf.mxu0
        %v710 = vpop.f32.mrf.mxu0
        %v711 = vadd.f32 %v657, %v710
        %v712 = vpop.f32.mrf.mxu0
        %713 = vdwg.mxu0
        %v714 = vld [vmem:[%s564] sm:$0xff]
        %v715 = vld [vmem:[%s564 + $0x8] sm:$0xff]
        %v716 = vadd.f32 %v708, %v714
        %v717 = vadd.f32 %v711, %v715
        %v718 = vld [vmem:[%s570] sm:$0xff]
        %v719 = vld [vmem:[%s570 + $0x8] sm:$0xff]
        %722 = vrot.lane.b32.xlu0 %v718, 32
        %v723 = vpop.permute.xlu0 %722
        %724 = vrot.lane.b32.xlu0 %v719, 32
        %v725 = vpop.permute.xlu0 %724
        %v728 = vadd.f32 %v708, %v723
        %v729 = vadd.f32 %v711, %v725
        %v730 = vld [vmem:[%s576] sm:$0xff]
        %v731 = vld [vmem:[%s576 + $0x8] sm:$0xff]
        %734 = vrot.lane.b32.xlu0 %v730, 64
        %v735 = vpop.permute.xlu0 %734
        %736 = vrot.lane.b32.xlu0 %v731, 64
        %v737 = vpop.permute.xlu0 %736
        %v740 = vadd.f32 %v708, %v735
        %v741 = vadd.f32 %v711, %v737
        %v742 = vpack.c.bf16 %v716, %v716
        %v743 = vpack.c.bf16 %v728, %v728
        %745 = vrot.lane.b32.xlu0 %v743, 96
        %v746 = vpop.permute.xlu0 %745
        %vm747 = vcmask 64512
        %v749 = vsel %vm747, %v742, 0
        %v752 = vsel %vm747, %v746, 0
        %754 = vmatprep.subr.bf16.mxu0 0
        %755 = vmatpush1.bf16.xpose.msra.mxu0 0
        %756 = vmatprep.subr.bf16.mxu0 0
        %757 = vmatpush1.bf16.xpose.msra.mxu0 0
        %758 = vmatprep.subr.bf16.mxu0 0
        %759 = vmatpush1.bf16.xpose.msra.mxu0 0
        %760 = vmatprep.subr.bf16.mxu0 0
        %761 = vmatpush1.bf16.xpose.msra.mxu0 0
        %762 = vmatprep.subr.bf16.mxu0 0
        %763 = vmatpush1.bf16.xpose.msra.mxu0 0
        %764 = vmatprep.subr.bf16.mxu0 0
        %765 = vmatpush1.bf16.xpose.msra.mxu0 0
        %766 = vmatprep.subr.bf16.mxu0 0
        %767 = vmatpush1.bf16.xpose.msra.mxu0 0
        %768 = vmatprep.subr.bf16.mxu0 0
        %769 = vmatpush1.bf16.xpose.msra.mxu0 %v752
        %770 = vmatprep.subr.bf16.mxu0 0
        %771 = vmatpush2.bf16.xpose.msra.mxu0 0
        %772 = vmatprep.subr.bf16.mxu0 0
        %773 = vmatpush2.bf16.xpose.msra.mxu0 0
        %774 = vmatprep.subr.bf16.mxu0 0
        %775 = vmatpush2.bf16.xpose.msra.mxu0 0
        %776 = vmatprep.subr.bf16.mxu0 0
        %777 = vmatpush2.bf16.xpose.msra.mxu0 0
        %778 = vmatprep.subr.bf16.mxu0 0
        %779 = vmatpush2.bf16.xpose.msra.mxu0 0
        %780 = vmatprep.subr.bf16.mxu0 0
        %781 = vmatpush2.bf16.xpose.msra.mxu0 0
        %782 = vmatprep.subr.bf16.mxu0 0
        %783 = vmatpush2.bf16.xpose.msra.mxu0 0
        %784 = vmatprep.subr.bf16.mxu0 0
        %785 = vmatpush2.bf16.xpose.msra.mxu0 0
        %786 = vmatprep.mubr.bf16.mxu0 0
        %787 = vmatmul.mubr.bf16.gmra.mxu0 %v749
        %v788 = vpop.f32.mrf.mxu0
        %v789 = vadd.f32 0.0, %v788
        %v790 = vpop.f32.mrf.mxu0
        %v791 = vpop.f32.mrf.mxu0
        %v792 = vpop.f32.mrf.mxu0
        %793 = vdwg.mxu0
        %v794 = vmul.f32 %v789, 0.35355338
        %v795 = vsel %vm747, %v794, -inf
        %796 = vmax.xlane.f32.xlu0 %v795
        %v797 = vpop.xlane.xlu0 %796
        %v798 = vsub.f32 %v794, %v797
        %v799 = vmul.f32 %v798, 1.442695
        %v800 = vpow.pop %v799
        %v801 = vsel %vm747, %v800, 0.0
        %802 = vadd.xlane.f32.xlu0 %v801
        %v803 = vpop.xlane.xlu0 %802
        %v804 = vrcp.pop %v803
        %v805 = vmul.f32 %v800, %v804
        %v806 = vpack.c.bf16 %v805, %v805
        %v807 = vpack.c.bf16 %v740, %v740
        %809 = vrot.lane.b32.xlu0 %v807, 64
        %v810 = vpop.permute.xlu0 %809
        %v812 = vsel %vm747, %v806, 0
        %vm814 = vcmask 1043456
        %v816 = vsel %vm814, %v810, 0
        %818 = vmatprep.subr.bf16.mxu0 0
        %819 = vmatpush1.bf16.msra.mxu0 0
        %820 = vmatprep.subr.bf16.mxu0 0
        %821 = vmatpush1.bf16.msra.mxu0 0
        %822 = vmatprep.subr.bf16.mxu0 0
        %823 = vmatpush1.bf16.msra.mxu0 0
        %824 = vmatprep.subr.bf16.mxu0 0
        %825 = vmatpush1.bf16.msra.mxu0 0
        %826 = vmatprep.subr.bf16.mxu0 0
        %827 = vmatpush1.bf16.msra.mxu0 0
        %828 = vmatprep.subr.bf16.mxu0 0
        %829 = vmatpush1.bf16.msra.mxu0 0
        %830 = vmatprep.subr.bf16.mxu0 0
        %831 = vmatpush1.bf16.msra.mxu0 0
        %832 = vmatprep.subr.bf16.mxu0 0
        %833 = vmatpush1.bf16.msra.mxu0 %v816
        %834 = vmatprep.subr.bf16.mxu0 0
        %835 = vmatpush2.bf16.msra.mxu0 0
        %836 = vmatprep.subr.bf16.mxu0 0
        %837 = vmatpush2.bf16.msra.mxu0 0
        %838 = vmatprep.subr.bf16.mxu0 0
        %839 = vmatpush2.bf16.msra.mxu0 0
        %840 = vmatprep.subr.bf16.mxu0 0
        %841 = vmatpush2.bf16.msra.mxu0 0
        %842 = vmatprep.subr.bf16.mxu0 0
        %843 = vmatpush2.bf16.msra.mxu0 0
        %844 = vmatprep.subr.bf16.mxu0 0
        %845 = vmatpush2.bf16.msra.mxu0 0
        %846 = vmatprep.subr.bf16.mxu0 0
        %847 = vmatpush2.bf16.msra.mxu0 0
        %848 = vmatprep.subr.bf16.mxu0 0
        %849 = vmatpush2.bf16.msra.mxu0 0
        %850 = vmatprep.mubr.bf16.mxu0 0
        %851 = vmatmul.mubr.bf16.gmra.mxu0 %v812
        %v852 = vpop.f32.mrf.mxu0
        %v853 = vadd.f32 0.0, %v852
        %v854 = vpop.f32.mrf.mxu0
        %v855 = vpop.f32.mrf.mxu0
        %v856 = vpop.f32.mrf.mxu0
        %857 = vdwg.mxu0
        %v858 = vpack.c.bf16 %v853, %v853
        %v859 = vld [vmem:[%s7] sm:$0xf]
        %861 = vrot.lane.b32.xlu0 %v742, 120
        %v862 = vpop.permute.xlu0 %861
        %863 = vrot.lane.b32.xlu0 %v743, 88
        %v864 = vpop.permute.xlu0 %863
        %v866 = vsel %vm747, %v862, 0
        %v869 = vsel %vm747, %v864, 0
        %871 = vmatprep.subr.bf16.mxu0 0
        %872 = vmatpush1.bf16.xpose.msra.mxu0 0
        %873 = vmatprep.subr.bf16.mxu0 0
        %874 = vmatpush1.bf16.xpose.msra.mxu0 0
        %875 = vmatprep.subr.bf16.mxu0 0
        %876 = vmatpush1.bf16.xpose.msra.mxu0 0
        %877 = vmatprep.subr.bf16.mxu0 0
        %878 = vmatpush1.bf16.xpose.msra.mxu0 0
        %879 = vmatprep.subr.bf16.mxu0 0
        %880 = vmatpush1.bf16.xpose.msra.mxu0 0
        %881 = vmatprep.subr.bf16.mxu0 0
        %882 = vmatpush1.bf16.xpose.msra.mxu0 0
        %883 = vmatprep.subr.bf16.mxu0 0
        %884 = vmatpush1.bf16.xpose.msra.mxu0 0
        %885 = vmatprep.subr.bf16.mxu0 0
        %886 = vmatpush1.bf16.xpose.msra.mxu0 %v869
        %887 = vmatprep.subr.bf16.mxu0 0
        %888 = vmatpush2.bf16.xpose.msra.mxu0 0
        %889 = vmatprep.subr.bf16.mxu0 0
        %890 = vmatpush2.bf16.xpose.msra.mxu0 0
        %891 = vmatprep.subr.bf16.mxu0 0
        %892 = vmatpush2.bf16.xpose.msra.mxu0 0
        %893 = vmatprep.subr.bf16.mxu0 0
        %894 = vmatpush2.bf16.xpose.msra.mxu0 0
        %895 = vmatprep.subr.bf16.mxu0 0
        %896 = vmatpush2.bf16.xpose.msra.mxu0 0
        %897 = vmatprep.subr.bf16.mxu0 0
        %898 = vmatpush2.bf16.xpose.msra.mxu0 0
        %899 = vmatprep.subr.bf16.mxu0 0
        %900 = vmatpush2.bf16.xpose.msra.mxu0 0
        %901 = vmatprep.subr.bf16.mxu0 0
        %902 = vmatpush2.bf16.xpose.msra.mxu0 0
        %903 = vmatprep.mubr.bf16.mxu0 0
        %904 = vmatmul.mubr.bf16.gmra.mxu0 %v866
        %v905 = vpop.f32.mrf.mxu0
        %v906 = vadd.f32 0.0, %v905
        %v907 = vpop.f32.mrf.mxu0
        %v908 = vpop.f32.mrf.mxu0
        %v909 = vpop.f32.mrf.mxu0
        %910 = vdwg.mxu0
        %v911 = vmul.f32 %v906, 0.35355338
        %v912 = vsel %vm747, %v911, -inf
        %913 = vmax.xlane.f32.xlu0 %v912
        %v914 = vpop.xlane.xlu0 %913
        %v915 = vsub.f32 %v911, %v914
        %v916 = vmul.f32 %v915, 1.442695
        %v917 = vpow.pop %v916
        %v918 = vsel %vm747, %v917, 0.0
        %919 = vadd.xlane.f32.xlu0 %v918
        %v920 = vpop.xlane.xlu0 %919
        %v921 = vrcp.pop %v920
        %v922 = vmul.f32 %v917, %v921
        %v923 = vpack.c.bf16 %v922, %v922
        %924 = vrot.lane.b32.xlu0 %v807, 56
        %v925 = vpop.permute.xlu0 %924
        %v927 = vsel %vm747, %v923, 0
        %v930 = vsel %vm814, %v925, 0
        %932 = vmatprep.subr.bf16.mxu0 0
        %933 = vmatpush1.bf16.msra.mxu0 0
        %934 = vmatprep.subr.bf16.mxu0 0
        %935 = vmatpush1.bf16.msra.mxu0 0
        %936 = vmatprep.subr.bf16.mxu0 0
        %937 = vmatpush1.bf16.msra.mxu0 0
        %938 = vmatprep.subr.bf16.mxu0 0
        %939 = vmatpush1.bf16.msra.mxu0 0
        %940 = vmatprep.subr.bf16.mxu0 0
        %941 = vmatpush1.bf16.msra.mxu0 0
        %942 = vmatprep.subr.bf16.mxu0 0
        %943 = vmatpush1.bf16.msra.mxu0 0
        %944 = vmatprep.subr.bf16.mxu0 0
        %945 = vmatpush1.bf16.msra.mxu0 0
        %946 = vmatprep.subr.bf16.mxu0 0
        %947 = vmatpush1.bf16.msra.mxu0 %v930
        %948 = vmatprep.subr.bf16.mxu0 0
        %949 = vmatpush2.bf16.msra.mxu0 0
        %950 = vmatprep.subr.bf16.mxu0 0
        %951 = vmatpush2.bf16.msra.mxu0 0
        %952 = vmatprep.subr.bf16.mxu0 0
        %953 = vmatpush2.bf16.msra.mxu0 0
        %954 = vmatprep.subr.bf16.mxu0 0
        %955 = vmatpush2.bf16.msra.mxu0 0
        %956 = vmatprep.subr.bf16.mxu0 0
        %957 = vmatpush2.bf16.msra.mxu0 0
        %958 = vmatprep.subr.bf16.mxu0 0
        %959 = vmatpush2.bf16.msra.mxu0 0
        %960 = vmatprep.subr.bf16.mxu0 0
        %961 = vmatpush2.bf16.msra.mxu0 0
        %962 = vmatprep.subr.bf16.mxu0 0
        %963 = vmatpush2.bf16.msra.mxu0 0
        %964 = vmatprep.mubr.bf16.mxu0 0
        %965 = vmatmul.mubr.bf16.gmra.mxu0 %v927
        %v966 = vpop.f32.mrf.mxu0
        %v967 = vadd.f32 0.0, %v966
        %v968 = vpop.f32.mrf.mxu0
        %v969 = vpop.f32.mrf.mxu0
        %v970 = vpop.f32.mrf.mxu0
        %971 = vdwg.mxu0
        %v972 = vpack.c.bf16 %v967, %v967
        %s973 = scalar_lea.vmem %s7, 4
        %v974 = vld [vmem:[%s973] sm:$0xf]
        %v976 = vsel %vm747, %v972, 0
        %v979 = vsel %vm814, %v974, 0
        %981 = vmatprep.subr.bf16.mxu0 0
        %982 = vmatpush1.bf16.msra.mxu0 0
        %983 = vmatprep.subr.bf16.mxu0 0
        %984 = vmatpush1.bf16.msra.mxu0 0
        %985 = vmatprep.subr.bf16.mxu0 0
        %986 = vmatpush1.bf16.msra.mxu0 0
        %987 = vmatprep.subr.bf16.mxu0 0
        %988 = vmatpush1.bf16.msra.mxu0 0
        %989 = vmatprep.subr.bf16.mxu0 0
        %990 = vmatpush1.bf16.msra.mxu0 0
        %991 = vmatprep.subr.bf16.mxu0 0
        %992 = vmatpush1.bf16.msra.mxu0 0
        %993 = vmatprep.subr.bf16.mxu0 0
        %994 = vmatpush1.bf16.msra.mxu0 0
        %995 = vmatprep.subr.bf16.mxu0 0
        %996 = vmatpush1.bf16.msra.mxu0 %v979
        %997 = vmatprep.subr.bf16.mxu0 0
        %998 = vmatpush2.bf16.msra.mxu0 0
        %999 = vmatprep.subr.bf16.mxu0 0
        %1000 = vmatpush2.bf16.msra.mxu0 0
        %1001 = vmatprep.subr.bf16.mxu0 0
        %1002 = vmatpush2.bf16.msra.mxu0 0
        %1003 = vmatprep.subr.bf16.mxu0 0
        %1004 = vmatpush2.bf16.msra.mxu0 0
        %1005 = vmatprep.subr.bf16.mxu0 0
        %1006 = vmatpush2.bf16.msra.mxu0 0
        %1007 = vmatprep.subr.bf16.mxu0 0
        %1008 = vmatpush2.bf16.msra.mxu0 0
        %1009 = vmatprep.subr.bf16.mxu0 0
        %1010 = vmatpush2.bf16.msra.mxu0 0
        %1011 = vmatprep.subr.bf16.mxu0 0
        %1012 = vmatpush2.bf16.msra.mxu0 0
        %1013 = vmatprep.mubr.bf16.mxu0 0
        %1014 = vmatmul.mubr.bf16.gmra.mxu0 %v976
        %v1015 = vpop.f32.mrf.mxu0
        %v1016 = vadd.f32 0.0, %v1015
        %v1017 = vpop.f32.mrf.mxu0
        %v1018 = vpop.f32.mrf.mxu0
        %v1019 = vpop.f32.mrf.mxu0
        %1020 = vdwg.mxu0
        %v1022 = vsel %vm747, %v858, 0
        %v1025 = vsel %vm814, %v859, 0
        %1027 = vmatprep.subr.bf16.mxu0 0
        %1028 = vmatpush1.bf16.msra.mxu0 0
        %1029 = vmatprep.subr.bf16.mxu0 0
        %1030 = vmatpush1.bf16.msra.mxu0 0
        %1031 = vmatprep.subr.bf16.mxu0 0
        %1032 = vmatpush1.bf16.msra.mxu0 0
        %1033 = vmatprep.subr.bf16.mxu0 0
        %1034 = vmatpush1.bf16.msra.mxu0 0
        %1035 = vmatprep.subr.bf16.mxu0 0
        %1036 = vmatpush1.bf16.msra.mxu0 0
        %1037 = vmatprep.subr.bf16.mxu0 0
        %1038 = vmatpush1.bf16.msra.mxu0 0
        %1039 = vmatprep.subr.bf16.mxu0 0
        %1040 = vmatpush1.bf16.msra.mxu0 0
        %1041 = vmatprep.subr.bf16.mxu0 0
        %1042 = vmatpush1.bf16.msra.mxu0 %v1025
        %1043 = vmatprep.subr.bf16.mxu0 0
        %1044 = vmatpush2.bf16.msra.mxu0 0
        %1045 = vmatprep.subr.bf16.mxu0 0
        %1046 = vmatpush2.bf16.msra.mxu0 0
        %1047 = vmatprep.subr.bf16.mxu0 0
        %1048 = vmatpush2.bf16.msra.mxu0 0
        %1049 = vmatprep.subr.bf16.mxu0 0
        %1050 = vmatpush2.bf16.msra.mxu0 0
        %1051 = vmatprep.subr.bf16.mxu0 0
        %1052 = vmatpush2.bf16.msra.mxu0 0
        %1053 = vmatprep.subr.bf16.mxu0 0
        %1054 = vmatpush2.bf16.msra.mxu0 0
        %1055 = vmatprep.subr.bf16.mxu0 0
        %1056 = vmatpush2.bf16.msra.mxu0 0
        %1057 = vmatprep.subr.bf16.mxu0 0
        %1058 = vmatpush2.bf16.msra.mxu0 0
        %1059 = vmatprep.mubr.bf16.mxu0 0
        %1060 = vmatmul.mubr.bf16.gmra.mxu0 %v1022
        %v1061 = vpop.f32.mrf.mxu0
        %v1062 = vadd.f32 %v1016, %v1061
        %v1063 = vpop.f32.mrf.mxu0
        %v1064 = vpop.f32.mrf.mxu0
        %v1065 = vpop.f32.mrf.mxu0
        %1066 = vdwg.mxu0
        %1067 = vrot.lane.b32.xlu0 %v742, 112
        %v1068 = vpop.permute.xlu0 %1067
        %1069 = vrot.lane.b32.xlu0 %v743, 80
        %v1070 = vpop.permute.xlu0 %1069
        %v1072 = vsel %vm747, %v1068, 0
        %v1075 = vsel %vm747, %v1070, 0
        %1077 = vmatprep.subr.bf16.mxu0 0
        %1078 = vmatpush1.bf16.xpose.msra.mxu0 0
        %1079 = vmatprep.subr.bf16.mxu0 0
        %1080 = vmatpush1.bf16.xpose.msra.mxu0 0
        %1081 = vmatprep.subr.bf16.mxu0 0
        %1082 = vmatpush1.bf16.xpose.msra.mxu0 0
        %1083 = vmatprep.subr.bf16.mxu0 0
        %1084 = vmatpush1.bf16.xpose.msra.mxu0 0
        %1085 = vmatprep.subr.bf16.mxu0 0
        %1086 = vmatpush1.bf16.xpose.msra.mxu0 0
        %1087 = vmatprep.subr.bf16.mxu0 0
        %1088 = vmatpush1.bf16.xpose.msra.mxu0 0
        %1089 = vmatprep.subr.bf16.mxu0 0
        %1090 = vmatpush1.bf16.xpose.msra.mxu0 0
        %1091 = vmatprep.subr.bf16.mxu0 0
        %1092 = vmatpush1.bf16.xpose.msra.mxu0 %v1075
        %1093 = vmatprep.subr.bf16.mxu0 0
        %1094 = vmatpush2.bf16.xpose.msra.mxu0 0
        %1095 = vmatprep.subr.bf16.mxu0 0
        %1096 = vmatpush2.bf16.xpose.msra.mxu0 0
        %1097 = vmatprep.subr.bf16.mxu0 0
        %1098 = vmatpush2.bf16.xpose.msra.mxu0 0
        %1099 = vmatprep.subr.bf16.mxu0 0
        %1100 = vmatpush2.bf16.xpose.msra.mxu0 0
        %1101 = vmatprep.subr.bf16.mxu0 0
        %1102 = vmatpush2.bf16.xpose.msra.mxu0 0
        %1103 = vmatprep.subr.bf16.mxu0 0
        %1104 = vmatpush2.bf16.xpose.msra.mxu0 0
        %1105 = vmatprep.subr.bf16.mxu0 0
        %1106 = vmatpush2.bf16.xpose.msra.mxu0 0
        %1107 = vmatprep.subr.bf16.mxu0 0
        %1108 = vmatpush2.bf16.xpose.msra.mxu0 0
        %1109 = vmatprep.mubr.bf16.mxu0 0
        %1110 = vmatmul.mubr.bf16.gmra.mxu0 %v1072
        %v1111 = vpop.f32.mrf.mxu0
        %v1112 = vadd.f32 0.0, %v1111
        %v1113 = vpop.f32.mrf.mxu0
        %v1114 = vpop.f32.mrf.mxu0
        %v1115 = vpop.f32.mrf.mxu0
        %1116 = vdwg.mxu0
        %v1117 = vmul.f32 %v1112, 0.35355338
        %v1118 = vsel %vm747, %v1117, -inf
        %1119 = vmax.xlane.f32.xlu0 %v1118
        %v1120 = vpop.xlane.xlu0 %1119
        %v1121 = vsub.f32 %v1117, %v1120
        %v1122 = vmul.f32 %v1121, 1.442695
        %v1123 = vpow.pop %v1122
        %v1124 = vsel %vm747, %v1123, 0.0
        %1125 = vadd.xlane.f32.xlu0 %v1124
        %v1126 = vpop.xlane.xlu0 %1125
        %v1127 = vrcp.pop %v1126
        %v1128 = vmul.f32 %v1123, %v1127
        %v1129 = vpack.c.bf16 %v1128, %v1128
        %1130 = vrot.lane.b32.xlu0 %v807, 48
        %v1131 = vpop.permute.xlu0 %1130
        %v1133 = vsel %vm747, %v1129, 0
        %v1136 = vsel %vm814, %v1131, 0
        %1138 = vmatprep.subr.bf16.mxu0 0
        %1139 = vmatpush1.bf16.msra.mxu0 0
        %1140 = vmatprep.subr.bf16.mxu0 0
        %1141 = vmatpush1.bf16.msra.mxu0 0
        %1142 = vmatprep.subr.bf16.mxu0 0
        %1143 = vmatpush1.bf16.msra.mxu0 0
        %1144 = vmatprep.subr.bf16.mxu0 0
        %1145 = vmatpush1.bf16.msra.mxu0 0
        %1146 = vmatprep.subr.bf16.mxu0 0
        %1147 = vmatpush1.bf16.msra.mxu0 0
        %1148 = vmatprep.subr.bf16.mxu0 0
        %1149 = vmatpush1.bf16.msra.mxu0 0
        %1150 = vmatprep.subr.bf16.mxu0 0
        %1151 = vmatpush1.bf16.msra.mxu0 0
        %1152 = vmatprep.subr.bf16.mxu0 0
        %1153 = vmatpush1.bf16.msra.mxu0 %v1136
        %1154 = vmatprep.subr.bf16.mxu0 0
        %1155 = vmatpush2.bf16.msra.mxu0 0
        %1156 = vmatprep.subr.bf16.mxu0 0
        %1157 = vmatpush2.bf16.msra.mxu0 0
        %1158 = vmatprep.subr.bf16.mxu0 0
        %1159 = vmatpush2.bf16.msra.mxu0 0
        %1160 = vmatprep.subr.bf16.mxu0 0
        %1161 = vmatpush2.bf16.msra.mxu0 0
        %1162 = vmatprep.subr.bf16.mxu0 0
        %1163 = vmatpush2.bf16.msra.mxu0 0
        %1164 = vmatprep.subr.bf16.mxu0 0
        %1165 = vmatpush2.bf16.msra.mxu0 0
        %1166 = vmatprep.subr.bf16.mxu0 0
        %1167 = vmatpush2.bf16.msra.mxu0 0
        %1168 = vmatprep.subr.bf16.mxu0 0
        %1169 = vmatpush2.bf16.msra.mxu0 0
        %1170 = vmatprep.mubr.bf16.mxu0 0
        %1171 = vmatmul.mubr.bf16.gmra.mxu0 %v1133
        %v1172 = vpop.f32.mrf.mxu0
        %v1173 = vadd.f32 0.0, %v1172
        %v1174 = vpop.f32.mrf.mxu0
        %v1175 = vpop.f32.mrf.mxu0
        %v1176 = vpop.f32.mrf.mxu0
        %1177 = vdwg.mxu0
        %v1178 = vpack.c.bf16 %v1173, %v1173
        %s1179 = scalar_lea.vmem %s7, 8
        %v1180 = vld [vmem:[%s1179] sm:$0xf]
        %v1182 = vsel %vm747, %v1178, 0
        %v1185 = vsel %vm814, %v1180, 0
        %1187 = vmatprep.subr.bf16.mxu0 0
        %1188 = vmatpush1.bf16.msra.mxu0 0
        %1189 = vmatprep.subr.bf16.mxu0 0
        %1190 = vmatpush1.bf16.msra.mxu0 0
        %1191 = vmatprep.subr.bf16.mxu0 0
        %1192 = vmatpush1.bf16.msra.mxu0 0
        %1193 = vmatprep.subr.bf16.mxu0 0
        %1194 = vmatpush1.bf16.msra.mxu0 0
        %1195 = vmatprep.subr.bf16.mxu0 0
        %1196 = vmatpush1.bf16.msra.mxu0 0
        %1197 = vmatprep.subr.bf16.mxu0 0
        %1198 = vmatpush1.bf16.msra.mxu0 0
        %1199 = vmatprep.subr.bf16.mxu0 0
        %1200 = vmatpush1.bf16.msra.mxu0 0
        %1201 = vmatprep.subr.bf16.mxu0 0
        %1202 = vmatpush1.bf16.msra.mxu0 %v1185
        %1203 = vmatprep.subr.bf16.mxu0 0
        %1204 = vmatpush2.bf16.msra.mxu0 0
        %1205 = vmatprep.subr.bf16.mxu0 0
        %1206 = vmatpush2.bf16.msra.mxu0 0
        %1207 = vmatprep.subr.bf16.mxu0 0
        %1208 = vmatpush2.bf16.msra.mxu0 0
        %1209 = vmatprep.subr.bf16.mxu0 0
        %1210 = vmatpush2.bf16.msra.mxu0 0
        %1211 = vmatprep.subr.bf16.mxu0 0
        %1212 = vmatpush2.bf16.msra.mxu0 0
        %1213 = vmatprep.subr.bf16.mxu0 0
        %1214 = vmatpush2.bf16.msra.mxu0 0
        %1215 = vmatprep.subr.bf16.mxu0 0
        %1216 = vmatpush2.bf16.msra.mxu0 0
        %1217 = vmatprep.subr.bf16.mxu0 0
        %1218 = vmatpush2.bf16.msra.mxu0 0
        %1219 = vmatprep.mubr.bf16.mxu0 0
        %1220 = vmatmul.mubr.bf16.gmra.mxu0 %v1182
        %v1221 = vpop.f32.mrf.mxu0
        %v1222 = vadd.f32 0.0, %v1221
        %v1223 = vpop.f32.mrf.mxu0
        %v1224 = vpop.f32.mrf.mxu0
        %v1225 = vpop.f32.mrf.mxu0
        %1226 = vdwg.mxu0
        %v1227 = vadd.f32 %v1062, %v1222
        %1228 = vrot.lane.b32.xlu0 %v742, 104
        %v1229 = vpop.permute.xlu0 %1228
        %1230 = vrot.lane.b32.xlu0 %v743, 72
        %v1231 = vpop.permute.xlu0 %1230
        %v1233 = vsel %vm747, %v1229, 0
        %v1236 = vsel %vm747, %v1231, 0
        %1238 = vmatprep.subr.bf16.mxu0 0
        %1239 = vmatpush1.bf16.xpose.msra.mxu0 0
        %1240 = vmatprep.subr.bf16.mxu0 0
        %1241 = vmatpush1.bf16.xpose.msra.mxu0 0
        %1242 = vmatprep.subr.bf16.mxu0 0
        %1243 = vmatpush1.bf16.xpose.msra.mxu0 0
        %1244 = vmatprep.subr.bf16.mxu0 0
        %1245 = vmatpush1.bf16.xpose.msra.mxu0 0
        %1246 = vmatprep.subr.bf16.mxu0 0
        %1247 = vmatpush1.bf16.xpose.msra.mxu0 0
        %1248 = vmatprep.subr.bf16.mxu0 0
        %1249 = vmatpush1.bf16.xpose.msra.mxu0 0
        %1250 = vmatprep.subr.bf16.mxu0 0
        %1251 = vmatpush1.bf16.xpose.msra.mxu0 0
        %1252 = vmatprep.subr.bf16.mxu0 0
        %1253 = vmatpush1.bf16.xpose.msra.mxu0 %v1236
        %1254 = vmatprep.subr.bf16.mxu0 0
        %1255 = vmatpush2.bf16.xpose.msra.mxu0 0
        %1256 = vmatprep.subr.bf16.mxu0 0
        %1257 = vmatpush2.bf16.xpose.msra.mxu0 0
        %1258 = vmatprep.subr.bf16.mxu0 0
        %1259 = vmatpush2.bf16.xpose.msra.mxu0 0
        %1260 = vmatprep.subr.bf16.mxu0 0
        %1261 = vmatpush2.bf16.xpose.msra.mxu0 0
        %1262 = vmatprep.subr.bf16.mxu0 0
        %1263 = vmatpush2.bf16.xpose.msra.mxu0 0
        %1264 = vmatprep.subr.bf16.mxu0 0
        %1265 = vmatpush2.bf16.xpose.msra.mxu0 0
        %1266 = vmatprep.subr.bf16.mxu0 0
        %1267 = vmatpush2.bf16.xpose.msra.mxu0 0
        %1268 = vmatprep.subr.bf16.mxu0 0
        %1269 = vmatpush2.bf16.xpose.msra.mxu0 0
        %1270 = vmatprep.mubr.bf16.mxu0 0
        %1271 = vmatmul.mubr.bf16.gmra.mxu0 %v1233
        %v1272 = vpop.f32.mrf.mxu0
        %v1273 = vadd.f32 0.0, %v1272
        %v1274 = vpop.f32.mrf.mxu0
        %v1275 = vpop.f32.mrf.mxu0
        %v1276 = vpop.f32.mrf.mxu0
        %1277 = vdwg.mxu0
        %v1278 = vmul.f32 %v1273, 0.35355338
        %v1279 = vsel %vm747, %v1278, -inf
        %1280 = vmax.xlane.f32.xlu0 %v1279
        %v1281 = vpop.xlane.xlu0 %1280
        %v1282 = vsub.f32 %v1278, %v1281
        %v1283 = vmul.f32 %v1282, 1.442695
        %v1284 = vpow.pop %v1283
        %v1285 = vsel %vm747, %v1284, 0.0
        %1286 = vadd.xlane.f32.xlu0 %v1285
        %v1287 = vpop.xlane.xlu0 %1286
        %v1288 = vrcp.pop %v1287
        %v1289 = vmul.f32 %v1284, %v1288
        %v1290 = vpack.c.bf16 %v1289, %v1289
        %1291 = vrot.lane.b32.xlu0 %v807, 40
        %v1292 = vpop.permute.xlu0 %1291
        %v1294 = vsel %vm747, %v1290, 0
        %v1297 = vsel %vm814, %v1292, 0
        %1299 = vmatprep.subr.bf16.mxu0 0
        %1300 = vmatpush1.bf16.msra.mxu0 0
        %1301 = vmatprep.subr.bf16.mxu0 0
        %1302 = vmatpush1.bf16.msra.mxu0 0
        %1303 = vmatprep.subr.bf16.mxu0 0
        %1304 = vmatpush1.bf16.msra.mxu0 0
        %1305 = vmatprep.subr.bf16.mxu0 0
        %1306 = vmatpush1.bf16.msra.mxu0 0
        %1307 = vmatprep.subr.bf16.mxu0 0
        %1308 = vmatpush1.bf16.msra.mxu0 0
        %1309 = vmatprep.subr.bf16.mxu0 0
        %1310 = vmatpush1.bf16.msra.mxu0 0
        %1311 = vmatprep.subr.bf16.mxu0 0
        %1312 = vmatpush1.bf16.msra.mxu0 0
        %1313 = vmatprep.subr.bf16.mxu0 0
        %1314 = vmatpush1.bf16.msra.mxu0 %v1297
        %1315 = vmatprep.subr.bf16.mxu0 0
        %1316 = vmatpush2.bf16.msra.mxu0 0
        %1317 = vmatprep.subr.bf16.mxu0 0
        %1318 = vmatpush2.bf16.msra.mxu0 0
        %1319 = vmatprep.subr.bf16.mxu0 0
        %1320 = vmatpush2.bf16.msra.mxu0 0
        %1321 = vmatprep.subr.bf16.mxu0 0
        %1322 = vmatpush2.bf16.msra.mxu0 0
        %1323 = vmatprep.subr.bf16.mxu0 0
        %1324 = vmatpush2.bf16.msra.mxu0 0
        %1325 = vmatprep.subr.bf16.mxu0 0
        %1326 = vmatpush2.bf16.msra.mxu0 0
        %1327 = vmatprep.subr.bf16.mxu0 0
        %1328 = vmatpush2.bf16.msra.mxu0 0
        %1329 = vmatprep.subr.bf16.mxu0 0
        %1330 = vmatpush2.bf16.msra.mxu0 0
        %1331 = vmatprep.mubr.bf16.mxu0 0
        %1332 = vmatmul.mubr.bf16.gmra.mxu0 %v1294
        %v1333 = vpop.f32.mrf.mxu0
        %v1334 = vadd.f32 0.0, %v1333
        %v1335 = vpop.f32.mrf.mxu0
        %v1336 = vpop.f32.mrf.mxu0
        %v1337 = vpop.f32.mrf.mxu0
        %1338 = vdwg.mxu0
        %v1339 = vpack.c.bf16 %v1334, %v1334
        %s1340 = scalar_lea.vmem %s7, 12
        %v1341 = vld [vmem:[%s1340] sm:$0xf]
        %v1343 = vsel %vm747, %v1339, 0
        %v1346 = vsel %vm814, %v1341, 0
        %1348 = vmatprep.subr.bf16.mxu0 0
        %1349 = vmatpush1.bf16.msra.mxu0 0
        %1350 = vmatprep.subr.bf16.mxu0 0
        %1351 = vmatpush1.bf16.msra.mxu0 0
        %1352 = vmatprep.subr.bf16.mxu0 0
        %1353 = vmatpush1.bf16.msra.mxu0 0
        %1354 = vmatprep.subr.bf16.mxu0 0
        %1355 = vmatpush1.bf16.msra.mxu0 0
        %1356 = vmatprep.subr.bf16.mxu0 0
        %1357 = vmatpush1.bf16.msra.mxu0 0
        %1358 = vmatprep.subr.bf16.mxu0 0
        %1359 = vmatpush1.bf16.msra.mxu0 0
        %1360 = vmatprep.subr.bf16.mxu0 0
        %1361 = vmatpush1.bf16.msra.mxu0 0
        %1362 = vmatprep.subr.bf16.mxu0 0
        %1363 = vmatpush1.bf16.msra.mxu0 %v1346
        %1364 = vmatprep.subr.bf16.mxu0 0
        %1365 = vmatpush2.bf16.msra.mxu0 0
        %1366 = vmatprep.subr.bf16.mxu0 0
        %1367 = vmatpush2.bf16.msra.mxu0 0
        %1368 = vmatprep.subr.bf16.mxu0 0
        %1369 = vmatpush2.bf16.msra.mxu0 0
        %1370 = vmatprep.subr.bf16.mxu0 0
        %1371 = vmatpush2.bf16.msra.mxu0 0
        %1372 = vmatprep.subr.bf16.mxu0 0
        %1373 = vmatpush2.bf16.msra.mxu0 0
        %1374 = vmatprep.subr.bf16.mxu0 0
        %1375 = vmatpush2.bf16.msra.mxu0 0
        %1376 = vmatprep.subr.bf16.mxu0 0
        %1377 = vmatpush2.bf16.msra.mxu0 0
        %1378 = vmatprep.subr.bf16.mxu0 0
        %1379 = vmatpush2.bf16.msra.mxu0 0
        %1380 = vmatprep.mubr.bf16.mxu0 0
        %1381 = vmatmul.mubr.bf16.gmra.mxu0 %v1343
        %v1382 = vpop.f32.mrf.mxu0
        %v1383 = vadd.f32 0.0, %v1382
        %v1384 = vpop.f32.mrf.mxu0
        %v1385 = vpop.f32.mrf.mxu0
        %v1386 = vpop.f32.mrf.mxu0
        %1387 = vdwg.mxu0
        %v1388 = vadd.f32 %v1227, %v1383
        %v1389 = vpack.c.bf16 %v717, %v717
        %v1390 = vpack.c.bf16 %v729, %v729
        %1392 = vrot.lane.b32.xlu0 %v1390, 96
        %v1393 = vpop.permute.xlu0 %1392
        %v1395 = vsel %vm747, %v1389, 0
        %v1398 = vsel %vm747, %v1393, 0
        %1400 = vmatprep.subr.bf16.mxu0 0
        %1401 = vmatpush1.bf16.xpose.msra.mxu0 0
        %1402 = vmatprep.subr.bf16.mxu0 0
        %1403 = vmatpush1.bf16.xpose.msra.mxu0 0
        %1404 = vmatprep.subr.bf16.mxu0 0
        %1405 = vmatpush1.bf16.xpose.msra.mxu0 0
        %1406 = vmatprep.subr.bf16.mxu0 0
        %1407 = vmatpush1.bf16.xpose.msra.mxu0 0
        %1408 = vmatprep.subr.bf16.mxu0 0
        %1409 = vmatpush1.bf16.xpose.msra.mxu0 0
        %1410 = vmatprep.subr.bf16.mxu0 0
        %1411 = vmatpush1.bf16.xpose.msra.mxu0 0
        %1412 = vmatprep.subr.bf16.mxu0 0
        %1413 = vmatpush1.bf16.xpose.msra.mxu0 0
        %1414 = vmatprep.subr.bf16.mxu0 0
        %1415 = vmatpush1.bf16.xpose.msra.mxu0 %v1398
        %1416 = vmatprep.subr.bf16.mxu0 0
        %1417 = vmatpush2.bf16.xpose.msra.mxu0 0
        %1418 = vmatprep.subr.bf16.mxu0 0
        %1419 = vmatpush2.bf16.xpose.msra.mxu0 0
        %1420 = vmatprep.subr.bf16.mxu0 0
        %1421 = vmatpush2.bf16.xpose.msra.mxu0 0
        %1422 = vmatprep.subr.bf16.mxu0 0
        %1423 = vmatpush2.bf16.xpose.msra.mxu0 0
        %1424 = vmatprep.subr.bf16.mxu0 0
        %1425 = vmatpush2.bf16.xpose.msra.mxu0 0
        %1426 = vmatprep.subr.bf16.mxu0 0
        %1427 = vmatpush2.bf16.xpose.msra.mxu0 0
        %1428 = vmatprep.subr.bf16.mxu0 0
        %1429 = vmatpush2.bf16.xpose.msra.mxu0 0
        %1430 = vmatprep.subr.bf16.mxu0 0
        %1431 = vmatpush2.bf16.xpose.msra.mxu0 0
        %1432 = vmatprep.mubr.bf16.mxu0 0
        %1433 = vmatmul.mubr.bf16.gmra.mxu0 %v1395
        %v1434 = vpop.f32.mrf.mxu0
        %v1435 = vadd.f32 0.0, %v1434
        %v1436 = vpop.f32.mrf.mxu0
        %v1437 = vpop.f32.mrf.mxu0
        %v1438 = vpop.f32.mrf.mxu0
        %1439 = vdwg.mxu0
        %v1440 = vmul.f32 %v1435, 0.35355338
        %v1441 = vsel %vm747, %v1440, -inf
        %1442 = vmax.xlane.f32.xlu0 %v1441
        %v1443 = vpop.xlane.xlu0 %1442
        %v1444 = vsub.f32 %v1440, %v1443
        %v1445 = vmul.f32 %v1444, 1.442695
        %v1446 = vpow.pop %v1445
        %v1447 = vsel %vm747, %v1446, 0.0
        %1448 = vadd.xlane.f32.xlu0 %v1447
        %v1449 = vpop.xlane.xlu0 %1448
        %v1450 = vrcp.pop %v1449
        %v1451 = vmul.f32 %v1446, %v1450
        %v1452 = vpack.c.bf16 %v1451, %v1451
        %v1453 = vpack.c.bf16 %v741, %v741
        %1455 = vrot.lane.b32.xlu0 %v1453, 64
        %v1456 = vpop.permute.xlu0 %1455
        %v1458 = vsel %vm747, %v1452, 0
        %v1461 = vsel %vm814, %v1456, 0
        %1463 = vmatprep.subr.bf16.mxu0 0
        %1464 = vmatpush1.bf16.msra.mxu0 0
        %1465 = vmatprep.subr.bf16.mxu0 0
        %1466 = vmatpush1.bf16.msra.mxu0 0
        %1467 = vmatprep.subr.bf16.mxu0 0
        %1468 = vmatpush1.bf16.msra.mxu0 0
        %1469 = vmatprep.subr.bf16.mxu0 0
        %1470 = vmatpush1.bf16.msra.mxu0 0
        %1471 = vmatprep.subr.bf16.mxu0 0
        %1472 = vmatpush1.bf16.msra.mxu0 0
        %1473 = vmatprep.subr.bf16.mxu0 0
        %1474 = vmatpush1.bf16.msra.mxu0 0
        %1475 = vmatprep.subr.bf16.mxu0 0
        %1476 = vmatpush1.bf16.msra.mxu0 0
        %1477 = vmatprep.subr.bf16.mxu0 0
        %1478 = vmatpush1.bf16.msra.mxu0 %v1461
        %1479 = vmatprep.subr.bf16.mxu0 0
        %1480 = vmatpush2.bf16.msra.mxu0 0
        %1481 = vmatprep.subr.bf16.mxu0 0
        %1482 = vmatpush2.bf16.msra.mxu0 0
        %1483 = vmatprep.subr.bf16.mxu0 0
        %1484 = vmatpush2.bf16.msra.mxu0 0
        %1485 = vmatprep.subr.bf16.mxu0 0
        %1486 = vmatpush2.bf16.msra.mxu0 0
        %1487 = vmatprep.subr.bf16.mxu0 0
        %1488 = vmatpush2.bf16.msra.mxu0 0
        %1489 = vmatprep.subr.bf16.mxu0 0
        %1490 = vmatpush2.bf16.msra.mxu0 0
        %1491 = vmatprep.subr.bf16.mxu0 0
        %1492 = vmatpush2.bf16.msra.mxu0 0
        %1493 = vmatprep.subr.bf16.mxu0 0
        %1494 = vmatpush2.bf16.msra.mxu0 0
        %1495 = vmatprep.mubr.bf16.mxu0 0
        %1496 = vmatmul.mubr.bf16.gmra.mxu0 %v1458
        %v1497 = vpop.f32.mrf.mxu0
        %v1498 = vadd.f32 0.0, %v1497
        %v1499 = vpop.f32.mrf.mxu0
        %v1500 = vpop.f32.mrf.mxu0
        %v1501 = vpop.f32.mrf.mxu0
        %1502 = vdwg.mxu0
        %v1503 = vpack.c.bf16 %v1498, %v1498
        %1505 = vrot.lane.b32.xlu0 %v1389, 120
        %v1506 = vpop.permute.xlu0 %1505
        %1507 = vrot.lane.b32.xlu0 %v1390, 88
        %v1508 = vpop.permute.xlu0 %1507
        %v1510 = vsel %vm747, %v1506, 0
        %v1513 = vsel %vm747, %v1508, 0
        %1515 = vmatprep.subr.bf16.mxu0 0
        %1516 = vmatpush1.bf16.xpose.msra.mxu0 0
        %1517 = vmatprep.subr.bf16.mxu0 0
        %1518 = vmatpush1.bf16.xpose.msra.mxu0 0
        %1519 = vmatprep.subr.bf16.mxu0 0
        %1520 = vmatpush1.bf16.xpose.msra.mxu0 0
        %1521 = vmatprep.subr.bf16.mxu0 0
        %1522 = vmatpush1.bf16.xpose.msra.mxu0 0
        %1523 = vmatprep.subr.bf16.mxu0 0
        %1524 = vmatpush1.bf16.xpose.msra.mxu0 0
        %1525 = vmatprep.subr.bf16.mxu0 0
        %1526 = vmatpush1.bf16.xpose.msra.mxu0 0
        %1527 = vmatprep.subr.bf16.mxu0 0
        %1528 = vmatpush1.bf16.xpose.msra.mxu0 0
        %1529 = vmatprep.subr.bf16.mxu0 0
        %1530 = vmatpush1.bf16.xpose.msra.mxu0 %v1513
        %1531 = vmatprep.subr.bf16.mxu0 0
        %1532 = vmatpush2.bf16.xpose.msra.mxu0 0
        %1533 = vmatprep.subr.bf16.mxu0 0
        %1534 = vmatpush2.bf16.xpose.msra.mxu0 0
        %1535 = vmatprep.subr.bf16.mxu0 0
        %1536 = vmatpush2.bf16.xpose.msra.mxu0 0
        %1537 = vmatprep.subr.bf16.mxu0 0
        %1538 = vmatpush2.bf16.xpose.msra.mxu0 0
        %1539 = vmatprep.subr.bf16.mxu0 0
        %1540 = vmatpush2.bf16.xpose.msra.mxu0 0
        %1541 = vmatprep.subr.bf16.mxu0 0
        %1542 = vmatpush2.bf16.xpose.msra.mxu0 0
        %1543 = vmatprep.subr.bf16.mxu0 0
        %1544 = vmatpush2.bf16.xpose.msra.mxu0 0
        %1545 = vmatprep.subr.bf16.mxu0 0
        %1546 = vmatpush2.bf16.xpose.msra.mxu0 0
        %1547 = vmatprep.mubr.bf16.mxu0 0
        %1548 = vmatmul.mubr.bf16.gmra.mxu0 %v1510
        %v1549 = vpop.f32.mrf.mxu0
        %v1550 = vadd.f32 0.0, %v1549
        %v1551 = vpop.f32.mrf.mxu0
        %v1552 = vpop.f32.mrf.mxu0
        %v1553 = vpop.f32.mrf.mxu0
        %1554 = vdwg.mxu0
        %v1555 = vmul.f32 %v1550, 0.35355338
        %v1556 = vsel %vm747, %v1555, -inf
        %1557 = vmax.xlane.f32.xlu0 %v1556
        %v1558 = vpop.xlane.xlu0 %1557
        %v1559 = vsub.f32 %v1555, %v1558
        %v1560 = vmul.f32 %v1559, 1.442695
        %v1561 = vpow.pop %v1560
        %v1562 = vsel %vm747, %v1561, 0.0
        %1563 = vadd.xlane.f32.xlu0 %v1562
        %v1564 = vpop.xlane.xlu0 %1563
        %v1565 = vrcp.pop %v1564
        %v1566 = vmul.f32 %v1561, %v1565
        %v1567 = vpack.c.bf16 %v1566, %v1566
        %1568 = vrot.lane.b32.xlu0 %v1453, 56
        %v1569 = vpop.permute.xlu0 %1568
        %v1571 = vsel %vm747, %v1567, 0
        %v1574 = vsel %vm814, %v1569, 0
        %1576 = vmatprep.subr.bf16.mxu0 0
        %1577 = vmatpush1.bf16.msra.mxu0 0
        %1578 = vmatprep.subr.bf16.mxu0 0
        %1579 = vmatpush1.bf16.msra.mxu0 0
        %1580 = vmatprep.subr.bf16.mxu0 0
        %1581 = vmatpush1.bf16.msra.mxu0 0
        %1582 = vmatprep.subr.bf16.mxu0 0
        %1583 = vmatpush1.bf16.msra.mxu0 0
        %1584 = vmatprep.subr.bf16.mxu0 0
        %1585 = vmatpush1.bf16.msra.mxu0 0
        %1586 = vmatprep.subr.bf16.mxu0 0
        %1587 = vmatpush1.bf16.msra.mxu0 0
        %1588 = vmatprep.subr.bf16.mxu0 0
        %1589 = vmatpush1.bf16.msra.mxu0 0
        %1590 = vmatprep.subr.bf16.mxu0 0
        %1591 = vmatpush1.bf16.msra.mxu0 %v1574
        %1592 = vmatprep.subr.bf16.mxu0 0
        %1593 = vmatpush2.bf16.msra.mxu0 0
        %1594 = vmatprep.subr.bf16.mxu0 0
        %1595 = vmatpush2.bf16.msra.mxu0 0
        %1596 = vmatprep.subr.bf16.mxu0 0
        %1597 = vmatpush2.bf16.msra.mxu0 0
        %1598 = vmatprep.subr.bf16.mxu0 0
        %1599 = vmatpush2.bf16.msra.mxu0 0
        %1600 = vmatprep.subr.bf16.mxu0 0
        %1601 = vmatpush2.bf16.msra.mxu0 0
        %1602 = vmatprep.subr.bf16.mxu0 0
        %1603 = vmatpush2.bf16.msra.mxu0 0
        %1604 = vmatprep.subr.bf16.mxu0 0
        %1605 = vmatpush2.bf16.msra.mxu0 0
        %1606 = vmatprep.subr.bf16.mxu0 0
        %1607 = vmatpush2.bf16.msra.mxu0 0
        %1608 = vmatprep.mubr.bf16.mxu0 0
        %1609 = vmatmul.mubr.bf16.gmra.mxu0 %v1571
        %v1610 = vpop.f32.mrf.mxu0
        %v1611 = vadd.f32 0.0, %v1610
        %v1612 = vpop.f32.mrf.mxu0
        %v1613 = vpop.f32.mrf.mxu0
        %v1614 = vpop.f32.mrf.mxu0
        %1615 = vdwg.mxu0
        %v1616 = vpack.c.bf16 %v1611, %v1611
        %v1618 = vsel %vm747, %v1616, 0
        %1620 = vmatprep.subr.bf16.mxu0 0
        %1621 = vmatpush1.bf16.msra.mxu0 0
        %1622 = vmatprep.subr.bf16.mxu0 0
        %1623 = vmatpush1.bf16.msra.mxu0 0
        %1624 = vmatprep.subr.bf16.mxu0 0
        %1625 = vmatpush1.bf16.msra.mxu0 0
        %1626 = vmatprep.subr.bf16.mxu0 0
        %1627 = vmatpush1.bf16.msra.mxu0 0
        %1628 = vmatprep.subr.bf16.mxu0 0
        %1629 = vmatpush1.bf16.msra.mxu0 0
        %1630 = vmatprep.subr.bf16.mxu0 0
        %1631 = vmatpush1.bf16.msra.mxu0 0
        %1632 = vmatprep.subr.bf16.mxu0 0
        %1633 = vmatpush1.bf16.msra.mxu0 0
        %1634 = vmatprep.subr.bf16.mxu0 0
        %1635 = vmatpush1.bf16.msra.mxu0 %v979
        %1636 = vmatprep.subr.bf16.mxu0 0
        %1637 = vmatpush2.bf16.msra.mxu0 0
        %1638 = vmatprep.subr.bf16.mxu0 0
        %1639 = vmatpush2.bf16.msra.mxu0 0
        %1640 = vmatprep.subr.bf16.mxu0 0
        %1641 = vmatpush2.bf16.msra.mxu0 0
        %1642 = vmatprep.subr.bf16.mxu0 0
        %1643 = vmatpush2.bf16.msra.mxu0 0
        %1644 = vmatprep.subr.bf16.mxu0 0
        %1645 = vmatpush2.bf16.msra.mxu0 0
        %1646 = vmatprep.subr.bf16.mxu0 0
        %1647 = vmatpush2.bf16.msra.mxu0 0
        %1648 = vmatprep.subr.bf16.mxu0 0
        %1649 = vmatpush2.bf16.msra.mxu0 0
        %1650 = vmatprep.subr.bf16.mxu0 0
        %1651 = vmatpush2.bf16.msra.mxu0 0
        %1652 = vmatprep.mubr.bf16.mxu0 0
        %1653 = vmatmul.mubr.bf16.gmra.mxu0 %v1618
        %v1654 = vpop.f32.mrf.mxu0
        %v1655 = vadd.f32 0.0, %v1654
        %v1656 = vpop.f32.mrf.mxu0
        %v1657 = vpop.f32.mrf.mxu0
        %v1658 = vpop.f32.mrf.mxu0
        %1659 = vdwg.mxu0
        %v1661 = vsel %vm747, %v1503, 0
        %1663 = vmatprep.subr.bf16.mxu0 0
        %1664 = vmatpush1.bf16.msra.mxu0 0
        %1665 = vmatprep.subr.bf16.mxu0 0
        %1666 = vmatpush1.bf16.msra.mxu0 0
        %1667 = vmatprep.subr.bf16.mxu0 0
        %1668 = vmatpush1.bf16.msra.mxu0 0
        %1669 = vmatprep.subr.bf16.mxu0 0
        %1670 = vmatpush1.bf16.msra.mxu0 0
        %1671 = vmatprep.subr.bf16.mxu0 0
        %1672 = vmatpush1.bf16.msra.mxu0 0
        %1673 = vmatprep.subr.bf16.mxu0 0
        %1674 = vmatpush1.bf16.msra.mxu0 0
        %1675 = vmatprep.subr.bf16.mxu0 0
        %1676 = vmatpush1.bf16.msra.mxu0 0
        %1677 = vmatprep.subr.bf16.mxu0 0
        %1678 = vmatpush1.bf16.msra.mxu0 %v1025
        %1679 = vmatprep.subr.bf16.mxu0 0
        %1680 = vmatpush2.bf16.msra.mxu0 0
        %1681 = vmatprep.subr.bf16.mxu0 0
        %1682 = vmatpush2.bf16.msra.mxu0 0
        %1683 = vmatprep.subr.bf16.mxu0 0
        %1684 = vmatpush2.bf16.msra.mxu0 0
        %1685 = vmatprep.subr.bf16.mxu0 0
        %1686 = vmatpush2.bf16.msra.mxu0 0
        %1687 = vmatprep.subr.bf16.mxu0 0
        %1688 = vmatpush2.bf16.msra.mxu0 0
        %1689 = vmatprep.subr.bf16.mxu0 0
        %1690 = vmatpush2.bf16.msra.mxu0 0
        %1691 = vmatprep.subr.bf16.mxu0 0
        %1692 = vmatpush2.bf16.msra.mxu0 0
        %1693 = vmatprep.subr.bf16.mxu0 0
        %1694 = vmatpush2.bf16.msra.mxu0 0
        %1695 = vmatprep.mubr.bf16.mxu0 0
        %1696 = vmatmul.mubr.bf16.gmra.mxu0 %v1661
        %v1697 = vpop.f32.mrf.mxu0
        %v1698 = vadd.f32 %v1655, %v1697
        %v1699 = vpop.f32.mrf.mxu0
        %v1700 = vpop.f32.mrf.mxu0
        %v1701 = vpop.f32.mrf.mxu0
        %1702 = vdwg.mxu0
        %1703 = vrot.lane.b32.xlu0 %v1389, 112
        %v1704 = vpop.permute.xlu0 %1703
        %1705 = vrot.lane.b32.xlu0 %v1390, 80
        %v1706 = vpop.permute.xlu0 %1705
        %v1708 = vsel %vm747, %v1704, 0
        %v1711 = vsel %vm747, %v1706, 0
        %1713 = vmatprep.subr.bf16.mxu0 0
        %1714 = vmatpush1.bf16.xpose.msra.mxu0 0
        %1715 = vmatprep.subr.bf16.mxu0 0
        %1716 = vmatpush1.bf16.xpose.msra.mxu0 0
        %1717 = vmatprep.subr.bf16.mxu0 0
        %1718 = vmatpush1.bf16.xpose.msra.mxu0 0
        %1719 = vmatprep.subr.bf16.mxu0 0
        %1720 = vmatpush1.bf16.xpose.msra.mxu0 0
        %1721 = vmatprep.subr.bf16.mxu0 0
        %1722 = vmatpush1.bf16.xpose.msra.mxu0 0
        %1723 = vmatprep.subr.bf16.mxu0 0
        %1724 = vmatpush1.bf16.xpose.msra.mxu0 0
        %1725 = vmatprep.subr.bf16.mxu0 0
        %1726 = vmatpush1.bf16.xpose.msra.mxu0 0
        %1727 = vmatprep.subr.bf16.mxu0 0
        %1728 = vmatpush1.bf16.xpose.msra.mxu0 %v1711
        %1729 = vmatprep.subr.bf16.mxu0 0
        %1730 = vmatpush2.bf16.xpose.msra.mxu0 0
        %1731 = vmatprep.subr.bf16.mxu0 0
        %1732 = vmatpush2.bf16.xpose.msra.mxu0 0
        %1733 = vmatprep.subr.bf16.mxu0 0
        %1734 = vmatpush2.bf16.xpose.msra.mxu0 0
        %1735 = vmatprep.subr.bf16.mxu0 0
        %1736 = vmatpush2.bf16.xpose.msra.mxu0 0
        %1737 = vmatprep.subr.bf16.mxu0 0
        %1738 = vmatpush2.bf16.xpose.msra.mxu0 0
        %1739 = vmatprep.subr.bf16.mxu0 0
        %1740 = vmatpush2.bf16.xpose.msra.mxu0 0
        %1741 = vmatprep.subr.bf16.mxu0 0
        %1742 = vmatpush2.bf16.xpose.msra.mxu0 0
        %1743 = vmatprep.subr.bf16.mxu0 0
        %1744 = vmatpush2.bf16.xpose.msra.mxu0 0
        %1745 = vmatprep.mubr.bf16.mxu0 0
        %1746 = vmatmul.mubr.bf16.gmra.mxu0 %v1708
        %v1747 = vpop.f32.mrf.mxu0
        %v1748 = vadd.f32 0.0, %v1747
        %v1749 = vpop.f32.mrf.mxu0
        %v1750 = vpop.f32.mrf.mxu0
        %v1751 = vpop.f32.mrf.mxu0
        %1752 = vdwg.mxu0
        %v1753 = vmul.f32 %v1748, 0.35355338
        %v1754 = vsel %vm747, %v1753, -inf
        %1755 = vmax.xlane.f32.xlu0 %v1754
        %v1756 = vpop.xlane.xlu0 %1755
        %v1757 = vsub.f32 %v1753, %v1756
        %v1758 = vmul.f32 %v1757, 1.442695
        %v1759 = vpow.pop %v1758
        %v1760 = vsel %vm747, %v1759, 0.0
        %1761 = vadd.xlane.f32.xlu0 %v1760
        %v1762 = vpop.xlane.xlu0 %1761
        %v1763 = vrcp.pop %v1762
        %v1764 = vmul.f32 %v1759, %v1763
        %v1765 = vpack.c.bf16 %v1764, %v1764
        %1766 = vrot.lane.b32.xlu0 %v1453, 48
        %v1767 = vpop.permute.xlu0 %1766
        %v1769 = vsel %vm747, %v1765, 0
        %v1772 = vsel %vm814, %v1767, 0
        %1774 = vmatprep.subr.bf16.mxu0 0
        %1775 = vmatpush1.bf16.msra.mxu0 0
        %1776 = vmatprep.subr.bf16.mxu0 0
        %1777 = vmatpush1.bf16.msra.mxu0 0
        %1778 = vmatprep.subr.bf16.mxu0 0
        %1779 = vmatpush1.bf16.msra.mxu0 0
        %1780 = vmatprep.subr.bf16.mxu0 0
        %1781 = vmatpush1.bf16.msra.mxu0 0
        %1782 = vmatprep.subr.bf16.mxu0 0
        %1783 = vmatpush1.bf16.msra.mxu0 0
        %1784 = vmatprep.subr.bf16.mxu0 0
        %1785 = vmatpush1.bf16.msra.mxu0 0
        %1786 = vmatprep.subr.bf16.mxu0 0
        %1787 = vmatpush1.bf16.msra.mxu0 0
        %1788 = vmatprep.subr.bf16.mxu0 0
        %1789 = vmatpush1.bf16.msra.mxu0 %v1772
        %1790 = vmatprep.subr.bf16.mxu0 0
        %1791 = vmatpush2.bf16.msra.mxu0 0
        %1792 = vmatprep.subr.bf16.mxu0 0
        %1793 = vmatpush2.bf16.msra.mxu0 0
        %1794 = vmatprep.subr.bf16.mxu0 0
        %1795 = vmatpush2.bf16.msra.mxu0 0
        %1796 = vmatprep.subr.bf16.mxu0 0
        %1797 = vmatpush2.bf16.msra.mxu0 0
        %1798 = vmatprep.subr.bf16.mxu0 0
        %1799 = vmatpush2.bf16.msra.mxu0 0
        %1800 = vmatprep.subr.bf16.mxu0 0
        %1801 = vmatpush2.bf16.msra.mxu0 0
        %1802 = vmatprep.subr.bf16.mxu0 0
        %1803 = vmatpush2.bf16.msra.mxu0 0
        %1804 = vmatprep.subr.bf16.mxu0 0
        %1805 = vmatpush2.bf16.msra.mxu0 0
        %1806 = vmatprep.mubr.bf16.mxu0 0
        %1807 = vmatmul.mubr.bf16.gmra.mxu0 %v1769
        %v1808 = vpop.f32.mrf.mxu0
        %v1809 = vadd.f32 0.0, %v1808
        %v1810 = vpop.f32.mrf.mxu0
        %v1811 = vpop.f32.mrf.mxu0
        %v1812 = vpop.f32.mrf.mxu0
        %1813 = vdwg.mxu0
        %v1814 = vpack.c.bf16 %v1809, %v1809
        %v1816 = vsel %vm747, %v1814, 0
        %1818 = vmatprep.subr.bf16.mxu0 0
        %1819 = vmatpush1.bf16.msra.mxu0 0
        %1820 = vmatprep.subr.bf16.mxu0 0
        %1821 = vmatpush1.bf16.msra.mxu0 0
        %1822 = vmatprep.subr.bf16.mxu0 0
        %1823 = vmatpush1.bf16.msra.mxu0 0
        %1824 = vmatprep.subr.bf16.mxu0 0
        %1825 = vmatpush1.bf16.msra.mxu0 0
        %1826 = vmatprep.subr.bf16.mxu0 0
        %1827 = vmatpush1.bf16.msra.mxu0 0
        %1828 = vmatprep.subr.bf16.mxu0 0
        %1829 = vmatpush1.bf16.msra.mxu0 0
        %1830 = vmatprep.subr.bf16.mxu0 0
        %1831 = vmatpush1.bf16.msra.mxu0 0
        %1832 = vmatprep.subr.bf16.mxu0 0
        %1833 = vmatpush1.bf16.msra.mxu0 %v1185
        %1834 = vmatprep.subr.bf16.mxu0 0
        %1835 = vmatpush2.bf16.msra.mxu0 0
        %1836 = vmatprep.subr.bf16.mxu0 0
        %1837 = vmatpush2.bf16.msra.mxu0 0
        %1838 = vmatprep.subr.bf16.mxu0 0
        %1839 = vmatpush2.bf16.msra.mxu0 0
        %1840 = vmatprep.subr.bf16.mxu0 0
        %1841 = vmatpush2.bf16.msra.mxu0 0
        %1842 = vmatprep.subr.bf16.mxu0 0
        %1843 = vmatpush2.bf16.msra.mxu0 0
        %1844 = vmatprep.subr.bf16.mxu0 0
        %1845 = vmatpush2.bf16.msra.mxu0 0
        %1846 = vmatprep.subr.bf16.mxu0 0
        %1847 = vmatpush2.bf16.msra.mxu0 0
        %1848 = vmatprep.subr.bf16.mxu0 0
        %1849 = vmatpush2.bf16.msra.mxu0 0
        %1850 = vmatprep.mubr.bf16.mxu0 0
        %1851 = vmatmul.mubr.bf16.gmra.mxu0 %v1816
        %v1852 = vpop.f32.mrf.mxu0
        %v1853 = vadd.f32 0.0, %v1852
        %v1854 = vpop.f32.mrf.mxu0
        %v1855 = vpop.f32.mrf.mxu0
        %v1856 = vpop.f32.mrf.mxu0
        %1857 = vdwg.mxu0
        %v1858 = vadd.f32 %v1698, %v1853
        %1859 = vrot.lane.b32.xlu0 %v1389, 104
        %v1860 = vpop.permute.xlu0 %1859
        %1861 = vrot.lane.b32.xlu0 %v1390, 72
        %v1862 = vpop.permute.xlu0 %1861
        %v1864 = vsel %vm747, %v1860, 0
        %v1867 = vsel %vm747, %v1862, 0
        %1869 = vmatprep.subr.bf16.mxu0 0
        %1870 = vmatpush1.bf16.xpose.msra.mxu0 0
        %1871 = vmatprep.subr.bf16.mxu0 0
        %1872 = vmatpush1.bf16.xpose.msra.mxu0 0
        %1873 = vmatprep.subr.bf16.mxu0 0
        %1874 = vmatpush1.bf16.xpose.msra.mxu0 0
        %1875 = vmatprep.subr.bf16.mxu0 0
        %1876 = vmatpush1.bf16.xpose.msra.mxu0 0
        %1877 = vmatprep.subr.bf16.mxu0 0
        %1878 = vmatpush1.bf16.xpose.msra.mxu0 0
        %1879 = vmatprep.subr.bf16.mxu0 0
        %1880 = vmatpush1.bf16.xpose.msra.mxu0 0
        %1881 = vmatprep.subr.bf16.mxu0 0
        %1882 = vmatpush1.bf16.xpose.msra.mxu0 0
        %1883 = vmatprep.subr.bf16.mxu0 0
        %1884 = vmatpush1.bf16.xpose.msra.mxu0 %v1867
        %1885 = vmatprep.subr.bf16.mxu0 0
        %1886 = vmatpush2.bf16.xpose.msra.mxu0 0
        %1887 = vmatprep.subr.bf16.mxu0 0
        %1888 = vmatpush2.bf16.xpose.msra.mxu0 0
        %1889 = vmatprep.subr.bf16.mxu0 0
        %1890 = vmatpush2.bf16.xpose.msra.mxu0 0
        %1891 = vmatprep.subr.bf16.mxu0 0
        %1892 = vmatpush2.bf16.xpose.msra.mxu0 0
        %1893 = vmatprep.subr.bf16.mxu0 0
        %1894 = vmatpush2.bf16.xpose.msra.mxu0 0
        %1895 = vmatprep.subr.bf16.mxu0 0
        %1896 = vmatpush2.bf16.xpose.msra.mxu0 0
        %1897 = vmatprep.subr.bf16.mxu0 0
        %1898 = vmatpush2.bf16.xpose.msra.mxu0 0
        %1899 = vmatprep.subr.bf16.mxu0 0
        %1900 = vmatpush2.bf16.xpose.msra.mxu0 0
        %1901 = vmatprep.mubr.bf16.mxu0 0
        %1902 = vmatmul.mubr.bf16.gmra.mxu0 %v1864
        %v1903 = vpop.f32.mrf.mxu0
        %v1904 = vadd.f32 0.0, %v1903
        %v1905 = vpop.f32.mrf.mxu0
        %v1906 = vpop.f32.mrf.mxu0
        %v1907 = vpop.f32.mrf.mxu0
        %1908 = vdwg.mxu0
        %v1909 = vmul.f32 %v1904, 0.35355338
        %v1910 = vsel %vm747, %v1909, -inf
        %1911 = vmax.xlane.f32.xlu0 %v1910
        %v1912 = vpop.xlane.xlu0 %1911
        %v1913 = vsub.f32 %v1909, %v1912
        %v1914 = vmul.f32 %v1913, 1.442695
        %v1915 = vpow.pop %v1914
        %v1916 = vsel %vm747, %v1915, 0.0
        %1917 = vadd.xlane.f32.xlu0 %v1916
        %v1918 = vpop.xlane.xlu0 %1917
        %v1919 = vrcp.pop %v1918
        %v1920 = vmul.f32 %v1915, %v1919
        %v1921 = vpack.c.bf16 %v1920, %v1920
        %1922 = vrot.lane.b32.xlu0 %v1453, 40
        %v1923 = vpop.permute.xlu0 %1922
        %v1925 = vsel %vm747, %v1921, 0
        %v1928 = vsel %vm814, %v1923, 0
        %1930 = vmatprep.subr.bf16.mxu0 0
        %1931 = vmatpush1.bf16.msra.mxu0 0
        %1932 = vmatprep.subr.bf16.mxu0 0
        %1933 = vmatpush1.bf16.msra.mxu0 0
        %1934 = vmatprep.subr.bf16.mxu0 0
        %1935 = vmatpush1.bf16.msra.mxu0 0
        %1936 = vmatprep.subr.bf16.mxu0 0
        %1937 = vmatpush1.bf16.msra.mxu0 0
        %1938 = vmatprep.subr.bf16.mxu0 0
        %1939 = vmatpush1.bf16.msra.mxu0 0
        %1940 = vmatprep.subr.bf16.mxu0 0
        %1941 = vmatpush1.bf16.msra.mxu0 0
        %1942 = vmatprep.subr.bf16.mxu0 0
        %1943 = vmatpush1.bf16.msra.mxu0 0
        %1944 = vmatprep.subr.bf16.mxu0 0
        %1945 = vmatpush1.bf16.msra.mxu0 %v1928
        %1946 = vmatprep.subr.bf16.mxu0 0
        %1947 = vmatpush2.bf16.msra.mxu0 0
        %1948 = vmatprep.subr.bf16.mxu0 0
        %1949 = vmatpush2.bf16.msra.mxu0 0
        %1950 = vmatprep.subr.bf16.mxu0 0
        %1951 = vmatpush2.bf16.msra.mxu0 0
        %1952 = vmatprep.subr.bf16.mxu0 0
        %1953 = vmatpush2.bf16.msra.mxu0 0
        %1954 = vmatprep.subr.bf16.mxu0 0
        %1955 = vmatpush2.bf16.msra.mxu0 0
        %1956 = vmatprep.subr.bf16.mxu0 0
        %1957 = vmatpush2.bf16.msra.mxu0 0
        %1958 = vmatprep.subr.bf16.mxu0 0
        %1959 = vmatpush2.bf16.msra.mxu0 0
        %1960 = vmatprep.subr.bf16.mxu0 0
        %1961 = vmatpush2.bf16.msra.mxu0 0
        %1962 = vmatprep.mubr.bf16.mxu0 0
        %1963 = vmatmul.mubr.bf16.gmra.mxu0 %v1925
        %v1964 = vpop.f32.mrf.mxu0
        %v1965 = vadd.f32 0.0, %v1964
        %v1966 = vpop.f32.mrf.mxu0
        %v1967 = vpop.f32.mrf.mxu0
        %v1968 = vpop.f32.mrf.mxu0
        %1969 = vdwg.mxu0
        %v1970 = vpack.c.bf16 %v1965, %v1965
        %v1972 = vsel %vm747, %v1970, 0
        %1974 = vmatprep.subr.bf16.mxu0 0
        %1975 = vmatpush1.bf16.msra.mxu0 0
        %1976 = vmatprep.subr.bf16.mxu0 0
        %1977 = vmatpush1.bf16.msra.mxu0 0
        %1978 = vmatprep.subr.bf16.mxu0 0
        %1979 = vmatpush1.bf16.msra.mxu0 0
        %1980 = vmatprep.subr.bf16.mxu0 0
        %1981 = vmatpush1.bf16.msra.mxu0 0
        %1982 = vmatprep.subr.bf16.mxu0 0
        %1983 = vmatpush1.bf16.msra.mxu0 0
        %1984 = vmatprep.subr.bf16.mxu0 0
        %1985 = vmatpush1.bf16.msra.mxu0 0
        %1986 = vmatprep.subr.bf16.mxu0 0
        %1987 = vmatpush1.bf16.msra.mxu0 0
        %1988 = vmatprep.subr.bf16.mxu0 0
        %1989 = vmatpush1.bf16.msra.mxu0 %v1346
        %1990 = vmatprep.subr.bf16.mxu0 0
        %1991 = vmatpush2.bf16.msra.mxu0 0
        %1992 = vmatprep.subr.bf16.mxu0 0
        %1993 = vmatpush2.bf16.msra.mxu0 0
        %1994 = vmatprep.subr.bf16.mxu0 0
        %1995 = vmatpush2.bf16.msra.mxu0 0
        %1996 = vmatprep.subr.bf16.mxu0 0
        %1997 = vmatpush2.bf16.msra.mxu0 0
        %1998 = vmatprep.subr.bf16.mxu0 0
        %1999 = vmatpush2.bf16.msra.mxu0 0
        %2000 = vmatprep.subr.bf16.mxu0 0
        %2001 = vmatpush2.bf16.msra.mxu0 0
        %2002 = vmatprep.subr.bf16.mxu0 0
        %2003 = vmatpush2.bf16.msra.mxu0 0
        %2004 = vmatprep.subr.bf16.mxu0 0
        %2005 = vmatpush2.bf16.msra.mxu0 0
        %2006 = vmatprep.mubr.bf16.mxu0 0
        %2007 = vmatmul.mubr.bf16.gmra.mxu0 %v1972
        %v2008 = vpop.f32.mrf.mxu0
        %v2009 = vadd.f32 0.0, %v2008
        %v2010 = vpop.f32.mrf.mxu0
        %v2011 = vpop.f32.mrf.mxu0
        %v2012 = vpop.f32.mrf.mxu0
        %2013 = vdwg.mxu0
        %v2014 = vadd.f32 %v1858, %v2009
        %v2015 = vadd.f32 %v591, %v1388
        %v2016 = vadd.f32 %v592, %v2014
        %v2017 = vlaneseq
        %v2018 = vshrl.u32 %v2017, 7
        %v2019 = vsub.s32 0, %v2018
        %v2020 = vrot.slane %v583, %v2019
        %v2021 = vadd.f32 %v2015, %v2020
        %v2022 = vadd.f32 %v2016, %v2020
        %v2023 = vsel %vm595, %v2021, 0.0
        %2024 = vadd.xlane.f32.xlu0 %v2023
        %v2025 = vpop.xlane.xlu0 %2024
        %v2026 = vsel %vm595, %v2022, 0.0
        %2027 = vadd.xlane.f32.xlu0 %v2026
        %v2028 = vpop.xlane.xlu0 %2027
        %v2029 = vmul.f32 %v2025, %v602
        %v2030 = vmul.f32 %v2028, %v602
        %v2031 = vsub.f32 %v2021, %v2029
        %v2032 = vsub.f32 %v2022, %v2030
        %v2033 = vmul.f32 %v2031, %v2031
        %v2034 = vmul.f32 %v2032, %v2032
        %v2035 = vsel %vm595, %v2033, 0.0
        %2036 = vadd.xlane.f32.xlu0 %v2035
        %v2037 = vpop.xlane.xlu0 %2036
        %v2038 = vsel %vm595, %v2034, 0.0
        %2039 = vadd.xlane.f32.xlu0 %v2038
        %v2040 = vpop.xlane.xlu0 %2039
        %v2041 = vmul.f32 %v2037, 0.032258064
        %v2042 = vmul.f32 %v2040, 0.032258064
        %v2043 = vrsqrt.pop %v2041
        %v2044 = vmul.f32 %v2041, %v2043
        %vm2045 = vcmp.eq.f32.partialorder %v2041, inf
        %v2046 = vsel %vm2045, %v2041, %v2044
        %vm2047 = vcmp.eq.f32.partialorder %v2041, 0.0
        %v2048 = vand.u32 %v2041, 2147483648
        %v2049 = vsel %vm2047, %v2048, %v2046
        %v2050 = vrsqrt.pop %v2042
        %v2051 = vmul.f32 %v2042, %v2050
        %vm2052 = vcmp.eq.f32.partialorder %v2042, inf
        %v2053 = vsel %vm2052, %v2042, %v2051
        %vm2054 = vcmp.eq.f32.partialorder %v2042, 0.0
        %v2055 = vand.u32 %v2042, 2147483648
        %v2056 = vsel %vm2054, %v2055, %v2053
        %v2057 = vadd.f32 %v2049, 1e-06
        %v2058 = vadd.f32 %v2056, 1e-06
        %v2059 = vrcp.pop %v2057
        %v2060 = vrcp.pop %v2058
        %v2061 = vlaneseq
        %v2062 = vshrl.u32 %v2061, 7
        %v2063 = vsub.s32 0, %v2062
        %v2064 = vrot.slane %v589, %v2063
        %v2065 = vmul.f32 %v2064, %v2031
        %v2066 = vmul.f32 %v2064, %v2032
        %v2067 = vmul.f32 %v2065, %v2059
        %v2068 = vmul.f32 %v2066, %v2060
        %v2069 = vlaneseq
        %v2070 = vshrl.u32 %v2069, 7
        %v2071 = vsub.s32 0, %v2070
        %v2072 = vrot.slane %v590, %v2071
        %v2073 = vadd.f32 %v2067, %v2072
        %v2074 = vadd.f32 %v2068, %v2072
        %v2075 = vld [vmem:[%s8] sm:$0xf]
        %v2076 = vld [vmem:[%s8 + $0x4] sm:$0xf]
        %v2077 = vld [vmem:[%s8 + $0x8] sm:$0xf]
        %v2078 = vld [vmem:[%s8 + $0xc] sm:$0xf]
        %v2079 = vpack.c.bf16 %v2074, %v2073
        %v2080 = vlaneseq
        %v2081 = vshrl.u32 %v2080, 7
        %v2082 = vsub.s32 0, %v2081
        %v2083 = vrot.slane %v584, %v2082
        %v2088 = vunpack.c.l.b16 %v2075
        %v2089 = vunpack.c.l.b16 %v2076
        %v2090 = vunpack.c.l.b16 %v2077
        %v2091 = vunpack.c.l.b16 %v2078
        %v2092 = vpack.c.b16 %v2089, %v2088
        %v2093 = vpack.c.b16 %v2091, %v2090
        %v2097 = vsel %vm595, %v2079, 0
        %2099 = vmatprep.subr.bf16.mxu0 0
        %2100 = vmatpush1.bf16.msra.mxu0 0
        %2101 = vmatprep.subr.bf16.mxu0 0
        %2102 = vmatpush1.bf16.msra.mxu0 0
        %2103 = vmatprep.subr.bf16.mxu0 0
        %2104 = vmatpush1.bf16.msra.mxu0 0
        %2105 = vmatprep.subr.bf16.mxu0 0
        %2106 = vmatpush1.bf16.msra.mxu0 0
        %2107 = vmatprep.subr.bf16.mxu0 0
        %2108 = vmatpush1.bf16.msra.mxu0 0
        %2109 = vmatprep.subr.bf16.mxu0 0
        %2110 = vmatpush1.bf16.msra.mxu0 0
        %2111 = vmatprep.subr.bf16.mxu0 0
        %2112 = vmatpush1.bf16.msra.mxu0 %v2093
        %2113 = vmatprep.subr.bf16.mxu0 0
        %2114 = vmatpush1.bf16.msra.mxu0 %v2092
        %2115 = vmatprep.subr.bf16.mxu0 0
        %2116 = vmatpush2.bf16.msra.mxu0 0
        %2117 = vmatprep.subr.bf16.mxu0 0
        %2118 = vmatpush2.bf16.msra.mxu0 0
        %2119 = vmatprep.subr.bf16.mxu0 0
        %2120 = vmatpush2.bf16.msra.mxu0 0
        %2121 = vmatprep.subr.bf16.mxu0 0
        %2122 = vmatpush2.bf16.msra.mxu0 0
        %2123 = vmatprep.subr.bf16.mxu0 0
        %2124 = vmatpush2.bf16.msra.mxu0 0
        %2125 = vmatprep.subr.bf16.mxu0 0
        %2126 = vmatpush2.bf16.msra.mxu0 0
        %2127 = vmatprep.subr.bf16.mxu0 0
        %2128 = vmatpush2.bf16.msra.mxu0 0
        %2129 = vmatprep.subr.bf16.mxu0 0
        %2130 = vmatpush2.bf16.msra.mxu0 0
        %2131 = vmatprep.mubr.bf16.mxu0 0
        %2132 = vmatmul.mubr.bf16.gmra.mxu0 %v2097
        %v2133 = vpop.f32.mrf.mxu0
        %v2134 = vadd.f32 %v2083, %v2133
        %v2135 = vpop.f32.mrf.mxu0
        %v2136 = vpop.f32.mrf.mxu0
        %v2137 = vadd.f32 %v2083, %v2136
        %v2138 = vpop.f32.mrf.mxu0
        %2139 = vdwg.mxu0
        %v2140 = vld [vmem:[%s9] sm:$0xf]
        %v2141 = vld [vmem:[%s9 + $0x4] sm:$0xf]
        %v2142 = vld [vmem:[%s9 + $0x8] sm:$0xf]
        %v2143 = vld [vmem:[%s9 + $0xc] sm:$0xf]
        %v2144 = vpack.c.bf16 %v594, %v593
        %v2145 = vlaneseq
        %v2146 = vshrl.u32 %v2145, 7
        %v2147 = vsub.s32 0, %v2146
        %v2148 = vrot.slane %v581, %v2147
        %v2153 = vunpack.c.l.b16 %v2140
        %v2154 = vunpack.c.l.b16 %v2141
        %v2155 = vunpack.c.l.b16 %v2142
        %v2156 = vunpack.c.l.b16 %v2143
        %v2157 = vpack.c.b16 %v2154, %v2153
        %v2158 = vpack.c.b16 %v2156, %v2155
        %v2162 = vsel %vm595, %v2144, 0
        %2164 = vmatprep.subr.bf16.mxu0 0
        %2165 = vmatpush1.bf16.msra.mxu0 0
        %2166 = vmatprep.subr.bf16.mxu0 0
        %2167 = vmatpush1.bf16.msra.mxu0 0
        %2168 = vmatprep.subr.bf16.mxu0 0
        %2169 = vmatpush1.bf16.msra.mxu0 0
        %2170 = vmatprep.subr.bf16.mxu0 0
        %2171 = vmatpush1.bf16.msra.mxu0 0
        %2172 = vmatprep.subr.bf16.mxu0 0
        %2173 = vmatpush1.bf16.msra.mxu0 0
        %2174 = vmatprep.subr.bf16.mxu0 0
        %2175 = vmatpush1.bf16.msra.mxu0 0
        %2176 = vmatprep.subr.bf16.mxu0 0
        %2177 = vmatpush1.bf16.msra.mxu0 %v2158
        %2178 = vmatprep.subr.bf16.mxu0 0
        %2179 = vmatpush1.bf16.msra.mxu0 %v2157
        %2180 = vmatprep.subr.bf16.mxu0 0
        %2181 = vmatpush2.bf16.msra.mxu0 0
        %2182 = vmatprep.subr.bf16.mxu0 0
        %2183 = vmatpush2.bf16.msra.mxu0 0
        %2184 = vmatprep.subr.bf16.mxu0 0
        %2185 = vmatpush2.bf16.msra.mxu0 0
        %2186 = vmatprep.subr.bf16.mxu0 0
        %2187 = vmatpush2.bf16.msra.mxu0 0
        %2188 = vmatprep.subr.bf16.mxu0 0
        %2189 = vmatpush2.bf16.msra.mxu0 0
        %2190 = vmatprep.subr.bf16.mxu0 0
        %2191 = vmatpush2.bf16.msra.mxu0 0
        %2192 = vmatprep.subr.bf16.mxu0 0
        %2193 = vmatpush2.bf16.msra.mxu0 0
        %2194 = vmatprep.subr.bf16.mxu0 0
        %2195 = vmatpush2.bf16.msra.mxu0 0
        %2196 = vmatprep.mubr.bf16.mxu0 0
        %2197 = vmatmul.mubr.bf16.gmra.mxu0 %v2162
        %v2198 = vpop.f32.mrf.mxu0
        %v2199 = vadd.f32 %v2148, %v2198
        %v2200 = vpop.f32.mrf.mxu0
        %v2201 = vpop.f32.mrf.mxu0
        %v2202 = vadd.f32 %v2148, %v2201
        %v2203 = vpop.f32.mrf.mxu0
        %2204 = vdwg.mxu0
        %v2205 = vld [vmem:[%s558] sm:$0xf]
        %v2206 = vunpack.c.l.bf16 %v2205
        %v2207 = vpack.c.bf16 %v2134, %v2134
        %v2208 = vpack.c.bf16 %v2199, %v2199
        %v2210 = vsel %vm747, %v2207, 0
        %v2213 = vsel %vm747, %v2208, 0
        %2215 = vmatprep.subr.bf16.mxu0 0
        %2216 = vmatpush1.bf16.xpose.msra.mxu0 0
        %2217 = vmatprep.subr.bf16.mxu0 0
        %2218 = vmatpush1.bf16.xpose.msra.mxu0 0
        %2219 = vmatprep.subr.bf16.mxu0 0
        %2220 = vmatpush1.bf16.xpose.msra.mxu0 0
        %2221 = vmatprep.subr.bf16.mxu0 0
        %2222 = vmatpush1.bf16.xpose.msra.mxu0 0
        %2223 = vmatprep.subr.bf16.mxu0 0
        %2224 = vmatpush1.bf16.xpose.msra.mxu0 0
        %2225 = vmatprep.subr.bf16.mxu0 0
        %2226 = vmatpush1.bf16.xpose.msra.mxu0 0
        %2227 = vmatprep.subr.bf16.mxu0 0
        %2228 = vmatpush1.bf16.xpose.msra.mxu0 0
        %2229 = vmatprep.subr.bf16.mxu0 0
        %2230 = vmatpush1.bf16.xpose.msra.mxu0 %v2213
        %2231 = vmatprep.subr.bf16.mxu0 0
        %2232 = vmatpush2.bf16.xpose.msra.mxu0 0
        %2233 = vmatprep.subr.bf16.mxu0 0
        %2234 = vmatpush2.bf16.xpose.msra.mxu0 0
        %2235 = vmatprep.subr.bf16.mxu0 0
        %2236 = vmatpush2.bf16.xpose.msra.mxu0 0
        %2237 = vmatprep.subr.bf16.mxu0 0
        %2238 = vmatpush2.bf16.xpose.msra.mxu0 0
        %2239 = vmatprep.subr.bf16.mxu0 0
        %2240 = vmatpush2.bf16.xpose.msra.mxu0 0
        %2241 = vmatprep.subr.bf16.mxu0 0
        %2242 = vmatpush2.bf16.xpose.msra.mxu0 0
        %2243 = vmatprep.subr.bf16.mxu0 0
        %2244 = vmatpush2.bf16.xpose.msra.mxu0 0
        %2245 = vmatprep.subr.bf16.mxu0 0
        %2246 = vmatpush2.bf16.xpose.msra.mxu0 0
        %2247 = vmatprep.mubr.bf16.mxu0 0
        %2248 = vmatmul.mubr.bf16.gmra.mxu0 %v2210
        %v2249 = vpop.f32.mrf.mxu0
        %v2250 = vadd.f32 0.0, %v2249
        %v2251 = vpop.f32.mrf.mxu0
        %v2252 = vpop.f32.mrf.mxu0
        %v2253 = vpop.f32.mrf.mxu0
        %2254 = vdwg.mxu0
        %v2255 = vmul.f32 %v2250, 0.35355338
        %vm2256 = vcmp.eq.f32.partialorder %v2206, 0.0
        %v2257 = vsel %vm2256, -1e+09, %v2255
        %v2258 = vsel %vm747, %v2257, -inf
        %2259 = vmax.xlane.f32.xlu0 %v2258
        %v2260 = vpop.xlane.xlu0 %2259
        %v2261 = vsub.f32 %v2257, %v2260
        %v2262 = vmul.f32 %v2261, 1.442695
        %v2263 = vpow.pop %v2262
        %v2264 = vsel %vm747, %v2263, 0.0
        %2265 = vadd.xlane.f32.xlu0 %v2264
        %v2266 = vpop.xlane.xlu0 %2265
        %v2267 = vrcp.pop %v2266
        %v2268 = vmul.f32 %v2263, %v2267
        %v2269 = vpack.c.bf16 %v2268, %v2268
        %2271 = vrot.lane.b32.xlu0 %v2208, 96
        %v2272 = vpop.permute.xlu0 %2271
        %v2274 = vsel %vm747, %v2269, 0
        %v2277 = vsel %vm814, %v2272, 0
        %2279 = vmatprep.subr.bf16.mxu0 0
        %2280 = vmatpush1.bf16.msra.mxu0 0
        %2281 = vmatprep.subr.bf16.mxu0 0
        %2282 = vmatpush1.bf16.msra.mxu0 0
        %2283 = vmatprep.subr.bf16.mxu0 0
        %2284 = vmatpush1.bf16.msra.mxu0 0
        %2285 = vmatprep.subr.bf16.mxu0 0
        %2286 = vmatpush1.bf16.msra.mxu0 0
        %2287 = vmatprep.subr.bf16.mxu0 0
        %2288 = vmatpush1.bf16.msra.mxu0 0
        %2289 = vmatprep.subr.bf16.mxu0 0
        %2290 = vmatpush1.bf16.msra.mxu0 0
        %2291 = vmatprep.subr.bf16.mxu0 0
        %2292 = vmatpush1.bf16.msra.mxu0 0
        %2293 = vmatprep.subr.bf16.mxu0 0
        %2294 = vmatpush1.bf16.msra.mxu0 %v2277
        %2295 = vmatprep.subr.bf16.mxu0 0
        %2296 = vmatpush2.bf16.msra.mxu0 0
        %2297 = vmatprep.subr.bf16.mxu0 0
        %2298 = vmatpush2.bf16.msra.mxu0 0
        %2299 = vmatprep.subr.bf16.mxu0 0
        %2300 = vmatpush2.bf16.msra.mxu0 0
        %2301 = vmatprep.subr.bf16.mxu0 0
        %2302 = vmatpush2.bf16.msra.mxu0 0
        %2303 = vmatprep.subr.bf16.mxu0 0
        %2304 = vmatpush2.bf16.msra.mxu0 0
        %2305 = vmatprep.subr.bf16.mxu0 0
        %2306 = vmatpush2.bf16.msra.mxu0 0
        %2307 = vmatprep.subr.bf16.mxu0 0
        %2308 = vmatpush2.bf16.msra.mxu0 0
        %2309 = vmatprep.subr.bf16.mxu0 0
        %2310 = vmatpush2.bf16.msra.mxu0 0
        %2311 = vmatprep.mubr.bf16.mxu0 0
        %2312 = vmatmul.mubr.bf16.gmra.mxu0 %v2274
        %v2313 = vpop.f32.mrf.mxu0
        %v2314 = vadd.f32 0.0, %v2313
        %v2315 = vpop.f32.mrf.mxu0
        %v2316 = vpop.f32.mrf.mxu0
        %v2317 = vpop.f32.mrf.mxu0
        %2318 = vdwg.mxu0
        %v2319 = vpack.c.bf16 %v2314, %v2314
        %v2320 = vld [vmem:[%s10] sm:$0xf]
        %2322 = vrot.lane.b32.xlu0 %v2207, 120
        %v2323 = vpop.permute.xlu0 %2322
        %2324 = vrot.lane.b32.xlu0 %v2208, 120
        %v2325 = vpop.permute.xlu0 %2324
        %v2327 = vsel %vm747, %v2323, 0
        %v2330 = vsel %vm747, %v2325, 0
        %2332 = vmatprep.subr.bf16.mxu0 0
        %2333 = vmatpush1.bf16.xpose.msra.mxu0 0
        %2334 = vmatprep.subr.bf16.mxu0 0
        %2335 = vmatpush1.bf16.xpose.msra.mxu0 0
        %2336 = vmatprep.subr.bf16.mxu0 0
        %2337 = vmatpush1.bf16.xpose.msra.mxu0 0
        %2338 = vmatprep.subr.bf16.mxu0 0
        %2339 = vmatpush1.bf16.xpose.msra.mxu0 0
        %2340 = vmatprep.subr.bf16.mxu0 0
        %2341 = vmatpush1.bf16.xpose.msra.mxu0 0
        %2342 = vmatprep.subr.bf16.mxu0 0
        %2343 = vmatpush1.bf16.xpose.msra.mxu0 0
        %2344 = vmatprep.subr.bf16.mxu0 0
        %2345 = vmatpush1.bf16.xpose.msra.mxu0 0
        %2346 = vmatprep.subr.bf16.mxu0 0
        %2347 = vmatpush1.bf16.xpose.msra.mxu0 %v2330
        %2348 = vmatprep.subr.bf16.mxu0 0
        %2349 = vmatpush2.bf16.xpose.msra.mxu0 0
        %2350 = vmatprep.subr.bf16.mxu0 0
        %2351 = vmatpush2.bf16.xpose.msra.mxu0 0
        %2352 = vmatprep.subr.bf16.mxu0 0
        %2353 = vmatpush2.bf16.xpose.msra.mxu0 0
        %2354 = vmatprep.subr.bf16.mxu0 0
        %2355 = vmatpush2.bf16.xpose.msra.mxu0 0
        %2356 = vmatprep.subr.bf16.mxu0 0
        %2357 = vmatpush2.bf16.xpose.msra.mxu0 0
        %2358 = vmatprep.subr.bf16.mxu0 0
        %2359 = vmatpush2.bf16.xpose.msra.mxu0 0
        %2360 = vmatprep.subr.bf16.mxu0 0
        %2361 = vmatpush2.bf16.xpose.msra.mxu0 0
        %2362 = vmatprep.subr.bf16.mxu0 0
        %2363 = vmatpush2.bf16.xpose.msra.mxu0 0
        %2364 = vmatprep.mubr.bf16.mxu0 0
        %2365 = vmatmul.mubr.bf16.gmra.mxu0 %v2327
        %v2366 = vpop.f32.mrf.mxu0
        %v2367 = vadd.f32 0.0, %v2366
        %v2368 = vpop.f32.mrf.mxu0
        %v2369 = vpop.f32.mrf.mxu0
        %v2370 = vpop.f32.mrf.mxu0
        %2371 = vdwg.mxu0
        %v2372 = vmul.f32 %v2367, 0.35355338
        %v2373 = vsel %vm2256, -1e+09, %v2372
        %v2374 = vsel %vm747, %v2373, -inf
        %2375 = vmax.xlane.f32.xlu0 %v2374
        %v2376 = vpop.xlane.xlu0 %2375
        %v2377 = vsub.f32 %v2373, %v2376
        %v2378 = vmul.f32 %v2377, 1.442695
        %v2379 = vpow.pop %v2378
        %v2380 = vsel %vm747, %v2379, 0.0
        %2381 = vadd.xlane.f32.xlu0 %v2380
        %v2382 = vpop.xlane.xlu0 %2381
        %v2383 = vrcp.pop %v2382
        %v2384 = vmul.f32 %v2379, %v2383
        %v2385 = vpack.c.bf16 %v2384, %v2384
        %2386 = vrot.lane.b32.xlu0 %v2208, 88
        %v2387 = vpop.permute.xlu0 %2386
        %v2389 = vsel %vm747, %v2385, 0
        %v2392 = vsel %vm814, %v2387, 0
        %2394 = vmatprep.subr.bf16.mxu0 0
        %2395 = vmatpush1.bf16.msra.mxu0 0
        %2396 = vmatprep.subr.bf16.mxu0 0
        %2397 = vmatpush1.bf16.msra.mxu0 0
        %2398 = vmatprep.subr.bf16.mxu0 0
        %2399 = vmatpush1.bf16.msra.mxu0 0
        %2400 = vmatprep.subr.bf16.mxu0 0
        %2401 = vmatpush1.bf16.msra.mxu0 0
        %2402 = vmatprep.subr.bf16.mxu0 0
        %2403 = vmatpush1.bf16.msra.mxu0 0
        %2404 = vmatprep.subr.bf16.mxu0 0
        %2405 = vmatpush1.bf16.msra.mxu0 0
        %2406 = vmatprep.subr.bf16.mxu0 0
        %2407 = vmatpush1.bf16.msra.mxu0 0
        %2408 = vmatprep.subr.bf16.mxu0 0
        %2409 = vmatpush1.bf16.msra.mxu0 %v2392
        %2410 = vmatprep.subr.bf16.mxu0 0
        %2411 = vmatpush2.bf16.msra.mxu0 0
        %2412 = vmatprep.subr.bf16.mxu0 0
        %2413 = vmatpush2.bf16.msra.mxu0 0
        %2414 = vmatprep.subr.bf16.mxu0 0
        %2415 = vmatpush2.bf16.msra.mxu0 0
        %2416 = vmatprep.subr.bf16.mxu0 0
        %2417 = vmatpush2.bf16.msra.mxu0 0
        %2418 = vmatprep.subr.bf16.mxu0 0
        %2419 = vmatpush2.bf16.msra.mxu0 0
        %2420 = vmatprep.subr.bf16.mxu0 0
        %2421 = vmatpush2.bf16.msra.mxu0 0
        %2422 = vmatprep.subr.bf16.mxu0 0
        %2423 = vmatpush2.bf16.msra.mxu0 0
        %2424 = vmatprep.subr.bf16.mxu0 0
        %2425 = vmatpush2.bf16.msra.mxu0 0
        %2426 = vmatprep.mubr.bf16.mxu0 0
        %2427 = vmatmul.mubr.bf16.gmra.mxu0 %v2389
        %v2428 = vpop.f32.mrf.mxu0
        %v2429 = vadd.f32 0.0, %v2428
        %v2430 = vpop.f32.mrf.mxu0
        %v2431 = vpop.f32.mrf.mxu0
        %v2432 = vpop.f32.mrf.mxu0
        %2433 = vdwg.mxu0
        %v2434 = vpack.c.bf16 %v2429, %v2429
        %s2435 = scalar_lea.vmem %s10, 4
        %v2436 = vld [vmem:[%s2435] sm:$0xf]
        %v2438 = vsel %vm747, %v2434, 0
        %v2441 = vsel %vm814, %v2436, 0
        %2443 = vmatprep.subr.bf16.mxu0 0
        %2444 = vmatpush1.bf16.msra.mxu0 0
        %2445 = vmatprep.subr.bf16.mxu0 0
        %2446 = vmatpush1.bf16.msra.mxu0 0
        %2447 = vmatprep.subr.bf16.mxu0 0
        %2448 = vmatpush1.bf16.msra.mxu0 0
        %2449 = vmatprep.subr.bf16.mxu0 0
        %2450 = vmatpush1.bf16.msra.mxu0 0
        %2451 = vmatprep.subr.bf16.mxu0 0
        %2452 = vmatpush1.bf16.msra.mxu0 0
        %2453 = vmatprep.subr.bf16.mxu0 0
        %2454 = vmatpush1.bf16.msra.mxu0 0
        %2455 = vmatprep.subr.bf16.mxu0 0
        %2456 = vmatpush1.bf16.msra.mxu0 0
        %2457 = vmatprep.subr.bf16.mxu0 0
        %2458 = vmatpush1.bf16.msra.mxu0 %v2441
        %2459 = vmatprep.subr.bf16.mxu0 0
        %2460 = vmatpush2.bf16.msra.mxu0 0
        %2461 = vmatprep.subr.bf16.mxu0 0
        %2462 = vmatpush2.bf16.msra.mxu0 0
        %2463 = vmatprep.subr.bf16.mxu0 0
        %2464 = vmatpush2.bf16.msra.mxu0 0
        %2465 = vmatprep.subr.bf16.mxu0 0
        %2466 = vmatpush2.bf16.msra.mxu0 0
        %2467 = vmatprep.subr.bf16.mxu0 0
        %2468 = vmatpush2.bf16.msra.mxu0 0
        %2469 = vmatprep.subr.bf16.mxu0 0
        %2470 = vmatpush2.bf16.msra.mxu0 0
        %2471 = vmatprep.subr.bf16.mxu0 0
        %2472 = vmatpush2.bf16.msra.mxu0 0
        %2473 = vmatprep.subr.bf16.mxu0 0
        %2474 = vmatpush2.bf16.msra.mxu0 0
        %2475 = vmatprep.mubr.bf16.mxu0 0
        %2476 = vmatmul.mubr.bf16.gmra.mxu0 %v2438
        %v2477 = vpop.f32.mrf.mxu0
        %v2478 = vadd.f32 0.0, %v2477
        %v2479 = vpop.f32.mrf.mxu0
        %v2480 = vpop.f32.mrf.mxu0
        %v2481 = vpop.f32.mrf.mxu0
        %2482 = vdwg.mxu0
        %v2484 = vsel %vm747, %v2319, 0
        %v2487 = vsel %vm814, %v2320, 0
        %2489 = vmatprep.subr.bf16.mxu0 0
        %2490 = vmatpush1.bf16.msra.mxu0 0
        %2491 = vmatprep.subr.bf16.mxu0 0
        %2492 = vmatpush1.bf16.msra.mxu0 0
        %2493 = vmatprep.subr.bf16.mxu0 0
        %2494 = vmatpush1.bf16.msra.mxu0 0
        %2495 = vmatprep.subr.bf16.mxu0 0
        %2496 = vmatpush1.bf16.msra.mxu0 0
        %2497 = vmatprep.subr.bf16.mxu0 0
        %2498 = vmatpush1.bf16.msra.mxu0 0
        %2499 = vmatprep.subr.bf16.mxu0 0
        %2500 = vmatpush1.bf16.msra.mxu0 0
        %2501 = vmatprep.subr.bf16.mxu0 0
        %2502 = vmatpush1.bf16.msra.mxu0 0
        %2503 = vmatprep.subr.bf16.mxu0 0
        %2504 = vmatpush1.bf16.msra.mxu0 %v2487
        %2505 = vmatprep.subr.bf16.mxu0 0
        %2506 = vmatpush2.bf16.msra.mxu0 0
        %2507 = vmatprep.subr.bf16.mxu0 0
        %2508 = vmatpush2.bf16.msra.mxu0 0
        %2509 = vmatprep.subr.bf16.mxu0 0
        %2510 = vmatpush2.bf16.msra.mxu0 0
        %2511 = vmatprep.subr.bf16.mxu0 0
        %2512 = vmatpush2.bf16.msra.mxu0 0
        %2513 = vmatprep.subr.bf16.mxu0 0
        %2514 = vmatpush2.bf16.msra.mxu0 0
        %2515 = vmatprep.subr.bf16.mxu0 0
        %2516 = vmatpush2.bf16.msra.mxu0 0
        %2517 = vmatprep.subr.bf16.mxu0 0
        %2518 = vmatpush2.bf16.msra.mxu0 0
        %2519 = vmatprep.subr.bf16.mxu0 0
        %2520 = vmatpush2.bf16.msra.mxu0 0
        %2521 = vmatprep.mubr.bf16.mxu0 0
        %2522 = vmatmul.mubr.bf16.gmra.mxu0 %v2484
        %v2523 = vpop.f32.mrf.mxu0
        %v2524 = vadd.f32 %v2478, %v2523
        %v2525 = vpop.f32.mrf.mxu0
        %v2526 = vpop.f32.mrf.mxu0
        %v2527 = vpop.f32.mrf.mxu0
        %2528 = vdwg.mxu0
        %2529 = vrot.lane.b32.xlu0 %v2207, 112
        %v2530 = vpop.permute.xlu0 %2529
        %2531 = vrot.lane.b32.xlu0 %v2208, 112
        %v2532 = vpop.permute.xlu0 %2531
        %v2534 = vsel %vm747, %v2530, 0
        %v2537 = vsel %vm747, %v2532, 0
        %2539 = vmatprep.subr.bf16.mxu0 0
        %2540 = vmatpush1.bf16.xpose.msra.mxu0 0
        %2541 = vmatprep.subr.bf16.mxu0 0
        %2542 = vmatpush1.bf16.xpose.msra.mxu0 0
        %2543 = vmatprep.subr.bf16.mxu0 0
        %2544 = vmatpush1.bf16.xpose.msra.mxu0 0
        %2545 = vmatprep.subr.bf16.mxu0 0
        %2546 = vmatpush1.bf16.xpose.msra.mxu0 0
        %2547 = vmatprep.subr.bf16.mxu0 0
        %2548 = vmatpush1.bf16.xpose.msra.mxu0 0
        %2549 = vmatprep.subr.bf16.mxu0 0
        %2550 = vmatpush1.bf16.xpose.msra.mxu0 0
        %2551 = vmatprep.subr.bf16.mxu0 0
        %2552 = vmatpush1.bf16.xpose.msra.mxu0 0
        %2553 = vmatprep.subr.bf16.mxu0 0
        %2554 = vmatpush1.bf16.xpose.msra.mxu0 %v2537
        %2555 = vmatprep.subr.bf16.mxu0 0
        %2556 = vmatpush2.bf16.xpose.msra.mxu0 0
        %2557 = vmatprep.subr.bf16.mxu0 0
        %2558 = vmatpush2.bf16.xpose.msra.mxu0 0
        %2559 = vmatprep.subr.bf16.mxu0 0
        %2560 = vmatpush2.bf16.xpose.msra.mxu0 0
        %2561 = vmatprep.subr.bf16.mxu0 0
        %2562 = vmatpush2.bf16.xpose.msra.mxu0 0
        %2563 = vmatprep.subr.bf16.mxu0 0
        %2564 = vmatpush2.bf16.xpose.msra.mxu0 0
        %2565 = vmatprep.subr.bf16.mxu0 0
        %2566 = vmatpush2.bf16.xpose.msra.mxu0 0
        %2567 = vmatprep.subr.bf16.mxu0 0
        %2568 = vmatpush2.bf16.xpose.msra.mxu0 0
        %2569 = vmatprep.subr.bf16.mxu0 0
        %2570 = vmatpush2.bf16.xpose.msra.mxu0 0
        %2571 = vmatprep.mubr.bf16.mxu0 0
        %2572 = vmatmul.mubr.bf16.gmra.mxu0 %v2534
        %v2573 = vpop.f32.mrf.mxu0
        %v2574 = vadd.f32 0.0, %v2573
        %v2575 = vpop.f32.mrf.mxu0
        %v2576 = vpop.f32.mrf.mxu0
        %v2577 = vpop.f32.mrf.mxu0
        %2578 = vdwg.mxu0
        %v2579 = vmul.f32 %v2574, 0.35355338
        %v2580 = vsel %vm2256, -1e+09, %v2579
        %v2581 = vsel %vm747, %v2580, -inf
        %2582 = vmax.xlane.f32.xlu0 %v2581
        %v2583 = vpop.xlane.xlu0 %2582
        %v2584 = vsub.f32 %v2580, %v2583
        %v2585 = vmul.f32 %v2584, 1.442695
        %v2586 = vpow.pop %v2585
        %v2587 = vsel %vm747, %v2586, 0.0
        %2588 = vadd.xlane.f32.xlu0 %v2587
        %v2589 = vpop.xlane.xlu0 %2588
        %v2590 = vrcp.pop %v2589
        %v2591 = vmul.f32 %v2586, %v2590
        %v2592 = vpack.c.bf16 %v2591, %v2591
        %2593 = vrot.lane.b32.xlu0 %v2208, 80
        %v2594 = vpop.permute.xlu0 %2593
        %v2596 = vsel %vm747, %v2592, 0
        %v2599 = vsel %vm814, %v2594, 0
        %2601 = vmatprep.subr.bf16.mxu0 0
        %2602 = vmatpush1.bf16.msra.mxu0 0
        %2603 = vmatprep.subr.bf16.mxu0 0
        %2604 = vmatpush1.bf16.msra.mxu0 0
        %2605 = vmatprep.subr.bf16.mxu0 0
        %2606 = vmatpush1.bf16.msra.mxu0 0
        %2607 = vmatprep.subr.bf16.mxu0 0
        %2608 = vmatpush1.bf16.msra.mxu0 0
        %2609 = vmatprep.subr.bf16.mxu0 0
        %2610 = vmatpush1.bf16.msra.mxu0 0
        %2611 = vmatprep.subr.bf16.mxu0 0
        %2612 = vmatpush1.bf16.msra.mxu0 0
        %2613 = vmatprep.subr.bf16.mxu0 0
        %2614 = vmatpush1.bf16.msra.mxu0 0
        %2615 = vmatprep.subr.bf16.mxu0 0
        %2616 = vmatpush1.bf16.msra.mxu0 %v2599
        %2617 = vmatprep.subr.bf16.mxu0 0
        %2618 = vmatpush2.bf16.msra.mxu0 0
        %2619 = vmatprep.subr.bf16.mxu0 0
        %2620 = vmatpush2.bf16.msra.mxu0 0
        %2621 = vmatprep.subr.bf16.mxu0 0
        %2622 = vmatpush2.bf16.msra.mxu0 0
        %2623 = vmatprep.subr.bf16.mxu0 0
        %2624 = vmatpush2.bf16.msra.mxu0 0
        %2625 = vmatprep.subr.bf16.mxu0 0
        %2626 = vmatpush2.bf16.msra.mxu0 0
        %2627 = vmatprep.subr.bf16.mxu0 0
        %2628 = vmatpush2.bf16.msra.mxu0 0
        %2629 = vmatprep.subr.bf16.mxu0 0
        %2630 = vmatpush2.bf16.msra.mxu0 0
        %2631 = vmatprep.subr.bf16.mxu0 0
        %2632 = vmatpush2.bf16.msra.mxu0 0
        %2633 = vmatprep.mubr.bf16.mxu0 0
        %2634 = vmatmul.mubr.bf16.gmra.mxu0 %v2596
        %v2635 = vpop.f32.mrf.mxu0
        %v2636 = vadd.f32 0.0, %v2635
        %v2637 = vpop.f32.mrf.mxu0
        %v2638 = vpop.f32.mrf.mxu0
        %v2639 = vpop.f32.mrf.mxu0
        %2640 = vdwg.mxu0
        %v2641 = vpack.c.bf16 %v2636, %v2636
        %s2642 = scalar_lea.vmem %s10, 8
        %v2643 = vld [vmem:[%s2642] sm:$0xf]
        %v2645 = vsel %vm747, %v2641, 0
        %v2648 = vsel %vm814, %v2643, 0
        %2650 = vmatprep.subr.bf16.mxu0 0
        %2651 = vmatpush1.bf16.msra.mxu0 0
        %2652 = vmatprep.subr.bf16.mxu0 0
        %2653 = vmatpush1.bf16.msra.mxu0 0
        %2654 = vmatprep.subr.bf16.mxu0 0
        %2655 = vmatpush1.bf16.msra.mxu0 0
        %2656 = vmatprep.subr.bf16.mxu0 0
        %2657 = vmatpush1.bf16.msra.mxu0 0
        %2658 = vmatprep.subr.bf16.mxu0 0
        %2659 = vmatpush1.bf16.msra.mxu0 0
        %2660 = vmatprep.subr.bf16.mxu0 0
        %2661 = vmatpush1.bf16.msra.mxu0 0
        %2662 = vmatprep.subr.bf16.mxu0 0
        %2663 = vmatpush1.bf16.msra.mxu0 0
        %2664 = vmatprep.subr.bf16.mxu0 0
        %2665 = vmatpush1.bf16.msra.mxu0 %v2648
        %2666 = vmatprep.subr.bf16.mxu0 0
        %2667 = vmatpush2.bf16.msra.mxu0 0
        %2668 = vmatprep.subr.bf16.mxu0 0
        %2669 = vmatpush2.bf16.msra.mxu0 0
        %2670 = vmatprep.subr.bf16.mxu0 0
        %2671 = vmatpush2.bf16.msra.mxu0 0
        %2672 = vmatprep.subr.bf16.mxu0 0
        %2673 = vmatpush2.bf16.msra.mxu0 0
        %2674 = vmatprep.subr.bf16.mxu0 0
        %2675 = vmatpush2.bf16.msra.mxu0 0
        %2676 = vmatprep.subr.bf16.mxu0 0
        %2677 = vmatpush2.bf16.msra.mxu0 0
        %2678 = vmatprep.subr.bf16.mxu0 0
        %2679 = vmatpush2.bf16.msra.mxu0 0
        %2680 = vmatprep.subr.bf16.mxu0 0
        %2681 = vmatpush2.bf16.msra.mxu0 0
        %2682 = vmatprep.mubr.bf16.mxu0 0
        %2683 = vmatmul.mubr.bf16.gmra.mxu0 %v2645
        %v2684 = vpop.f32.mrf.mxu0
        %v2685 = vadd.f32 0.0, %v2684
        %v2686 = vpop.f32.mrf.mxu0
        %v2687 = vpop.f32.mrf.mxu0
        %v2688 = vpop.f32.mrf.mxu0
        %2689 = vdwg.mxu0
        %v2690 = vadd.f32 %v2524, %v2685
        %2691 = vrot.lane.b32.xlu0 %v2207, 104
        %v2692 = vpop.permute.xlu0 %2691
        %2693 = vrot.lane.b32.xlu0 %v2208, 104
        %v2694 = vpop.permute.xlu0 %2693
        %v2696 = vsel %vm747, %v2692, 0
        %v2699 = vsel %vm747, %v2694, 0
        %2701 = vmatprep.subr.bf16.mxu0 0
        %2702 = vmatpush1.bf16.xpose.msra.mxu0 0
        %2703 = vmatprep.subr.bf16.mxu0 0
        %2704 = vmatpush1.bf16.xpose.msra.mxu0 0
        %2705 = vmatprep.subr.bf16.mxu0 0
        %2706 = vmatpush1.bf16.xpose.msra.mxu0 0
        %2707 = vmatprep.subr.bf16.mxu0 0
        %2708 = vmatpush1.bf16.xpose.msra.mxu0 0
        %2709 = vmatprep.subr.bf16.mxu0 0
        %2710 = vmatpush1.bf16.xpose.msra.mxu0 0
        %2711 = vmatprep.subr.bf16.mxu0 0
        %2712 = vmatpush1.bf16.xpose.msra.mxu0 0
        %2713 = vmatprep.subr.bf16.mxu0 0
        %2714 = vmatpush1.bf16.xpose.msra.mxu0 0
        %2715 = vmatprep.subr.bf16.mxu0 0
        %2716 = vmatpush1.bf16.xpose.msra.mxu0 %v2699
        %2717 = vmatprep.subr.bf16.mxu0 0
        %2718 = vmatpush2.bf16.xpose.msra.mxu0 0
        %2719 = vmatprep.subr.bf16.mxu0 0
        %2720 = vmatpush2.bf16.xpose.msra.mxu0 0
        %2721 = vmatprep.subr.bf16.mxu0 0
        %2722 = vmatpush2.bf16.xpose.msra.mxu0 0
        %2723 = vmatprep.subr.bf16.mxu0 0
        %2724 = vmatpush2.bf16.xpose.msra.mxu0 0
        %2725 = vmatprep.subr.bf16.mxu0 0
        %2726 = vmatpush2.bf16.xpose.msra.mxu0 0
        %2727 = vmatprep.subr.bf16.mxu0 0
        %2728 = vmatpush2.bf16.xpose.msra.mxu0 0
        %2729 = vmatprep.subr.bf16.mxu0 0
        %2730 = vmatpush2.bf16.xpose.msra.mxu0 0
        %2731 = vmatprep.subr.bf16.mxu0 0
        %2732 = vmatpush2.bf16.xpose.msra.mxu0 0
        %2733 = vmatprep.mubr.bf16.mxu0 0
        %2734 = vmatmul.mubr.bf16.gmra.mxu0 %v2696
        %v2735 = vpop.f32.mrf.mxu0
        %v2736 = vadd.f32 0.0, %v2735
        %v2737 = vpop.f32.mrf.mxu0
        %v2738 = vpop.f32.mrf.mxu0
        %v2739 = vpop.f32.mrf.mxu0
        %2740 = vdwg.mxu0
        %v2741 = vmul.f32 %v2736, 0.35355338
        %v2742 = vsel %vm2256, -1e+09, %v2741
        %v2743 = vsel %vm747, %v2742, -inf
        %2744 = vmax.xlane.f32.xlu0 %v2743
        %v2745 = vpop.xlane.xlu0 %2744
        %v2746 = vsub.f32 %v2742, %v2745
        %v2747 = vmul.f32 %v2746, 1.442695
        %v2748 = vpow.pop %v2747
        %v2749 = vsel %vm747, %v2748, 0.0
        %2750 = vadd.xlane.f32.xlu0 %v2749
        %v2751 = vpop.xlane.xlu0 %2750
        %v2752 = vrcp.pop %v2751
        %v2753 = vmul.f32 %v2748, %v2752
        %v2754 = vpack.c.bf16 %v2753, %v2753
        %2755 = vrot.lane.b32.xlu0 %v2208, 72
        %v2756 = vpop.permute.xlu0 %2755
        %v2758 = vsel %vm747, %v2754, 0
        %v2761 = vsel %vm814, %v2756, 0
        %2763 = vmatprep.subr.bf16.mxu0 0
        %2764 = vmatpush1.bf16.msra.mxu0 0
        %2765 = vmatprep.subr.bf16.mxu0 0
        %2766 = vmatpush1.bf16.msra.mxu0 0
        %2767 = vmatprep.subr.bf16.mxu0 0
        %2768 = vmatpush1.bf16.msra.mxu0 0
        %2769 = vmatprep.subr.bf16.mxu0 0
        %2770 = vmatpush1.bf16.msra.mxu0 0
        %2771 = vmatprep.subr.bf16.mxu0 0
        %2772 = vmatpush1.bf16.msra.mxu0 0
        %2773 = vmatprep.subr.bf16.mxu0 0
        %2774 = vmatpush1.bf16.msra.mxu0 0
        %2775 = vmatprep.subr.bf16.mxu0 0
        %2776 = vmatpush1.bf16.msra.mxu0 0
        %2777 = vmatprep.subr.bf16.mxu0 0
        %2778 = vmatpush1.bf16.msra.mxu0 %v2761
        %2779 = vmatprep.subr.bf16.mxu0 0
        %2780 = vmatpush2.bf16.msra.mxu0 0
        %2781 = vmatprep.subr.bf16.mxu0 0
        %2782 = vmatpush2.bf16.msra.mxu0 0
        %2783 = vmatprep.subr.bf16.mxu0 0
        %2784 = vmatpush2.bf16.msra.mxu0 0
        %2785 = vmatprep.subr.bf16.mxu0 0
        %2786 = vmatpush2.bf16.msra.mxu0 0
        %2787 = vmatprep.subr.bf16.mxu0 0
        %2788 = vmatpush2.bf16.msra.mxu0 0
        %2789 = vmatprep.subr.bf16.mxu0 0
        %2790 = vmatpush2.bf16.msra.mxu0 0
        %2791 = vmatprep.subr.bf16.mxu0 0
        %2792 = vmatpush2.bf16.msra.mxu0 0
        %2793 = vmatprep.subr.bf16.mxu0 0
        %2794 = vmatpush2.bf16.msra.mxu0 0
        %2795 = vmatprep.mubr.bf16.mxu0 0
        %2796 = vmatmul.mubr.bf16.gmra.mxu0 %v2758
        %v2797 = vpop.f32.mrf.mxu0
        %v2798 = vadd.f32 0.0, %v2797
        %v2799 = vpop.f32.mrf.mxu0
        %v2800 = vpop.f32.mrf.mxu0
        %v2801 = vpop.f32.mrf.mxu0
        %2802 = vdwg.mxu0
        %v2803 = vpack.c.bf16 %v2798, %v2798
        %s2804 = scalar_lea.vmem %s10, 12
        %v2805 = vld [vmem:[%s2804] sm:$0xf]
        %v2807 = vsel %vm747, %v2803, 0
        %v2810 = vsel %vm814, %v2805, 0
        %2812 = vmatprep.subr.bf16.mxu0 0
        %2813 = vmatpush1.bf16.msra.mxu0 0
        %2814 = vmatprep.subr.bf16.mxu0 0
        %2815 = vmatpush1.bf16.msra.mxu0 0
        %2816 = vmatprep.subr.bf16.mxu0 0
        %2817 = vmatpush1.bf16.msra.mxu0 0
        %2818 = vmatprep.subr.bf16.mxu0 0
        %2819 = vmatpush1.bf16.msra.mxu0 0
        %2820 = vmatprep.subr.bf16.mxu0 0
        %2821 = vmatpush1.bf16.msra.mxu0 0
        %2822 = vmatprep.subr.bf16.mxu0 0
        %2823 = vmatpush1.bf16.msra.mxu0 0
        %2824 = vmatprep.subr.bf16.mxu0 0
        %2825 = vmatpush1.bf16.msra.mxu0 0
        %2826 = vmatprep.subr.bf16.mxu0 0
        %2827 = vmatpush1.bf16.msra.mxu0 %v2810
        %2828 = vmatprep.subr.bf16.mxu0 0
        %2829 = vmatpush2.bf16.msra.mxu0 0
        %2830 = vmatprep.subr.bf16.mxu0 0
        %2831 = vmatpush2.bf16.msra.mxu0 0
        %2832 = vmatprep.subr.bf16.mxu0 0
        %2833 = vmatpush2.bf16.msra.mxu0 0
        %2834 = vmatprep.subr.bf16.mxu0 0
        %2835 = vmatpush2.bf16.msra.mxu0 0
        %2836 = vmatprep.subr.bf16.mxu0 0
        %2837 = vmatpush2.bf16.msra.mxu0 0
        %2838 = vmatprep.subr.bf16.mxu0 0
        %2839 = vmatpush2.bf16.msra.mxu0 0
        %2840 = vmatprep.subr.bf16.mxu0 0
        %2841 = vmatpush2.bf16.msra.mxu0 0
        %2842 = vmatprep.subr.bf16.mxu0 0
        %2843 = vmatpush2.bf16.msra.mxu0 0
        %2844 = vmatprep.mubr.bf16.mxu0 0
        %2845 = vmatmul.mubr.bf16.gmra.mxu0 %v2807
        %v2846 = vpop.f32.mrf.mxu0
        %v2847 = vadd.f32 0.0, %v2846
        %v2848 = vpop.f32.mrf.mxu0
        %v2849 = vpop.f32.mrf.mxu0
        %v2850 = vpop.f32.mrf.mxu0
        %2851 = vdwg.mxu0
        %v2852 = vadd.f32 %v2690, %v2847
        %s2853 = scalar_lea.vmem %s558, 4
        %v2854 = vld [vmem:[%s2853] sm:$0xf]
        %v2855 = vunpack.c.l.bf16 %v2854
        %v2856 = vpack.c.bf16 %v2137, %v2137
        %v2857 = vpack.c.bf16 %v2202, %v2202
        %v2859 = vsel %vm747, %v2856, 0
        %v2862 = vsel %vm747, %v2857, 0
        %2864 = vmatprep.subr.bf16.mxu0 0
        %2865 = vmatpush1.bf16.xpose.msra.mxu0 0
        %2866 = vmatprep.subr.bf16.mxu0 0
        %2867 = vmatpush1.bf16.xpose.msra.mxu0 0
        %2868 = vmatprep.subr.bf16.mxu0 0
        %2869 = vmatpush1.bf16.xpose.msra.mxu0 0
        %2870 = vmatprep.subr.bf16.mxu0 0
        %2871 = vmatpush1.bf16.xpose.msra.mxu0 0
        %2872 = vmatprep.subr.bf16.mxu0 0
        %2873 = vmatpush1.bf16.xpose.msra.mxu0 0
        %2874 = vmatprep.subr.bf16.mxu0 0
        %2875 = vmatpush1.bf16.xpose.msra.mxu0 0
        %2876 = vmatprep.subr.bf16.mxu0 0
        %2877 = vmatpush1.bf16.xpose.msra.mxu0 0
        %2878 = vmatprep.subr.bf16.mxu0 0
        %2879 = vmatpush1.bf16.xpose.msra.mxu0 %v2862
        %2880 = vmatprep.subr.bf16.mxu0 0
        %2881 = vmatpush2.bf16.xpose.msra.mxu0 0
        %2882 = vmatprep.subr.bf16.mxu0 0
        %2883 = vmatpush2.bf16.xpose.msra.mxu0 0
        %2884 = vmatprep.subr.bf16.mxu0 0
        %2885 = vmatpush2.bf16.xpose.msra.mxu0 0
        %2886 = vmatprep.subr.bf16.mxu0 0
        %2887 = vmatpush2.bf16.xpose.msra.mxu0 0
        %2888 = vmatprep.subr.bf16.mxu0 0
        %2889 = vmatpush2.bf16.xpose.msra.mxu0 0
        %2890 = vmatprep.subr.bf16.mxu0 0
        %2891 = vmatpush2.bf16.xpose.msra.mxu0 0
        %2892 = vmatprep.subr.bf16.mxu0 0
        %2893 = vmatpush2.bf16.xpose.msra.mxu0 0
        %2894 = vmatprep.subr.bf16.mxu0 0
        %2895 = vmatpush2.bf16.xpose.msra.mxu0 0
        %2896 = vmatprep.mubr.bf16.mxu0 0
        %2897 = vmatmul.mubr.bf16.gmra.mxu0 %v2859
        %v2898 = vpop.f32.mrf.mxu0
        %v2899 = vadd.f32 0.0, %v2898
        %v2900 = vpop.f32.mrf.mxu0
        %v2901 = vpop.f32.mrf.mxu0
        %v2902 = vpop.f32.mrf.mxu0
        %2903 = vdwg.mxu0
        %v2904 = vmul.f32 %v2899, 0.35355338
        %vm2905 = vcmp.eq.f32.partialorder %v2855, 0.0
        %v2906 = vsel %vm2905, -1e+09, %v2904
        %v2907 = vsel %vm747, %v2906, -inf
        %2908 = vmax.xlane.f32.xlu0 %v2907
        %v2909 = vpop.xlane.xlu0 %2908
        %v2910 = vsub.f32 %v2906, %v2909
        %v2911 = vmul.f32 %v2910, 1.442695
        %v2912 = vpow.pop %v2911
        %v2913 = vsel %vm747, %v2912, 0.0
        %2914 = vadd.xlane.f32.xlu0 %v2913
        %v2915 = vpop.xlane.xlu0 %2914
        %v2916 = vrcp.pop %v2915
        %v2917 = vmul.f32 %v2912, %v2916
        %v2918 = vpack.c.bf16 %v2917, %v2917
        %2920 = vrot.lane.b32.xlu0 %v2857, 96
        %v2921 = vpop.permute.xlu0 %2920
        %v2923 = vsel %vm747, %v2918, 0
        %v2926 = vsel %vm814, %v2921, 0
        %2928 = vmatprep.subr.bf16.mxu0 0
        %2929 = vmatpush1.bf16.msra.mxu0 0
        %2930 = vmatprep.subr.bf16.mxu0 0
        %2931 = vmatpush1.bf16.msra.mxu0 0
        %2932 = vmatprep.subr.bf16.mxu0 0
        %2933 = vmatpush1.bf16.msra.mxu0 0
        %2934 = vmatprep.subr.bf16.mxu0 0
        %2935 = vmatpush1.bf16.msra.mxu0 0
        %2936 = vmatprep.subr.bf16.mxu0 0
        %2937 = vmatpush1.bf16.msra.mxu0 0
        %2938 = vmatprep.subr.bf16.mxu0 0
        %2939 = vmatpush1.bf16.msra.mxu0 0
        %2940 = vmatprep.subr.bf16.mxu0 0
        %2941 = vmatpush1.bf16.msra.mxu0 0
        %2942 = vmatprep.subr.bf16.mxu0 0
        %2943 = vmatpush1.bf16.msra.mxu0 %v2926
        %2944 = vmatprep.subr.bf16.mxu0 0
        %2945 = vmatpush2.bf16.msra.mxu0 0
        %2946 = vmatprep.subr.bf16.mxu0 0
        %2947 = vmatpush2.bf16.msra.mxu0 0
        %2948 = vmatprep.subr.bf16.mxu0 0
        %2949 = vmatpush2.bf16.msra.mxu0 0
        %2950 = vmatprep.subr.bf16.mxu0 0
        %2951 = vmatpush2.bf16.msra.mxu0 0
        %2952 = vmatprep.subr.bf16.mxu0 0
        %2953 = vmatpush2.bf16.msra.mxu0 0
        %2954 = vmatprep.subr.bf16.mxu0 0
        %2955 = vmatpush2.bf16.msra.mxu0 0
        %2956 = vmatprep.subr.bf16.mxu0 0
        %2957 = vmatpush2.bf16.msra.mxu0 0
        %2958 = vmatprep.subr.bf16.mxu0 0
        %2959 = vmatpush2.bf16.msra.mxu0 0
        %2960 = vmatprep.mubr.bf16.mxu0 0
        %2961 = vmatmul.mubr.bf16.gmra.mxu0 %v2923
        %v2962 = vpop.f32.mrf.mxu0
        %v2963 = vadd.f32 0.0, %v2962
        %v2964 = vpop.f32.mrf.mxu0
        %v2965 = vpop.f32.mrf.mxu0
        %v2966 = vpop.f32.mrf.mxu0
        %2967 = vdwg.mxu0
        %v2968 = vpack.c.bf16 %v2963, %v2963
        %2970 = vrot.lane.b32.xlu0 %v2856, 120
        %v2971 = vpop.permute.xlu0 %2970
        %2972 = vrot.lane.b32.xlu0 %v2857, 120
        %v2973 = vpop.permute.xlu0 %2972
        %v2975 = vsel %vm747, %v2971, 0
        %v2978 = vsel %vm747, %v2973, 0
        %2980 = vmatprep.subr.bf16.mxu0 0
        %2981 = vmatpush1.bf16.xpose.msra.mxu0 0
        %2982 = vmatprep.subr.bf16.mxu0 0
        %2983 = vmatpush1.bf16.xpose.msra.mxu0 0
        %2984 = vmatprep.subr.bf16.mxu0 0
        %2985 = vmatpush1.bf16.xpose.msra.mxu0 0
        %2986 = vmatprep.subr.bf16.mxu0 0
        %2987 = vmatpush1.bf16.xpose.msra.mxu0 0
        %2988 = vmatprep.subr.bf16.mxu0 0
        %2989 = vmatpush1.bf16.xpose.msra.mxu0 0
        %2990 = vmatprep.subr.bf16.mxu0 0
        %2991 = vmatpush1.bf16.xpose.msra.mxu0 0
        %2992 = vmatprep.subr.bf16.mxu0 0
        %2993 = vmatpush1.bf16.xpose.msra.mxu0 0
        %2994 = vmatprep.subr.bf16.mxu0 0
        %2995 = vmatpush1.bf16.xpose.msra.mxu0 %v2978
        %2996 = vmatprep.subr.bf16.mxu0 0
        %2997 = vmatpush2.bf16.xpose.msra.mxu0 0
        %2998 = vmatprep.subr.bf16.mxu0 0
        %2999 = vmatpush2.bf16.xpose.msra.mxu0 0
        %3000 = vmatprep.subr.bf16.mxu0 0
        %3001 = vmatpush2.bf16.xpose.msra.mxu0 0
        %3002 = vmatprep.subr.bf16.mxu0 0
        %3003 = vmatpush2.bf16.xpose.msra.mxu0 0
        %3004 = vmatprep.subr.bf16.mxu0 0
        %3005 = vmatpush2.bf16.xpose.msra.mxu0 0
        %3006 = vmatprep.subr.bf16.mxu0 0
        %3007 = vmatpush2.bf16.xpose.msra.mxu0 0
        %3008 = vmatprep.subr.bf16.mxu0 0
        %3009 = vmatpush2.bf16.xpose.msra.mxu0 0
        %3010 = vmatprep.subr.bf16.mxu0 0
        %3011 = vmatpush2.bf16.xpose.msra.mxu0 0
        %3012 = vmatprep.mubr.bf16.mxu0 0
        %3013 = vmatmul.mubr.bf16.gmra.mxu0 %v2975
        %v3014 = vpop.f32.mrf.mxu0
        %v3015 = vadd.f32 0.0, %v3014
        %v3016 = vpop.f32.mrf.mxu0
        %v3017 = vpop.f32.mrf.mxu0
        %v3018 = vpop.f32.mrf.mxu0
        %3019 = vdwg.mxu0
        %v3020 = vmul.f32 %v3015, 0.35355338
        %v3021 = vsel %vm2905, -1e+09, %v3020
        %v3022 = vsel %vm747, %v3021, -inf
        %3023 = vmax.xlane.f32.xlu0 %v3022
        %v3024 = vpop.xlane.xlu0 %3023
        %v3025 = vsub.f32 %v3021, %v3024
        %v3026 = vmul.f32 %v3025, 1.442695
        %v3027 = vpow.pop %v3026
        %v3028 = vsel %vm747, %v3027, 0.0
        %3029 = vadd.xlane.f32.xlu0 %v3028
        %v3030 = vpop.xlane.xlu0 %3029
        %v3031 = vrcp.pop %v3030
        %v3032 = vmul.f32 %v3027, %v3031
        %v3033 = vpack.c.bf16 %v3032, %v3032
        %3034 = vrot.lane.b32.xlu0 %v2857, 88
        %v3035 = vpop.permute.xlu0 %3034
        %v3037 = vsel %vm747, %v3033, 0
        %v3040 = vsel %vm814, %v3035, 0
        %3042 = vmatprep.subr.bf16.mxu0 0
        %3043 = vmatpush1.bf16.msra.mxu0 0
        %3044 = vmatprep.subr.bf16.mxu0 0
        %3045 = vmatpush1.bf16.msra.mxu0 0
        %3046 = vmatprep.subr.bf16.mxu0 0
        %3047 = vmatpush1.bf16.msra.mxu0 0
        %3048 = vmatprep.subr.bf16.mxu0 0
        %3049 = vmatpush1.bf16.msra.mxu0 0
        %3050 = vmatprep.subr.bf16.mxu0 0
        %3051 = vmatpush1.bf16.msra.mxu0 0
        %3052 = vmatprep.subr.bf16.mxu0 0
        %3053 = vmatpush1.bf16.msra.mxu0 0
        %3054 = vmatprep.subr.bf16.mxu0 0
        %3055 = vmatpush1.bf16.msra.mxu0 0
        %3056 = vmatprep.subr.bf16.mxu0 0
        %3057 = vmatpush1.bf16.msra.mxu0 %v3040
        %3058 = vmatprep.subr.bf16.mxu0 0
        %3059 = vmatpush2.bf16.msra.mxu0 0
        %3060 = vmatprep.subr.bf16.mxu0 0
        %3061 = vmatpush2.bf16.msra.mxu0 0
        %3062 = vmatprep.subr.bf16.mxu0 0
        %3063 = vmatpush2.bf16.msra.mxu0 0
        %3064 = vmatprep.subr.bf16.mxu0 0
        %3065 = vmatpush2.bf16.msra.mxu0 0
        %3066 = vmatprep.subr.bf16.mxu0 0
        %3067 = vmatpush2.bf16.msra.mxu0 0
        %3068 = vmatprep.subr.bf16.mxu0 0
        %3069 = vmatpush2.bf16.msra.mxu0 0
        %3070 = vmatprep.subr.bf16.mxu0 0
        %3071 = vmatpush2.bf16.msra.mxu0 0
        %3072 = vmatprep.subr.bf16.mxu0 0
        %3073 = vmatpush2.bf16.msra.mxu0 0
        %3074 = vmatprep.mubr.bf16.mxu0 0
        %3075 = vmatmul.mubr.bf16.gmra.mxu0 %v3037
        %v3076 = vpop.f32.mrf.mxu0
        %v3077 = vadd.f32 0.0, %v3076
        %v3078 = vpop.f32.mrf.mxu0
        %v3079 = vpop.f32.mrf.mxu0
        %v3080 = vpop.f32.mrf.mxu0
        %3081 = vdwg.mxu0
        %v3082 = vpack.c.bf16 %v3077, %v3077
        %v3084 = vsel %vm747, %v3082, 0
        %3086 = vmatprep.subr.bf16.mxu0 0
        %3087 = vmatpush1.bf16.msra.mxu0 0
        %3088 = vmatprep.subr.bf16.mxu0 0
        %3089 = vmatpush1.bf16.msra.mxu0 0
        %3090 = vmatprep.subr.bf16.mxu0 0
        %3091 = vmatpush1.bf16.msra.mxu0 0
        %3092 = vmatprep.subr.bf16.mxu0 0
        %3093 = vmatpush1.bf16.msra.mxu0 0
        %3094 = vmatprep.subr.bf16.mxu0 0
        %3095 = vmatpush1.bf16.msra.mxu0 0
        %3096 = vmatprep.subr.bf16.mxu0 0
        %3097 = vmatpush1.bf16.msra.mxu0 0
        %3098 = vmatprep.subr.bf16.mxu0 0
        %3099 = vmatpush1.bf16.msra.mxu0 0
        %3100 = vmatprep.subr.bf16.mxu0 0
        %3101 = vmatpush1.bf16.msra.mxu0 %v2441
        %3102 = vmatprep.subr.bf16.mxu0 0
        %3103 = vmatpush2.bf16.msra.mxu0 0
        %3104 = vmatprep.subr.bf16.mxu0 0
        %3105 = vmatpush2.bf16.msra.mxu0 0
        %3106 = vmatprep.subr.bf16.mxu0 0
        %3107 = vmatpush2.bf16.msra.mxu0 0
        %3108 = vmatprep.subr.bf16.mxu0 0
        %3109 = vmatpush2.bf16.msra.mxu0 0
        %3110 = vmatprep.subr.bf16.mxu0 0
        %3111 = vmatpush2.bf16.msra.mxu0 0
        %3112 = vmatprep.subr.bf16.mxu0 0
        %3113 = vmatpush2.bf16.msra.mxu0 0
        %3114 = vmatprep.subr.bf16.mxu0 0
        %3115 = vmatpush2.bf16.msra.mxu0 0
        %3116 = vmatprep.subr.bf16.mxu0 0
        %3117 = vmatpush2.bf16.msra.mxu0 0
        %3118 = vmatprep.mubr.bf16.mxu0 0
        %3119 = vmatmul.mubr.bf16.gmra.mxu0 %v3084
        %v3120 = vpop.f32.mrf.mxu0
        %v3121 = vadd.f32 0.0, %v3120
        %v3122 = vpop.f32.mrf.mxu0
        %v3123 = vpop.f32.mrf.mxu0
        %v3124 = vpop.f32.mrf.mxu0
        %3125 = vdwg.mxu0
        %v3127 = vsel %vm747, %v2968, 0
        %3129 = vmatprep.subr.bf16.mxu0 0
        %3130 = vmatpush1.bf16.msra.mxu0 0
        %3131 = vmatprep.subr.bf16.mxu0 0
        %3132 = vmatpush1.bf16.msra.mxu0 0
        %3133 = vmatprep.subr.bf16.mxu0 0
        %3134 = vmatpush1.bf16.msra.mxu0 0
        %3135 = vmatprep.subr.bf16.mxu0 0
        %3136 = vmatpush1.bf16.msra.mxu0 0
        %3137 = vmatprep.subr.bf16.mxu0 0
        %3138 = vmatpush1.bf16.msra.mxu0 0
        %3139 = vmatprep.subr.bf16.mxu0 0
        %3140 = vmatpush1.bf16.msra.mxu0 0
        %3141 = vmatprep.subr.bf16.mxu0 0
        %3142 = vmatpush1.bf16.msra.mxu0 0
        %3143 = vmatprep.subr.bf16.mxu0 0
        %3144 = vmatpush1.bf16.msra.mxu0 %v2487
        %3145 = vmatprep.subr.bf16.mxu0 0
        %3146 = vmatpush2.bf16.msra.mxu0 0
        %3147 = vmatprep.subr.bf16.mxu0 0
        %3148 = vmatpush2.bf16.msra.mxu0 0
        %3149 = vmatprep.subr.bf16.mxu0 0
        %3150 = vmatpush2.bf16.msra.mxu0 0
        %3151 = vmatprep.subr.bf16.mxu0 0
        %3152 = vmatpush2.bf16.msra.mxu0 0
        %3153 = vmatprep.subr.bf16.mxu0 0
        %3154 = vmatpush2.bf16.msra.mxu0 0
        %3155 = vmatprep.subr.bf16.mxu0 0
        %3156 = vmatpush2.bf16.msra.mxu0 0
        %3157 = vmatprep.subr.bf16.mxu0 0
        %3158 = vmatpush2.bf16.msra.mxu0 0
        %3159 = vmatprep.subr.bf16.mxu0 0
        %3160 = vmatpush2.bf16.msra.mxu0 0
        %3161 = vmatprep.mubr.bf16.mxu0 0
        %3162 = vmatmul.mubr.bf16.gmra.mxu0 %v3127
        %v3163 = vpop.f32.mrf.mxu0
        %v3164 = vadd.f32 %v3121, %v3163
        %v3165 = vpop.f32.mrf.mxu0
        %v3166 = vpop.f32.mrf.mxu0
        %v3167 = vpop.f32.mrf.mxu0
        %3168 = vdwg.mxu0
        %3169 = vrot.lane.b32.xlu0 %v2856, 112
        %v3170 = vpop.permute.xlu0 %3169
        %3171 = vrot.lane.b32.xlu0 %v2857, 112
        %v3172 = vpop.permute.xlu0 %3171
        %v3174 = vsel %vm747, %v3170, 0
        %v3177 = vsel %vm747, %v3172, 0
        %3179 = vmatprep.subr.bf16.mxu0 0
        %3180 = vmatpush1.bf16.xpose.msra.mxu0 0
        %3181 = vmatprep.subr.bf16.mxu0 0
        %3182 = vmatpush1.bf16.xpose.msra.mxu0 0
        %3183 = vmatprep.subr.bf16.mxu0 0
        %3184 = vmatpush1.bf16.xpose.msra.mxu0 0
        %3185 = vmatprep.subr.bf16.mxu0 0
        %3186 = vmatpush1.bf16.xpose.msra.mxu0 0
        %3187 = vmatprep.subr.bf16.mxu0 0
        %3188 = vmatpush1.bf16.xpose.msra.mxu0 0
        %3189 = vmatprep.subr.bf16.mxu0 0
        %3190 = vmatpush1.bf16.xpose.msra.mxu0 0
        %3191 = vmatprep.subr.bf16.mxu0 0
        %3192 = vmatpush1.bf16.xpose.msra.mxu0 0
        %3193 = vmatprep.subr.bf16.mxu0 0
        %3194 = vmatpush1.bf16.xpose.msra.mxu0 %v3177
        %3195 = vmatprep.subr.bf16.mxu0 0
        %3196 = vmatpush2.bf16.xpose.msra.mxu0 0
        %3197 = vmatprep.subr.bf16.mxu0 0
        %3198 = vmatpush2.bf16.xpose.msra.mxu0 0
        %3199 = vmatprep.subr.bf16.mxu0 0
        %3200 = vmatpush2.bf16.xpose.msra.mxu0 0
        %3201 = vmatprep.subr.bf16.mxu0 0
        %3202 = vmatpush2.bf16.xpose.msra.mxu0 0
        %3203 = vmatprep.subr.bf16.mxu0 0
        %3204 = vmatpush2.bf16.xpose.msra.mxu0 0
        %3205 = vmatprep.subr.bf16.mxu0 0
        %3206 = vmatpush2.bf16.xpose.msra.mxu0 0
        %3207 = vmatprep.subr.bf16.mxu0 0
        %3208 = vmatpush2.bf16.xpose.msra.mxu0 0
        %3209 = vmatprep.subr.bf16.mxu0 0
        %3210 = vmatpush2.bf16.xpose.msra.mxu0 0
        %3211 = vmatprep.mubr.bf16.mxu0 0
        %3212 = vmatmul.mubr.bf16.gmra.mxu0 %v3174
        %v3213 = vpop.f32.mrf.mxu0
        %v3214 = vadd.f32 0.0, %v3213
        %v3215 = vpop.f32.mrf.mxu0
        %v3216 = vpop.f32.mrf.mxu0
        %v3217 = vpop.f32.mrf.mxu0
        %3218 = vdwg.mxu0
        %v3219 = vmul.f32 %v3214, 0.35355338
        %v3220 = vsel %vm2905, -1e+09, %v3219
        %v3221 = vsel %vm747, %v3220, -inf
        %3222 = vmax.xlane.f32.xlu0 %v3221
        %v3223 = vpop.xlane.xlu0 %3222
        %v3224 = vsub.f32 %v3220, %v3223
        %v3225 = vmul.f32 %v3224, 1.442695
        %v3226 = vpow.pop %v3225
        %v3227 = vsel %vm747, %v3226, 0.0
        %3228 = vadd.xlane.f32.xlu0 %v3227
        %v3229 = vpop.xlane.xlu0 %3228
        %v3230 = vrcp.pop %v3229
        %v3231 = vmul.f32 %v3226, %v3230
        %v3232 = vpack.c.bf16 %v3231, %v3231
        %3233 = vrot.lane.b32.xlu0 %v2857, 80
        %v3234 = vpop.permute.xlu0 %3233
        %v3236 = vsel %vm747, %v3232, 0
        %v3239 = vsel %vm814, %v3234, 0
        %3241 = vmatprep.subr.bf16.mxu0 0
        %3242 = vmatpush1.bf16.msra.mxu0 0
        %3243 = vmatprep.subr.bf16.mxu0 0
        %3244 = vmatpush1.bf16.msra.mxu0 0
        %3245 = vmatprep.subr.bf16.mxu0 0
        %3246 = vmatpush1.bf16.msra.mxu0 0
        %3247 = vmatprep.subr.bf16.mxu0 0
        %3248 = vmatpush1.bf16.msra.mxu0 0
        %3249 = vmatprep.subr.bf16.mxu0 0
        %3250 = vmatpush1.bf16.msra.mxu0 0
        %3251 = vmatprep.subr.bf16.mxu0 0
        %3252 = vmatpush1.bf16.msra.mxu0 0
        %3253 = vmatprep.subr.bf16.mxu0 0
        %3254 = vmatpush1.bf16.msra.mxu0 0
        %3255 = vmatprep.subr.bf16.mxu0 0
        %3256 = vmatpush1.bf16.msra.mxu0 %v3239
        %3257 = vmatprep.subr.bf16.mxu0 0
        %3258 = vmatpush2.bf16.msra.mxu0 0
        %3259 = vmatprep.subr.bf16.mxu0 0
        %3260 = vmatpush2.bf16.msra.mxu0 0
        %3261 = vmatprep.subr.bf16.mxu0 0
        %3262 = vmatpush2.bf16.msra.mxu0 0
        %3263 = vmatprep.subr.bf16.mxu0 0
        %3264 = vmatpush2.bf16.msra.mxu0 0
        %3265 = vmatprep.subr.bf16.mxu0 0
        %3266 = vmatpush2.bf16.msra.mxu0 0
        %3267 = vmatprep.subr.bf16.mxu0 0
        %3268 = vmatpush2.bf16.msra.mxu0 0
        %3269 = vmatprep.subr.bf16.mxu0 0
        %3270 = vmatpush2.bf16.msra.mxu0 0
        %3271 = vmatprep.subr.bf16.mxu0 0
        %3272 = vmatpush2.bf16.msra.mxu0 0
        %3273 = vmatprep.mubr.bf16.mxu0 0
        %3274 = vmatmul.mubr.bf16.gmra.mxu0 %v3236
        %v3275 = vpop.f32.mrf.mxu0
        %v3276 = vadd.f32 0.0, %v3275
        %v3277 = vpop.f32.mrf.mxu0
        %v3278 = vpop.f32.mrf.mxu0
        %v3279 = vpop.f32.mrf.mxu0
        %3280 = vdwg.mxu0
        %v3281 = vpack.c.bf16 %v3276, %v3276
        %v3283 = vsel %vm747, %v3281, 0
        %3285 = vmatprep.subr.bf16.mxu0 0
        %3286 = vmatpush1.bf16.msra.mxu0 0
        %3287 = vmatprep.subr.bf16.mxu0 0
        %3288 = vmatpush1.bf16.msra.mxu0 0
        %3289 = vmatprep.subr.bf16.mxu0 0
        %3290 = vmatpush1.bf16.msra.mxu0 0
        %3291 = vmatprep.subr.bf16.mxu0 0
        %3292 = vmatpush1.bf16.msra.mxu0 0
        %3293 = vmatprep.subr.bf16.mxu0 0
        %3294 = vmatpush1.bf16.msra.mxu0 0
        %3295 = vmatprep.subr.bf16.mxu0 0
        %3296 = vmatpush1.bf16.msra.mxu0 0
        %3297 = vmatprep.subr.bf16.mxu0 0
        %3298 = vmatpush1.bf16.msra.mxu0 0
        %3299 = vmatprep.subr.bf16.mxu0 0
        %3300 = vmatpush1.bf16.msra.mxu0 %v2648
        %3301 = vmatprep.subr.bf16.mxu0 0
        %3302 = vmatpush2.bf16.msra.mxu0 0
        %3303 = vmatprep.subr.bf16.mxu0 0
        %3304 = vmatpush2.bf16.msra.mxu0 0
        %3305 = vmatprep.subr.bf16.mxu0 0
        %3306 = vmatpush2.bf16.msra.mxu0 0
        %3307 = vmatprep.subr.bf16.mxu0 0
        %3308 = vmatpush2.bf16.msra.mxu0 0
        %3309 = vmatprep.subr.bf16.mxu0 0
        %3310 = vmatpush2.bf16.msra.mxu0 0
        %3311 = vmatprep.subr.bf16.mxu0 0
        %3312 = vmatpush2.bf16.msra.mxu0 0
        %3313 = vmatprep.subr.bf16.mxu0 0
        %3314 = vmatpush2.bf16.msra.mxu0 0
        %3315 = vmatprep.subr.bf16.mxu0 0
        %3316 = vmatpush2.bf16.msra.mxu0 0
        %3317 = vmatprep.mubr.bf16.mxu0 0
        %3318 = vmatmul.mubr.bf16.gmra.mxu0 %v3283
        %v3319 = vpop.f32.mrf.mxu0
        %v3320 = vadd.f32 0.0, %v3319
        %v3321 = vpop.f32.mrf.mxu0
        %v3322 = vpop.f32.mrf.mxu0
        %v3323 = vpop.f32.mrf.mxu0
        %3324 = vdwg.mxu0
        %v3325 = vadd.f32 %v3164, %v3320
        %3326 = vrot.lane.b32.xlu0 %v2856, 104
        %v3327 = vpop.permute.xlu0 %3326
        %3328 = vrot.lane.b32.xlu0 %v2857, 104
        %v3329 = vpop.permute.xlu0 %3328
        %v3331 = vsel %vm747, %v3327, 0
        %v3334 = vsel %vm747, %v3329, 0
        %3336 = vmatprep.subr.bf16.mxu0 0
        %3337 = vmatpush1.bf16.xpose.msra.mxu0 0
        %3338 = vmatprep.subr.bf16.mxu0 0
        %3339 = vmatpush1.bf16.xpose.msra.mxu0 0
        %3340 = vmatprep.subr.bf16.mxu0 0
        %3341 = vmatpush1.bf16.xpose.msra.mxu0 0
        %3342 = vmatprep.subr.bf16.mxu0 0
        %3343 = vmatpush1.bf16.xpose.msra.mxu0 0
        %3344 = vmatprep.subr.bf16.mxu0 0
        %3345 = vmatpush1.bf16.xpose.msra.mxu0 0
        %3346 = vmatprep.subr.bf16.mxu0 0
        %3347 = vmatpush1.bf16.xpose.msra.mxu0 0
        %3348 = vmatprep.subr.bf16.mxu0 0
        %3349 = vmatpush1.bf16.xpose.msra.mxu0 0
        %3350 = vmatprep.subr.bf16.mxu0 0
        %3351 = vmatpush1.bf16.xpose.msra.mxu0 %v3334
        %3352 = vmatprep.subr.bf16.mxu0 0
        %3353 = vmatpush2.bf16.xpose.msra.mxu0 0
        %3354 = vmatprep.subr.bf16.mxu0 0
        %3355 = vmatpush2.bf16.xpose.msra.mxu0 0
        %3356 = vmatprep.subr.bf16.mxu0 0
        %3357 = vmatpush2.bf16.xpose.msra.mxu0 0
        %3358 = vmatprep.subr.bf16.mxu0 0
        %3359 = vmatpush2.bf16.xpose.msra.mxu0 0
        %3360 = vmatprep.subr.bf16.mxu0 0
        %3361 = vmatpush2.bf16.xpose.msra.mxu0 0
        %3362 = vmatprep.subr.bf16.mxu0 0
        %3363 = vmatpush2.bf16.xpose.msra.mxu0 0
        %3364 = vmatprep.subr.bf16.mxu0 0
        %3365 = vmatpush2.bf16.xpose.msra.mxu0 0
        %3366 = vmatprep.subr.bf16.mxu0 0
        %3367 = vmatpush2.bf16.xpose.msra.mxu0 0
        %3368 = vmatprep.mubr.bf16.mxu0 0
        %3369 = vmatmul.mubr.bf16.gmra.mxu0 %v3331
        %v3370 = vpop.f32.mrf.mxu0
        %v3371 = vadd.f32 0.0, %v3370
        %v3372 = vpop.f32.mrf.mxu0
        %v3373 = vpop.f32.mrf.mxu0
        %v3374 = vpop.f32.mrf.mxu0
        %3375 = vdwg.mxu0
        %v3376 = vmul.f32 %v3371, 0.35355338
        %v3377 = vsel %vm2905, -1e+09, %v3376
        %v3378 = vsel %vm747, %v3377, -inf
        %3379 = vmax.xlane.f32.xlu0 %v3378
        %v3380 = vpop.xlane.xlu0 %3379
        %v3381 = vsub.f32 %v3377, %v3380
        %v3382 = vmul.f32 %v3381, 1.442695
        %v3383 = vpow.pop %v3382
        %v3384 = vsel %vm747, %v3383, 0.0
        %3385 = vadd.xlane.f32.xlu0 %v3384
        %v3386 = vpop.xlane.xlu0 %3385
        %v3387 = vrcp.pop %v3386
        %v3388 = vmul.f32 %v3383, %v3387
        %v3389 = vpack.c.bf16 %v3388, %v3388
        %3390 = vrot.lane.b32.xlu0 %v2857, 72
        %v3391 = vpop.permute.xlu0 %3390
        %v3393 = vsel %vm747, %v3389, 0
        %v3396 = vsel %vm814, %v3391, 0
        %3398 = vmatprep.subr.bf16.mxu0 0
        %3399 = vmatpush1.bf16.msra.mxu0 0
        %3400 = vmatprep.subr.bf16.mxu0 0
        %3401 = vmatpush1.bf16.msra.mxu0 0
        %3402 = vmatprep.subr.bf16.mxu0 0
        %3403 = vmatpush1.bf16.msra.mxu0 0
        %3404 = vmatprep.subr.bf16.mxu0 0
        %3405 = vmatpush1.bf16.msra.mxu0 0
        %3406 = vmatprep.subr.bf16.mxu0 0
        %3407 = vmatpush1.bf16.msra.mxu0 0
        %3408 = vmatprep.subr.bf16.mxu0 0
        %3409 = vmatpush1.bf16.msra.mxu0 0
        %3410 = vmatprep.subr.bf16.mxu0 0
        %3411 = vmatpush1.bf16.msra.mxu0 0
        %3412 = vmatprep.subr.bf16.mxu0 0
        %3413 = vmatpush1.bf16.msra.mxu0 %v3396
        %3414 = vmatprep.subr.bf16.mxu0 0
        %3415 = vmatpush2.bf16.msra.mxu0 0
        %3416 = vmatprep.subr.bf16.mxu0 0
        %3417 = vmatpush2.bf16.msra.mxu0 0
        %3418 = vmatprep.subr.bf16.mxu0 0
        %3419 = vmatpush2.bf16.msra.mxu0 0
        %3420 = vmatprep.subr.bf16.mxu0 0
        %3421 = vmatpush2.bf16.msra.mxu0 0
        %3422 = vmatprep.subr.bf16.mxu0 0
        %3423 = vmatpush2.bf16.msra.mxu0 0
        %3424 = vmatprep.subr.bf16.mxu0 0
        %3425 = vmatpush2.bf16.msra.mxu0 0
        %3426 = vmatprep.subr.bf16.mxu0 0
        %3427 = vmatpush2.bf16.msra.mxu0 0
        %3428 = vmatprep.subr.bf16.mxu0 0
        %3429 = vmatpush2.bf16.msra.mxu0 0
        %3430 = vmatprep.mubr.bf16.mxu0 0
        %3431 = vmatmul.mubr.bf16.gmra.mxu0 %v3393
        %v3432 = vpop.f32.mrf.mxu0
        %v3433 = vadd.f32 0.0, %v3432
        %v3434 = vpop.f32.mrf.mxu0
        %v3435 = vpop.f32.mrf.mxu0
        %v3436 = vpop.f32.mrf.mxu0
        %3437 = vdwg.mxu0
        %v3438 = vpack.c.bf16 %v3433, %v3433
        %v3440 = vsel %vm747, %v3438, 0
        %3442 = vmatprep.subr.bf16.mxu0 0
        %3443 = vmatpush1.bf16.msra.mxu0 0
        %3444 = vmatprep.subr.bf16.mxu0 0
        %3445 = vmatpush1.bf16.msra.mxu0 0
        %3446 = vmatprep.subr.bf16.mxu0 0
        %3447 = vmatpush1.bf16.msra.mxu0 0
        %3448 = vmatprep.subr.bf16.mxu0 0
        %3449 = vmatpush1.bf16.msra.mxu0 0
        %3450 = vmatprep.subr.bf16.mxu0 0
        %3451 = vmatpush1.bf16.msra.mxu0 0
        %3452 = vmatprep.subr.bf16.mxu0 0
        %3453 = vmatpush1.bf16.msra.mxu0 0
        %3454 = vmatprep.subr.bf16.mxu0 0
        %3455 = vmatpush1.bf16.msra.mxu0 0
        %3456 = vmatprep.subr.bf16.mxu0 0
        %3457 = vmatpush1.bf16.msra.mxu0 %v2810
        %3458 = vmatprep.subr.bf16.mxu0 0
        %3459 = vmatpush2.bf16.msra.mxu0 0
        %3460 = vmatprep.subr.bf16.mxu0 0
        %3461 = vmatpush2.bf16.msra.mxu0 0
        %3462 = vmatprep.subr.bf16.mxu0 0
        %3463 = vmatpush2.bf16.msra.mxu0 0
        %3464 = vmatprep.subr.bf16.mxu0 0
        %3465 = vmatpush2.bf16.msra.mxu0 0
        %3466 = vmatprep.subr.bf16.mxu0 0
        %3467 = vmatpush2.bf16.msra.mxu0 0
        %3468 = vmatprep.subr.bf16.mxu0 0
        %3469 = vmatpush2.bf16.msra.mxu0 0
        %3470 = vmatprep.subr.bf16.mxu0 0
        %3471 = vmatpush2.bf16.msra.mxu0 0
        %3472 = vmatprep.subr.bf16.mxu0 0
        %3473 = vmatpush2.bf16.msra.mxu0 0
        %3474 = vmatprep.mubr.bf16.mxu0 0
        %3475 = vmatmul.mubr.bf16.gmra.mxu0 %v3440
        %v3476 = vpop.f32.mrf.mxu0
        %v3477 = vadd.f32 0.0, %v3476
        %v3478 = vpop.f32.mrf.mxu0
        %v3479 = vpop.f32.mrf.mxu0
        %v3480 = vpop.f32.mrf.mxu0
        %3481 = vdwg.mxu0
        %v3482 = vadd.f32 %v3325, %v3477
        %v3483 = vadd.f32 %v2021, %v2852
        %v3484 = vadd.f32 %v2022, %v3482
        %v3485 = vlaneseq
        %v3486 = vshrl.u32 %v3485, 7
        %v3487 = vsub.s32 0, %v3486
        %v3488 = vrot.slane %v585, %v3487
        %v3489 = vadd.f32 %v3483, %v3488
        %v3490 = vadd.f32 %v3484, %v3488
        %v3491 = vsel %vm595, %v3489, 0.0
        %3492 = vadd.xlane.f32.xlu0 %v3491
        %v3493 = vpop.xlane.xlu0 %3492
        %v3494 = vsel %vm595, %v3490, 0.0
        %3495 = vadd.xlane.f32.xlu0 %v3494
        %v3496 = vpop.xlane.xlu0 %3495
        %v3497 = vmul.f32 %v3493, %v602
        %v3498 = vmul.f32 %v3496, %v602
        %v3499 = vsub.f32 %v3489, %v3497
        %v3500 = vsub.f32 %v3490, %v3498
        %v3501 = vmul.f32 %v3499, %v3499
        %v3502 = vmul.f32 %v3500, %v3500
        %v3503 = vsel %vm595, %v3501, 0.0
        %3504 = vadd.xlane.f32.xlu0 %v3503
        %v3505 = vpop.xlane.xlu0 %3504
        %v3506 = vsel %vm595, %v3502, 0.0
        %3507 = vadd.xlane.f32.xlu0 %v3506
        %v3508 = vpop.xlane.xlu0 %3507
        %v3509 = vmul.f32 %v3505, 0.032258064
        %v3510 = vmul.f32 %v3508, 0.032258064
        %v3511 = vrsqrt.pop %v3509
        %v3512 = vmul.f32 %v3509, %v3511
        %vm3513 = vcmp.eq.f32.partialorder %v3509, inf
        %v3514 = vsel %vm3513, %v3509, %v3512
        %vm3515 = vcmp.eq.f32.partialorder %v3509, 0.0
        %v3516 = vand.u32 %v3509, 2147483648
        %v3517 = vsel %vm3515, %v3516, %v3514
        %v3518 = vrsqrt.pop %v3510
        %v3519 = vmul.f32 %v3510, %v3518
        %vm3520 = vcmp.eq.f32.partialorder %v3510, inf
        %v3521 = vsel %vm3520, %v3510, %v3519
        %vm3522 = vcmp.eq.f32.partialorder %v3510, 0.0
        %v3523 = vand.u32 %v3510, 2147483648
        %v3524 = vsel %vm3522, %v3523, %v3521
        %v3525 = vadd.f32 %v3517, 1e-06
        %v3526 = vadd.f32 %v3524, 1e-06
        %v3527 = vrcp.pop %v3525
        %v3528 = vrcp.pop %v3526
        %v3529 = vmul.f32 %v2064, %v3499
        %v3530 = vmul.f32 %v2064, %v3500
        %v3531 = vmul.f32 %v3529, %v3527
        %v3532 = vmul.f32 %v3530, %v3528
        %v3533 = vadd.f32 %v3531, %v2072
        %v3534 = vadd.f32 %v3532, %v2072
        %v3535 = vld [vmem:[%s11] sm:$0xf]
        %v3536 = vld [vmem:[%s11 + $0x4] sm:$0xf]
        %v3537 = vld [vmem:[%s11 + $0x8] sm:$0xf]
        %v3538 = vld [vmem:[%s11 + $0xc] sm:$0xf]
        %v3539 = vpack.c.bf16 %v3534, %v3533
        %v3540 = vlaneseq
        %v3541 = vshrl.u32 %v3540, 7
        %v3542 = vsub.s32 0, %v3541
        %v3543 = vrot.slane %v582, %v3542
        %v3548 = vunpack.c.l.b16 %v3535
        %v3549 = vunpack.c.l.b16 %v3536
        %v3550 = vunpack.c.l.b16 %v3537
        %v3551 = vunpack.c.l.b16 %v3538
        %v3552 = vpack.c.b16 %v3549, %v3548
        %v3553 = vpack.c.b16 %v3551, %v3550
        %v3557 = vsel %vm595, %v3539, 0
        %3559 = vmatprep.subr.bf16.mxu0 0
        %3560 = vmatpush1.bf16.msra.mxu0 0
        %3561 = vmatprep.subr.bf16.mxu0 0
        %3562 = vmatpush1.bf16.msra.mxu0 0
        %3563 = vmatprep.subr.bf16.mxu0 0
        %3564 = vmatpush1.bf16.msra.mxu0 0
        %3565 = vmatprep.subr.bf16.mxu0 0
        %3566 = vmatpush1.bf16.msra.mxu0 0
        %3567 = vmatprep.subr.bf16.mxu0 0
        %3568 = vmatpush1.bf16.msra.mxu0 0
        %3569 = vmatprep.subr.bf16.mxu0 0
        %3570 = vmatpush1.bf16.msra.mxu0 0
        %3571 = vmatprep.subr.bf16.mxu0 0
        %3572 = vmatpush1.bf16.msra.mxu0 %v3553
        %3573 = vmatprep.subr.bf16.mxu0 0
        %3574 = vmatpush1.bf16.msra.mxu0 %v3552
        %3575 = vmatprep.subr.bf16.mxu0 0
        %3576 = vmatpush2.bf16.msra.mxu0 0
        %3577 = vmatprep.subr.bf16.mxu0 0
        %3578 = vmatpush2.bf16.msra.mxu0 0
        %3579 = vmatprep.subr.bf16.mxu0 0
        %3580 = vmatpush2.bf16.msra.mxu0 0
        %3581 = vmatprep.subr.bf16.mxu0 0
        %3582 = vmatpush2.bf16.msra.mxu0 0
        %3583 = vmatprep.subr.bf16.mxu0 0
        %3584 = vmatpush2.bf16.msra.mxu0 0
        %3585 = vmatprep.subr.bf16.mxu0 0
        %3586 = vmatpush2.bf16.msra.mxu0 0
        %3587 = vmatprep.subr.bf16.mxu0 0
        %3588 = vmatpush2.bf16.msra.mxu0 0
        %3589 = vmatprep.subr.bf16.mxu0 0
        %3590 = vmatpush2.bf16.msra.mxu0 0
        %3591 = vmatprep.mubr.bf16.mxu0 0
        %3592 = vmatmul.mubr.bf16.gmra.mxu0 %v3557
        %v3593 = vpop.f32.mrf.mxu0
        %v3594 = vadd.f32 %v3543, %v3593
        %v3595 = vpop.f32.mrf.mxu0
        %v3596 = vpop.f32.mrf.mxu0
        %v3597 = vadd.f32 %v3543, %v3596
        %v3598 = vpop.f32.mrf.mxu0
        %3599 = vdwg.mxu0
        %v3600 = vmul.f32 %v3594, 0.5
        %v3601 = vmul.f32 %v3597, 0.5
        %v3602 = vmul.f32 %v3594, 0.044715
        %v3603 = vmul.f32 %v3597, 0.044715
        %v3604 = vmul.f32 %v3602, %v3594
        %v3605 = vmul.f32 %v3603, %v3597
        %v3606 = vmul.f32 %v3604, %v3594
        %v3607 = vmul.f32 %v3605, %v3597
        %v3608 = vadd.f32 %v3594, %v3606
        %v3609 = vadd.f32 %v3597, %v3607
        %v3610 = vmul.f32 %v3608, 0.7978846
        %v3611 = vmul.f32 %v3609, 0.7978846
        %v3612 = vtanh.pop %v3610
        %v3613 = vtanh.pop %v3611
        %v3614 = vadd.f32 %v3612, 1.0
        %v3615 = vadd.f32 %v3613, 1.0
        %v3616 = vmul.f32 %v3600, %v3614
        %v3617 = vmul.f32 %v3601, %v3615
        %v3618 = vld [vmem:[%s12] sm:$0xf]
        %v3619 = vld [vmem:[%s12 + $0x4] sm:$0xf]
        %v3620 = vld [vmem:[%s12 + $0x8] sm:$0xf]
        %v3621 = vld [vmem:[%s12 + $0xc] sm:$0xf]
        %v3622 = vld [vmem:[%s12 + $0x10] sm:$0xf]
        %v3623 = vld [vmem:[%s12 + $0x14] sm:$0xf]
        %v3624 = vld [vmem:[%s12 + $0x18] sm:$0xf]
        %v3625 = vld [vmem:[%s12 + $0x1c] sm:$0xf]
        %v3626 = vld [vmem:[%s12 + $0x20] sm:$0xf]
        %v3627 = vld [vmem:[%s12 + $0x24] sm:$0xf]
        %v3628 = vld [vmem:[%s12 + $0x28] sm:$0xf]
        %v3629 = vld [vmem:[%s12 + $0x2c] sm:$0xf]
        %v3630 = vld [vmem:[%s12 + $0x30] sm:$0xf]
        %v3631 = vld [vmem:[%s12 + $0x34] sm:$0xf]
        %v3632 = vld [vmem:[%s12 + $0x38] sm:$0xf]
        %v3633 = vld [vmem:[%s12 + $0x3c] sm:$0xf]
        %v3634 = vpack.c.bf16 %v3617, %v3616
        %v3651 = vunpack.c.l.b16 %v3618
        %v3652 = vunpack.c.l.b16 %v3619
        %v3653 = vunpack.c.l.b16 %v3620
        %v3654 = vunpack.c.l.b16 %v3621
        %v3655 = vunpack.c.l.b16 %v3622
        %v3656 = vunpack.c.l.b16 %v3623
        %v3657 = vunpack.c.l.b16 %v3624
        %v3658 = vunpack.c.l.b16 %v3625
        %v3659 = vunpack.c.l.b16 %v3626
        %v3660 = vunpack.c.l.b16 %v3627
        %v3661 = vunpack.c.l.b16 %v3628
        %v3662 = vunpack.c.l.b16 %v3629
        %v3663 = vunpack.c.l.b16 %v3630
        %v3664 = vunpack.c.l.b16 %v3631
        %v3665 = vunpack.c.l.b16 %v3632
        %v3666 = vunpack.c.l.b16 %v3633
        %v3667 = vpack.c.b16 %v3652, %v3651
        %v3668 = vpack.c.b16 %v3654, %v3653
        %v3669 = vpack.c.b16 %v3656, %v3655
        %v3670 = vpack.c.b16 %v3658, %v3657
        %v3671 = vpack.c.b16 %v3660, %v3659
        %v3672 = vpack.c.b16 %v3662, %v3661
        %v3673 = vpack.c.b16 %v3664, %v3663
        %v3674 = vpack.c.b16 %v3666, %v3665
        %3683 = vmatprep.subr.bf16.mxu0 0
        %3684 = vmatpush1.bf16.msra.mxu0 %v3674
        %3685 = vmatprep.subr.bf16.mxu0 0
        %3686 = vmatpush1.bf16.msra.mxu0 %v3673
        %3687 = vmatprep.subr.bf16.mxu0 0
        %3688 = vmatpush1.bf16.msra.mxu0 %v3672
        %3689 = vmatprep.subr.bf16.mxu0 0
        %3690 = vmatpush1.bf16.msra.mxu0 %v3671
        %3691 = vmatprep.subr.bf16.mxu0 0
        %3692 = vmatpush1.bf16.msra.mxu0 %v3670
        %3693 = vmatprep.subr.bf16.mxu0 0
        %3694 = vmatpush1.bf16.msra.mxu0 %v3669
        %3695 = vmatprep.subr.bf16.mxu0 0
        %3696 = vmatpush1.bf16.msra.mxu0 %v3668
        %3697 = vmatprep.subr.bf16.mxu0 0
        %3698 = vmatpush1.bf16.msra.mxu0 %v3667
        %3699 = vmatprep.subr.bf16.mxu0 0
        %3700 = vmatpush2.bf16.msra.mxu0 0
        %3701 = vmatprep.subr.bf16.mxu0 0
        %3702 = vmatpush2.bf16.msra.mxu0 0
        %3703 = vmatprep.subr.bf16.mxu0 0
        %3704 = vmatpush2.bf16.msra.mxu0 0
        %3705 = vmatprep.subr.bf16.mxu0 0
        %3706 = vmatpush2.bf16.msra.mxu0 0
        %3707 = vmatprep.subr.bf16.mxu0 0
        %3708 = vmatpush2.bf16.msra.mxu0 0
        %3709 = vmatprep.subr.bf16.mxu0 0
        %3710 = vmatpush2.bf16.msra.mxu0 0
        %3711 = vmatprep.subr.bf16.mxu0 0
        %3712 = vmatpush2.bf16.msra.mxu0 0
        %3713 = vmatprep.subr.bf16.mxu0 0
        %3714 = vmatpush2.bf16.msra.mxu0 0
        %3715 = vmatprep.mubr.bf16.mxu0 0
        %3716 = vmatmul.mubr.bf16.gmra.mxu0 %v3634
        %v3717 = vpop.f32.mrf.mxu0
        %v3718 = vadd.f32 0.0, %v3717
        %v3719 = vpop.f32.mrf.mxu0
        %v3720 = vpop.f32.mrf.mxu0
        %v3721 = vadd.f32 0.0, %v3720
        %v3722 = vpop.f32.mrf.mxu0
        %3723 = vdwg.mxu0
        %v3724 = vadd.f32 %v3489, %v3718
        %v3725 = vadd.f32 %v3490, %v3721
        %v3726 = vlaneseq
        %v3727 = vshrl.u32 %v3726, 7
        %v3728 = vsub.s32 0, %v3727
        %v3729 = vrot.slane %v586, %v3728
        %v3730 = vadd.f32 %v3724, %v3729
        %v3731 = vadd.f32 %v3725, %v3729
        %3732 = vst.msk [vmem:[%s541] sm:$0xff] %vm595, %v3730
        %3733 = vst.msk [vmem:[%s541 + $0x8] sm:$0xff] %vm595, %v3731
        %s3734 = sand.u32 %s360, 1
        %s3735 = scalar_lea.sflag [#allocation3], %s3734
        %s3736 = sand.u32 %s360, 1
        %s3737 = smul.addr %s3736, 16
        %s3738 = scalar_lea.vmem [#allocation2], %s3737
        // Predicated region
        $region77: #{fast_transformer_block.1} parent=75 // pred_check
          %p3739 = pneg %p370
        $region78: #{fast_transformer_block.1} parent=75 // pred_check_branch
          %3741 = sbr.rel (%p3739) target = $region80
        $region79: #{fast_transformer_block.1} parent=75 // pred_region
          %s3742 = smul.u32 2, %s28
          %s3744 = ssub.s32 256, 256
          %3745 = vsyncadd %s3735, %s3744
          %s3746 = smul.addr %s3742, 128
          %s3747 = scalar_lea.hbm %s14, %s3746
          %s3748 = sshll.u32 %s3738, 4
          %s3749 = int_to_ptr.vmem [resolvable:$true] %s3748
          %3754 = dma.vmem_to_hbm [thread:$0]  %s3749, 256, %s3747, %s3735, 128, 128, 8
        $region80: #{fast_transformer_block.1} parent=75 // pred_fallthru
          _
      $region76: #{fast_transformer_block.1} parent=5 // pred_fallthru
        _
      %p3755 = scmp.le.s32.totalorder 2, %s23
      // Predicated region
      $region81: #{fast_transformer_block.1} parent=5 // pred_check
        %p3756 = pneg %p3755
      $region82: #{fast_transformer_block.1} parent=5 // pred_check_branch
        %3758 = sbr.rel (%p3756) target = $region84
      $region83: #{fast_transformer_block.1} parent=5 // pred_region
        %s3759 = ssub.s32 %s23, 2
        // Predicated region
        $region85: #{fast_transformer_block.1} parent=83 // pred_check
          %p3760 = pneg %p376
        $region86: #{fast_transformer_block.1} parent=83 // pred_check_branch
          %3762 = sbr.rel (%p3760) target = $region88
        $region87: #{fast_transformer_block.1} parent=83 // pred_region
          %s3763 = sand.u32 %s361, 1
          %s3764 = scalar_lea.sflag [#allocation3], %s3763
          %s3765 = sand.u32 %s361, 1
          %s3766 = smul.addr %s3765, 16
          %s3767 = scalar_lea.vmem [#allocation2], %s3766
          %3768 = dma.done %s3764, 256
        $region88: #{fast_transformer_block.1} parent=83 // pred_fallthru
          _
      $region84: #{fast_transformer_block.1} parent=5 // pred_fallthru
        _
    $region6: #{fast_transformer_block.1} parent=1 // loop_footer
      %s27 = sadd.s32 1, %s23
    $region7: #{fast_transformer_block.1} parent=1 // loop_footer_branch
      %22 = sbr.rel target = $region3
    $region8: #{fast_transformer_block.1} parent=1 // loop_exit
      _
    %3769 = vsyncpa [#allocation3], 1
    %s3770 = scalar_lea.sflag [#allocation3], 1
    %3771 = vsyncpa %s3770, 1

</llo_original>
